<compile_context>
chip_gen: v7x
topology: tpu7x:2x2x1
jax: 0.10.0
libtpu: 0.0.40
codegen_flags: <defaults>
</compile_context>

<pallas_src>
import functools

import numpy as np
import jax
import jax.numpy as jnp
from jax.experimental import pallas as pl
from jax.experimental.pallas import tpu as pltpu

# ----------------------------------------------------------------------------
# Small (but structurally faithful) hyper-parameters
# ----------------------------------------------------------------------------
SPACE_DIM = 16       # space_dim
DIMENSION = 8        # dimension  -> final out channels = 2 * DIMENSION
N_FILTERS = 8        # n_filters
N_RES = 2            # n_residual_layers
RATIOS = [2, 2]      # ratios (module reverses them internally)
KERNEL_SIZE = 7      # kernel_size (first conv)
UPDOWN_K = 2         # updownsample_kernel_size
LAST_K = 7           # last_kernel_size
RES_K = 3            # residual_kernel_size
DILATION_BASE = 2
COMPRESS = 2
TR_EMB_DIM = 12      # tr_emb_dim
B, T = 2, 16         # batch, time

LANES = 128          # lane width of the packed parameter blobs

# Matmul operand dtype.  Kept at f32 to preserve the PyTorch module numerics at
# these tiny shapes; flip to jnp.bfloat16 (accumulation stays f32 via
# preferred_element_type) when scaling to realistic channel counts.
MATMUL_DTYPE = jnp.float32


# ----------------------------------------------------------------------------
# Static network description (hashable -> usable as a static jit argument)
#   ("conv", K, dilation, pre_elu, cin, cout)
#   ("res",  K, dilation, dim, hidden)          # SEANetResnetBlock
# ----------------------------------------------------------------------------
def build_layer_specs():
    specs = [("conv", KERNEL_SIZE, 1, False, SPACE_DIM, N_FILTERS)]
    cur = N_FILTERS
    for ratio in list(reversed(RATIOS)):          # module reverses ratios
        nxt = cur * ratio
        for j in range(N_RES):
            specs.append(("res", RES_K, DILATION_BASE ** j, cur, cur // COMPRESS))
        # time_extension_ratio == 1 -> ELU + StreamableConv1d(k=2, stride=1)
        specs.append(("conv", UPDOWN_K, 1, True, cur, nxt))
        cur = nxt
    # lstm == 0 -> no StreamableLSTM
    specs.append(("conv", LAST_K, 1, True, cur, DIMENSION * 2))
    return tuple(specs)


# ----------------------------------------------------------------------------
# Parameter init (deterministic, synthetic).  Pure-array pytree (jit-safe).
# ----------------------------------------------------------------------------
def _make_conv(key, K, cin, cout):
    kw, kb = jax.random.split(key)
    scale = 0.5 / np.sqrt(K * cin)
    w = jax.random.normal(kw, (K, cin, cout), jnp.float32) * scale
    b = jax.random.normal(kb, (cout,), jnp.float32) * 0.01
    return w, b


def init_params(key, layer_specs):
    keys = iter(jax.random.split(key, 4 * len(layer_specs) + 2))
    emb_w = (jax.random.normal(next(keys), (TR_EMB_DIM, SPACE_DIM), jnp.float32)
             * (1.0 / np.sqrt(TR_EMB_DIM)))
    emb_b = jax.random.normal(next(keys), (SPACE_DIM,), jnp.float32) * 0.01
    layers = []
    for spec in layer_specs:
        if spec[0] == "conv":
            _, K, _, _, cin, cout = spec
            layers.append(_make_conv(next(keys), K, cin, cout))
        else:
            _, K, _, dim, hidden = spec
            layers.append((_make_conv(next(keys), K, dim, hidden),
                           _make_conv(next(keys), 1, hidden, dim)))
    return {"emb_w": emb_w, "emb_b": emb_b, "layers": layers}


# ----------------------------------------------------------------------------
# Static packing plan for the single lane-dense parameter blob
# ----------------------------------------------------------------------------
def _round8(n):
    return ((n + 7) // 8) * 8


def _pad_lr(K, dil):
    eff = (K - 1) * dil + 1
    tot = eff - 1                                # stride == 1
    pr = tot // 2
    return tot - pr, pr


def _flat_convs(layer_specs):
    """Per-conv tuples (K, dil, cin, cout, pre_elu), keeping resnet grouping."""
    out = []
    for spec in layer_specs:
        if spec[0] == "conv":
            _, K, dil, pre_elu, cin, cout = spec
            out.append(("conv", (K, dil, cin, cout, pre_elu)))
        else:
            _, K, dil, dim, hidden = spec
            out.append(("res", (K, dil, dim, hidden, True),
                               (1, 1, hidden, dim, True)))
    return out


def build_plan(layer_specs, t):
    """Row/bias offsets for the packed weight & bias blobs (all static)."""
    groups = _flat_convs(layer_specs)
    row = 0
    emb_off = row
    row += _round8(TR_EMB_DIM)

    # one reflect-pad gather matrix per distinct (pad_left, pad_right)
    pad_offsets = {}
    for g in groups:
        for (K, dil, _cin, _cout, _pe) in g[1:]:
            pl_, pr_ = _pad_lr(K, dil)
            if pl_ + pr_ > 0 and (pl_, pr_) not in pad_offsets:
                assert t > max(pl_, pr_), "reflect pad needs T > pad width"
                pad_offsets[(pl_, pr_)] = row
                row += _round8(t + pl_ + pr_)

    layers = []
    bias_row = 1                                  # bias row 0 = emb bias
    for g in groups:
        entries = []
        for (K, dil, cin, cout, pre_elu) in g[1:]:
            pl_, pr_ = _pad_lr(K, dil)
            entries.append(dict(off=row, K=K, dil=dil, cin=cin, cout=cout,
                                pre_elu=pre_elu, bias_row=bias_row,
                                pad_off=pad_offsets.get((pl_, pr_), 0),
                                pad_l=pl_, pad_r=pr_))
            row += _round8(K * cin)
            bias_row += 1
        layers.append((g[0], tuple(entries)))

    return dict(emb_off=emb_off, pad_offsets=tuple(pad_offsets.items()),
                layers=tuple(layers), total_rows=_round8(row), n_bias=bias_row)


def pack_arrays(plan, params, t):
    """Build the two lane-dense parameter blobs (traced, jit-safe)."""
    wb = jnp.zeros((plan["total_rows"], LANES), jnp.float32)
    bb = jnp.zeros((plan["n_bias"], LANES), jnp.float32)

    eo = plan["emb_off"]
    wb = wb.at[eo:eo + TR_EMB_DIM, :SPACE_DIM].set(
        params["emb_w"].astype(jnp.float32))
    bb = bb.at[0, :SPACE_DIM].set(params["emb_b"].astype(jnp.float32))

    # reflect-pad gather matrices (static 0/1, exact in f32)
    for (pl_, pr_), off in plan["pad_offsets"]:
        tp = t + pl_ + pr_
        P = np.zeros((tp, t), np.float32)
        for i in range(tp):
            src = i - pl_
            if src < 0:
                src = -src                        # torch 'reflect' (edge excl.)
            elif src >= t:
                src = 2 * (t - 1) - src
            P[i, src] = 1.0
        wb = wb.at[off:off + tp, :t].set(jnp.asarray(P))

    # conv weights in im2col layout (K*Cin, Cout) + biases
    for (kind, entries), lp in zip(plan["layers"], params["layers"]):
        mats = [lp] if kind == "conv" else [lp[0], lp[1]]
        for e, (w, b) in zip(entries, mats):
            K, cin, cout = w.shape
            wb = wb.at[e["off"]:e["off"] + K * cin, :cout].set(
                w.reshape(K * cin, cout).astype(jnp.float32))
            bb = bb.at[e["bias_row"], :cout].set(b.astype(jnp.float32))
    return wb, bb


# ----------------------------------------------------------------------------
# In-kernel building blocks (operate on VMEM-resident (T, C) values, f32)
# ----------------------------------------------------------------------------
def _elu(x):
    # ELU(alpha=1).  exp(x)-1 (rather than expm1) for a guaranteed lowering.
    # TODO(synk): switch to expm1 if tolerances are tightened.
    return jnp.where(x > 0, x, jnp.exp(x) - 1.0)


def _conv1d(h, w_ref, b_ref, entry, t, residual=None):
    """StreamableConv1d (stride=1, non-causal, reflect pad, norm='none'):
       optional pre-ELU, reflect pad as one gather-matmul (P @ h), then
       K per-tap matmuls accumulated in f32 (no lane-axis im2col concat)."""
    K, dil, cin, cout = entry["K"], entry["dil"], entry["cin"], entry["cout"]
    if entry["pre_elu"]:
        h = _elu(h)
    if entry["pad_l"] + entry["pad_r"] > 0:
        tp = t + entry["pad_l"] + entry["pad_r"]
        pmat = w_ref[entry["pad_off"]:entry["pad_off"] + tp, :t]
        hp = jnp.dot(pmat, h.astype(MATMUL_DTYPE),
                     preferred_element_type=jnp.float32)
    else:
        hp = h
    off = entry["off"]
    acc = None
    for k in range(K):
        wk = w_ref[off + k * cin:off + (k + 1) * cin, :cout]
        xk = hp[k * dil:k * dil + t, :]
        y = jnp.dot(xk.astype(MATMUL_DTYPE), wk.astype(MATMUL_DTYPE),
                    preferred_element_type=jnp.float32)
        acc = y if acc is None else acc + y
    acc = acc + b_ref[entry["bias_row"]:entry["bias_row"] + 1, :cout]
    if residual is not None:
        acc = acc + residual
    return acc


# ----------------------------------------------------------------------------
# The single fused encoder kernel (one batch element per grid step)
# ----------------------------------------------------------------------------
def _fused_encoder_kernel(x_ref, tr_ref, w_ref, b_ref, o_ref, *, plan, t):
    # emb_linear(tr) + x   (module: x + tr.transpose(1,2); here in (T, C))
    eo = plan["emb_off"]
    emb_w = w_ref[eo:eo + TR_EMB_DIM, :SPACE_DIM]
    emb = jnp.dot(tr_ref[...].astype(MATMUL_DTYPE), emb_w.astype(MATMUL_DTYPE),
                  preferred_element_type=jnp.float32)
    h = x_ref[...] + emb + b_ref[0:1, :SPACE_DIM]

    # whole network, statically unrolled; activations never leave VMEM
    for kind, entries in plan["layers"]:
        if kind == "conv":
            h = _conv1d(h, w_ref, b_ref, entries[0], t)
        else:  # SEANetResnetBlock with true_skip=True (identity shortcut)
            y = _conv1d(h, w_ref, b_ref, entries[0], t)
            h = _conv1d(y, w_ref, b_ref, entries[1], t, residual=h)

    o_ref[...] = h.astype(o_ref.dtype)


# ----------------------------------------------------------------------------
# Wrapper: parameter packing + single pallas_call (grid over batch)
# ----------------------------------------------------------------------------
def encoder_forward(layer_specs, params, x_nct, tr):
    """x_nct: (B, space_dim, T) [PyTorch NCT], tr: (B, T, tr_emb_dim).
    Returns (B, 2*dimension, T)."""
    x_ntc = jnp.transpose(x_nct, (0, 2, 1)).astype(jnp.float32)  # NCT -> NTC
    bsz, t, _ = x_ntc.shape
    out_c = 2 * DIMENSION

    plan = build_plan(layer_specs, t)
    w_blob, b_blob = pack_arrays(plan, params, t)
    tr_f32 = tr.astype(jnp.float32)

    # Static cost estimate (per chip): MXU flops + ELU transcendentals.
    flops = 2 * t * TR_EMB_DIM * SPACE_DIM
    trans = 0
    for _kind, entries in plan["layers"]:
        for e in entries:
            if e["pre_elu"]:
                trans += t * e["cin"]
            if e["pad_l"] + e["pad_r"]:
                flops += 2 * (t + e["pad_l"] + e["pad_r"]) * t * e["cin"]
            flops += 2 * e["K"] * t * e["cin"] * e["cout"]
    flops *= bsz
    trans *= bsz
    bytes_accessed = 4 * (x_ntc.size + tr_f32.size + w_blob.size + b_blob.size
                          + bsz * t * out_c)

    kernel = functools.partial(_fused_encoder_kernel, plan=plan, t=t)
    out_ntc = pl.pallas_call(
        kernel,
        out_shape=jax.ShapeDtypeStruct((bsz, t, out_c), jnp.float32),
        grid=(bsz,),
        in_specs=[
            pl.BlockSpec((None, t, SPACE_DIM), lambda b: (b, 0, 0)),
            pl.BlockSpec((None, t, TR_EMB_DIM), lambda b: (b, 0, 0)),
            # packed parameter blobs: constant block index -> DMA'd once,
            # resident in VMEM across the whole grid
            pl.BlockSpec(w_blob.shape, lambda b: (0, 0)),
            pl.BlockSpec(b_blob.shape, lambda b: (0, 0)),
        ],
        out_specs=pl.BlockSpec((None, t, out_c), lambda b: (b, 0, 0)),
        compiler_params=pltpu.CompilerParams(
            dimension_semantics=("parallel",)),
        cost_estimate=pl.CostEstimate(flops=flops, transcendentals=trans,
                                      bytes_accessed=bytes_accessed),
    )(x_ntc, tr_f32, w_blob, b_blob)
    return jnp.transpose(out_ntc, (0, 2, 1))        # NTC -> NCT (B, 2*dim, T)


# ----------------------------------------------------------------------------
# Pure-JAX reference (per-tap einsum + jnp.pad reflect, independent path)
# ----------------------------------------------------------------------------
def _ref_conv(h, w, b, dilation, pre_elu, residual=None):
    K = w.shape[0]
    if pre_elu:
        h = jnp.where(h > 0, h, jnp.exp(h) - 1.0)
    eff = (K - 1) * dilation + 1
    pt = eff - 1
    pr = pt // 2
    pleft = pt - pr
    hp = jnp.pad(h, ((0, 0), (pleft, pr), (0, 0)), mode="reflect") if pt else h
    t = h.shape[1]
    acc = jnp.zeros((h.shape[0], t, w.shape[2]), jnp.float32)
    for k in range(K):
        acc = acc + jnp.einsum("btc,cd->btd",
                               hp[:, k * dilation:k * dilation + t, :], w[k],
                               precision=jax.lax.Precision.HIGHEST)
    acc = acc + b
    if residual is not None:
        acc = acc + residual
    return acc


def ref_forward(layer_specs, params, x_nct, tr):
    h = (jnp.transpose(x_nct, (0, 2, 1))
         + jnp.einsum("btd,dc->btc", tr, params["emb_w"],
                      precision=jax.lax.Precision.HIGHEST)
         + params["emb_b"])
    for spec, lp in zip(layer_specs, params["layers"]):
        if spec[0] == "conv":
            _, K, dil, pre_elu, _, _ = spec
            h = _ref_conv(h, lp[0], lp[1], dil, pre_elu)
        else:
            _, K, dil, _, _ = spec
            (w1, b1), (w2, b2) = lp
            y = _ref_conv(h, w1, b1, dil, True)
            h = _ref_conv(y, w2, b2, 1, True, residual=h)
    return jnp.transpose(h, (0, 2, 1))


# ----------------------------------------------------------------------------
if __name__ == "__main__":
    layer_specs = build_layer_specs()

    root = jax.random.PRNGKey(0)
    k_params, k_x, k_tr = jax.random.split(root, 3)
    params = init_params(k_params, layer_specs)
    x = jax.random.normal(k_x, (B, SPACE_DIM, T), jnp.float32)        # NCT
    tr = jax.random.normal(k_tr, (B, T, TR_EMB_DIM), jnp.float32)

    fwd = jax.jit(encoder_forward, static_argnums=0)   # layer structure static
    out = jax.block_until_ready(fwd(layer_specs, params, x, tr))
    assert out.shape == (B, 2 * DIMENSION, T), out.shape

    ref = jax.block_until_ready(ref_forward(layer_specs, params, x, tr))
    max_err = float(jnp.max(jnp.abs(out - ref)))
    if not np.isfinite(max_err) or max_err > 1e-2:
        raise AssertionError(f"mismatch vs reference: max_err={max_err}")

    print("KERNEL_OK")
</pallas_src>

<mosaic_0001>
module attributes {stable_mosaic.version = 11 : i64} {
  func.func @_fused_encoder_kernel(%arg0: i32, %arg1: memref<1x16x16xf32, #tpu.memory_space<vmem>>, %arg2: memref<1x16x12xf32, #tpu.memory_space<vmem>>, %arg3: memref<672x128xf32, #tpu.memory_space<vmem>>, %arg4: memref<13x128xf32, #tpu.memory_space<vmem>>, %arg5: memref<1x16x16xf32, #tpu.memory_space<vmem>>) attributes {dimension_semantics = [#tpu.dimension_semantics<parallel>], iteration_bounds = array<i64: 2>, scalar_prefetch = 0 : i64, scratch_operands = 0 : i64, tpu.core_type = #tpu.core_type<tc>, window_params = [{transform_indices = @transform_0, window_bounds = array<i64: 1, 16, 16>}, {transform_indices = @transform_1, window_bounds = array<i64: 1, 16, 12>}, {pipeline_mode = #tpu.pipeline_mode<synchronous>, transform_indices = @transform_2, window_bounds = array<i64: 672, 128>}, {pipeline_mode = #tpu.pipeline_mode<synchronous>, transform_indices = @transform_3, window_bounds = array<i64: 13, 128>}, {transform_indices = @transform_4, window_bounds = array<i64: 1, 16, 16>}]} {
    %c0 = arith.constant 0 : index
    %c0_0 = arith.constant 0 : index
    %0 = vector.load %arg3[%c0, %c0_0] : memref<672x128xf32, #tpu.memory_space<vmem>>, vector<12x16xf32>
    %c0_1 = arith.constant 0 : index
    %c0_2 = arith.constant 0 : index
    %c0_3 = arith.constant 0 : index
    %1 = vector.load %arg2[%c0_1, %c0_2, %c0_3] : memref<1x16x12xf32, #tpu.memory_space<vmem>>, vector<1x16x12xf32>
    %2 = vector.shape_cast %1 : vector<1x16x12xf32> to vector<16x12xf32>
    %cst = arith.constant dense<0.000000e+00> : vector<16x16xf32>
    %3 = tpu.matmul %2, %0, %cst {dimension_numbers = #tpu.dot_dimension_numbers<[1], [0], [0], [1], [0, 0, 1, 1], [], []>} : vector<16x12xf32>, vector<12x16xf32>, vector<16x16xf32> -> vector<16x16xf32>
    %c0_4 = arith.constant 0 : index
    %c0_5 = arith.constant 0 : index
    %c0_6 = arith.constant 0 : index
    %4 = vector.load %arg1[%c0_4, %c0_5, %c0_6] : memref<1x16x16xf32, #tpu.memory_space<vmem>>, vector<1x16x16xf32>
    %5 = vector.shape_cast %4 : vector<1x16x16xf32> to vector<16x16xf32>
    %6 = arith.addf %5, %3 : vector<16x16xf32>
    %c0_7 = arith.constant 0 : index
    %c0_8 = arith.constant 0 : index
    %7 = vector.load %arg4[%c0_7, %c0_8] : memref<13x128xf32, #tpu.memory_space<vmem>>, vector<1x16xf32>
    %8 = vector.broadcast %7 : vector<1x16xf32> to vector<16x16xf32>
    %9 = arith.addf %6, %8 : vector<16x16xf32>
    %c16 = arith.constant 16 : index
    %c0_9 = arith.constant 0 : index
    %10 = vector.load %arg3[%c16, %c0_9] : memref<672x128xf32, #tpu.memory_space<vmem>>, vector<22x16xf32>
    %cst_10 = arith.constant dense<0.000000e+00> : vector<22x16xf32>
    %11 = tpu.matmul %10, %9, %cst_10 {dimension_numbers = #tpu.dot_dimension_numbers<[1], [0], [0], [1], [0, 0, 1, 1], [], []>} : vector<22x16xf32>, vector<16x16xf32>, vector<22x16xf32> -> vector<22x16xf32>
    %c112 = arith.constant 112 : index
    %c0_11 = arith.constant 0 : index
    %12 = vector.load %arg3[%c112, %c0_11] : memref<672x128xf32, #tpu.memory_space<vmem>>, vector<16x8xf32>
    %13 = vector.extract_strided_slice %11 {offsets = [0, 0], sizes = [16, 16], strides = [1, 1]} : vector<22x16xf32> to vector<16x16xf32>
    %cst_12 = arith.constant dense<0.000000e+00> : vector<16x8xf32>
    %14 = tpu.matmul %13, %12, %cst_12 {dimension_numbers = #tpu.dot_dimension_numbers<[1], [0], [0], [1], [0, 0, 1, 1], [], []>} : vector<16x16xf32>, vector<16x8xf32>, vector<16x8xf32> -> vector<16x8xf32>
    %c128 = arith.constant 128 : index
    %c0_13 = arith.constant 0 : index
    %15 = vector.load %arg3[%c128, %c0_13] : memref<672x128xf32, #tpu.memory_space<vmem>>, vector<16x8xf32>
    %16 = vector.extract_strided_slice %11 {offsets = [1, 0], sizes = [16, 16], strides = [1, 1]} : vector<22x16xf32> to vector<16x16xf32>
    %cst_14 = arith.constant dense<0.000000e+00> : vector<16x8xf32>
    %17 = tpu.matmul %16, %15, %cst_14 {dimension_numbers = #tpu.dot_dimension_numbers<[1], [0], [0], [1], [0, 0, 1, 1], [], []>} : vector<16x16xf32>, vector<16x8xf32>, vector<16x8xf32> -> vector<16x8xf32>
    %18 = arith.addf %14, %17 : vector<16x8xf32>
    %c144 = arith.constant 144 : index
    %c0_15 = arith.constant 0 : index
    %19 = vector.load %arg3[%c144, %c0_15] : memref<672x128xf32, #tpu.memory_space<vmem>>, vector<16x8xf32>
    %20 = vector.extract_strided_slice %11 {offsets = [2, 0], sizes = [16, 16], strides = [1, 1]} : vector<22x16xf32> to vector<16x16xf32>
    %cst_16 = arith.constant dense<0.000000e+00> : vector<16x8xf32>
    %21 = tpu.matmul %20, %19, %cst_16 {dimension_numbers = #tpu.dot_dimension_numbers<[1], [0], [0], [1], [0, 0, 1, 1], [], []>} : vector<16x16xf32>, vector<16x8xf32>, vector<16x8xf32> -> vector<16x8xf32>
    %22 = arith.addf %18, %21 : vector<16x8xf32>
    %c160 = arith.constant 160 : index
    %c0_17 = arith.constant 0 : index
    %23 = vector.load %arg3[%c160, %c0_17] : memref<672x128xf32, #tpu.memory_space<vmem>>, vector<16x8xf32>
    %24 = vector.extract_strided_slice %11 {offsets = [3, 0], sizes = [16, 16], strides = [1, 1]} : vector<22x16xf32> to vector<16x16xf32>
    %cst_18 = arith.constant dense<0.000000e+00> : vector<16x8xf32>
    %25 = tpu.matmul %24, %23, %cst_18 {dimension_numbers = #tpu.dot_dimension_numbers<[1], [0], [0], [1], [0, 0, 1, 1], [], []>} : vector<16x16xf32>, vector<16x8xf32>, vector<16x8xf32> -> vector<16x8xf32>
    %26 = arith.addf %22, %25 : vector<16x8xf32>
    %c176 = arith.constant 176 : index
    %c0_19 = arith.constant 0 : index
    %27 = vector.load %arg3[%c176, %c0_19] : memref<672x128xf32, #tpu.memory_space<vmem>>, vector<16x8xf32>
    %28 = vector.extract_strided_slice %11 {offsets = [4, 0], sizes = [16, 16], strides = [1, 1]} : vector<22x16xf32> to vector<16x16xf32>
    %cst_20 = arith.constant dense<0.000000e+00> : vector<16x8xf32>
    %29 = tpu.matmul %28, %27, %cst_20 {dimension_numbers = #tpu.dot_dimension_numbers<[1], [0], [0], [1], [0, 0, 1, 1], [], []>} : vector<16x16xf32>, vector<16x8xf32>, vector<16x8xf32> -> vector<16x8xf32>
    %30 = arith.addf %26, %29 : vector<16x8xf32>
    %c192 = arith.constant 192 : index
    %c0_21 = arith.constant 0 : index
    %31 = vector.load %arg3[%c192, %c0_21] : memref<672x128xf32, #tpu.memory_space<vmem>>, vector<16x8xf32>
    %32 = vector.extract_strided_slice %11 {offsets = [5, 0], sizes = [16, 16], strides = [1, 1]} : vector<22x16xf32> to vector<16x16xf32>
    %cst_22 = arith.constant dense<0.000000e+00> : vector<16x8xf32>
    %33 = tpu.matmul %32, %31, %cst_22 {dimension_numbers = #tpu.dot_dimension_numbers<[1], [0], [0], [1], [0, 0, 1, 1], [], []>} : vector<16x16xf32>, vector<16x8xf32>, vector<16x8xf32> -> vector<16x8xf32>
    %34 = arith.addf %30, %33 : vector<16x8xf32>
    %c208 = arith.constant 208 : index
    %c0_23 = arith.constant 0 : index
    %35 = vector.load %arg3[%c208, %c0_23] : memref<672x128xf32, #tpu.memory_space<vmem>>, vector<16x8xf32>
    %36 = vector.extract_strided_slice %11 {offsets = [6, 0], sizes = [16, 16], strides = [1, 1]} : vector<22x16xf32> to vector<16x16xf32>
    %cst_24 = arith.constant dense<0.000000e+00> : vector<16x8xf32>
    %37 = tpu.matmul %36, %35, %cst_24 {dimension_numbers = #tpu.dot_dimension_numbers<[1], [0], [0], [1], [0, 0, 1, 1], [], []>} : vector<16x16xf32>, vector<16x8xf32>, vector<16x8xf32> -> vector<16x8xf32>
    %38 = arith.addf %34, %37 : vector<16x8xf32>
    %c1 = arith.constant 1 : index
    %c0_25 = arith.constant 0 : index
    %39 = vector.load %arg4[%c1, %c0_25] : memref<13x128xf32, #tpu.memory_space<vmem>>, vector<1x8xf32>
    %40 = vector.broadcast %39 : vector<1x8xf32> to vector<16x8xf32>
    %41 = arith.addf %38, %40 : vector<16x8xf32>
    %cst_26 = arith.constant 0.000000e+00 : f32
    %42 = vector.broadcast %cst_26 : f32 to vector<16x8xf32>
    %43 = arith.cmpf ogt, %41, %42 : vector<16x8xf32>
    %44 = math.exp %41 : vector<16x8xf32>
    %cst_27 = arith.constant 1.000000e+00 : f32
    %45 = vector.broadcast %cst_27 : f32 to vector<16x8xf32>
    %46 = arith.subf %44, %45 : vector<16x8xf32>
    %47 = arith.select %43, %41, %46 : vector<16x8xi1>, vector<16x8xf32>
    %c40 = arith.constant 40 : index
    %c0_28 = arith.constant 0 : index
    %48 = vector.load %arg3[%c40, %c0_28] : memref<672x128xf32, #tpu.memory_space<vmem>>, vector<18x16xf32>
    %cst_29 = arith.constant dense<0.000000e+00> : vector<18x8xf32>
    %49 = tpu.matmul %48, %47, %cst_29 {dimension_numbers = #tpu.dot_dimension_numbers<[1], [0], [0], [1], [0, 0, 1, 1], [], []>} : vector<18x16xf32>, vector<16x8xf32>, vector<18x8xf32> -> vector<18x8xf32>
    %c224 = arith.constant 224 : index
    %c0_30 = arith.constant 0 : index
    %50 = vector.load %arg3[%c224, %c0_30] : memref<672x128xf32, #tpu.memory_space<vmem>>, vector<8x4xf32>
    %51 = vector.extract_strided_slice %49 {offsets = [0, 0], sizes = [16, 8], strides = [1, 1]} : vector<18x8xf32> to vector<16x8xf32>
    %cst_31 = arith.constant dense<0.000000e+00> : vector<16x4xf32>
    %52 = tpu.matmul %51, %50, %cst_31 {dimension_numbers = #tpu.dot_dimension_numbers<[1], [0], [0], [1], [0, 0, 1, 1], [], []>} : vector<16x8xf32>, vector<8x4xf32>, vector<16x4xf32> -> vector<16x4xf32>
    %c232 = arith.constant 232 : index
    %c0_32 = arith.constant 0 : index
    %53 = vector.load %arg3[%c232, %c0_32] : memref<672x128xf32, #tpu.memory_space<vmem>>, vector<8x4xf32>
    %54 = vector.extract_strided_slice %49 {offsets = [1, 0], sizes = [16, 8], strides = [1, 1]} : vector<18x8xf32> to vector<16x8xf32>
    %cst_33 = arith.constant dense<0.000000e+00> : vector<16x4xf32>
    %55 = tpu.matmul %54, %53, %cst_33 {dimension_numbers = #tpu.dot_dimension_numbers<[1], [0], [0], [1], [0, 0, 1, 1], [], []>} : vector<16x8xf32>, vector<8x4xf32>, vector<16x4xf32> -> vector<16x4xf32>
    %56 = arith.addf %52, %55 : vector<16x4xf32>
    %c240 = arith.constant 240 : index
    %c0_34 = arith.constant 0 : index
    %57 = vector.load %arg3[%c240, %c0_34] : memref<672x128xf32, #tpu.memory_space<vmem>>, vector<8x4xf32>
    %58 = vector.extract_strided_slice %49 {offsets = [2, 0], sizes = [16, 8], strides = [1, 1]} : vector<18x8xf32> to vector<16x8xf32>
    %cst_35 = arith.constant dense<0.000000e+00> : vector<16x4xf32>
    %59 = tpu.matmul %58, %57, %cst_35 {dimension_numbers = #tpu.dot_dimension_numbers<[1], [0], [0], [1], [0, 0, 1, 1], [], []>} : vector<16x8xf32>, vector<8x4xf32>, vector<16x4xf32> -> vector<16x4xf32>
    %60 = arith.addf %56, %59 : vector<16x4xf32>
    %c2 = arith.constant 2 : index
    %c0_36 = arith.constant 0 : index
    %61 = vector.load %arg4[%c2, %c0_36] : memref<13x128xf32, #tpu.memory_space<vmem>>, vector<1x4xf32>
    %62 = vector.broadcast %61 : vector<1x4xf32> to vector<16x4xf32>
    %63 = arith.addf %60, %62 : vector<16x4xf32>
    %cst_37 = arith.constant 0.000000e+00 : f32
    %64 = vector.broadcast %cst_37 : f32 to vector<16x4xf32>
    %65 = arith.cmpf ogt, %63, %64 : vector<16x4xf32>
    %66 = math.exp %63 : vector<16x4xf32>
    %cst_38 = arith.constant 1.000000e+00 : f32
    %67 = vector.broadcast %cst_38 : f32 to vector<16x4xf32>
    %68 = arith.subf %66, %67 : vector<16x4xf32>
    %69 = arith.select %65, %63, %68 : vector<16x4xi1>, vector<16x4xf32>
    %c248 = arith.constant 248 : index
    %c0_39 = arith.constant 0 : index
    %70 = vector.load %arg3[%c248, %c0_39] : memref<672x128xf32, #tpu.memory_space<vmem>>, vector<4x8xf32>
    %cst_40 = arith.constant dense<0.000000e+00> : vector<16x8xf32>
    %71 = tpu.matmul %69, %70, %cst_40 {dimension_numbers = #tpu.dot_dimension_numbers<[1], [0], [0], [1], [0, 0, 1, 1], [], []>} : vector<16x4xf32>, vector<4x8xf32>, vector<16x8xf32> -> vector<16x8xf32>
    %c3 = arith.constant 3 : index
    %c0_41 = arith.constant 0 : index
    %72 = vector.load %arg4[%c3, %c0_41] : memref<13x128xf32, #tpu.memory_space<vmem>>, vector<1x8xf32>
    %73 = vector.broadcast %72 : vector<1x8xf32> to vector<16x8xf32>
    %74 = arith.addf %71, %73 : vector<16x8xf32>
    %75 = arith.addf %74, %41 : vector<16x8xf32>
    %cst_42 = arith.constant 0.000000e+00 : f32
    %76 = vector.broadcast %cst_42 : f32 to vector<16x8xf32>
    %77 = arith.cmpf ogt, %75, %76 : vector<16x8xf32>
    %78 = math.exp %75 : vector<16x8xf32>
    %cst_43 = arith.constant 1.000000e+00 : f32
    %79 = vector.broadcast %cst_43 : f32 to vector<16x8xf32>
    %80 = arith.subf %78, %79 : vector<16x8xf32>
    %81 = arith.select %77, %75, %80 : vector<16x8xi1>, vector<16x8xf32>
    %c64 = arith.constant 64 : index
    %c0_44 = arith.constant 0 : index
    %82 = vector.load %arg3[%c64, %c0_44] : memref<672x128xf32, #tpu.memory_space<vmem>>, vector<20x16xf32>
    %cst_45 = arith.constant dense<0.000000e+00> : vector<20x8xf32>
    %83 = tpu.matmul %82, %81, %cst_45 {dimension_numbers = #tpu.dot_dimension_numbers<[1], [0], [0], [1], [0, 0, 1, 1], [], []>} : vector<20x16xf32>, vector<16x8xf32>, vector<20x8xf32> -> vector<20x8xf32>
    %c256 = arith.constant 256 : index
    %c0_46 = arith.constant 0 : index
    %84 = vector.load %arg3[%c256, %c0_46] : memref<672x128xf32, #tpu.memory_space<vmem>>, vector<8x4xf32>
    %85 = vector.extract_strided_slice %83 {offsets = [0, 0], sizes = [16, 8], strides = [1, 1]} : vector<20x8xf32> to vector<16x8xf32>
    %cst_47 = arith.constant dense<0.000000e+00> : vector<16x4xf32>
    %86 = tpu.matmul %85, %84, %cst_47 {dimension_numbers = #tpu.dot_dimension_numbers<[1], [0], [0], [1], [0, 0, 1, 1], [], []>} : vector<16x8xf32>, vector<8x4xf32>, vector<16x4xf32> -> vector<16x4xf32>
    %c264 = arith.constant 264 : index
    %c0_48 = arith.constant 0 : index
    %87 = vector.load %arg3[%c264, %c0_48] : memref<672x128xf32, #tpu.memory_space<vmem>>, vector<8x4xf32>
    %88 = vector.extract_strided_slice %83 {offsets = [2, 0], sizes = [16, 8], strides = [1, 1]} : vector<20x8xf32> to vector<16x8xf32>
    %cst_49 = arith.constant dense<0.000000e+00> : vector<16x4xf32>
    %89 = tpu.matmul %88, %87, %cst_49 {dimension_numbers = #tpu.dot_dimension_numbers<[1], [0], [0], [1], [0, 0, 1, 1], [], []>} : vector<16x8xf32>, vector<8x4xf32>, vector<16x4xf32> -> vector<16x4xf32>
    %90 = arith.addf %86, %89 : vector<16x4xf32>
    %c272 = arith.constant 272 : index
    %c0_50 = arith.constant 0 : index
    %91 = vector.load %arg3[%c272, %c0_50] : memref<672x128xf32, #tpu.memory_space<vmem>>, vector<8x4xf32>
    %92 = vector.extract_strided_slice %83 {offsets = [4, 0], sizes = [16, 8], strides = [1, 1]} : vector<20x8xf32> to vector<16x8xf32>
    %cst_51 = arith.constant dense<0.000000e+00> : vector<16x4xf32>
    %93 = tpu.matmul %92, %91, %cst_51 {dimension_numbers = #tpu.dot_dimension_numbers<[1], [0], [0], [1], [0, 0, 1, 1], [], []>} : vector<16x8xf32>, vector<8x4xf32>, vector<16x4xf32> -> vector<16x4xf32>
    %94 = arith.addf %90, %93 : vector<16x4xf32>
    %c4 = arith.constant 4 : index
    %c0_52 = arith.constant 0 : index
    %95 = vector.load %arg4[%c4, %c0_52] : memref<13x128xf32, #tpu.memory_space<vmem>>, vector<1x4xf32>
    %96 = vector.broadcast %95 : vector<1x4xf32> to vector<16x4xf32>
    %97 = arith.addf %94, %96 : vector<16x4xf32>
    %cst_53 = arith.constant 0.000000e+00 : f32
    %98 = vector.broadcast %cst_53 : f32 to vector<16x4xf32>
    %99 = arith.cmpf ogt, %97, %98 : vector<16x4xf32>
    %100 = math.exp %97 : vector<16x4xf32>
    %cst_54 = arith.constant 1.000000e+00 : f32
    %101 = vector.broadcast %cst_54 : f32 to vector<16x4xf32>
    %102 = arith.subf %100, %101 : vector<16x4xf32>
    %103 = arith.select %99, %97, %102 : vector<16x4xi1>, vector<16x4xf32>
    %c280 = arith.constant 280 : index
    %c0_55 = arith.constant 0 : index
    %104 = vector.load %arg3[%c280, %c0_55] : memref<672x128xf32, #tpu.memory_space<vmem>>, vector<4x8xf32>
    %cst_56 = arith.constant dense<0.000000e+00> : vector<16x8xf32>
    %105 = tpu.matmul %103, %104, %cst_56 {dimension_numbers = #tpu.dot_dimension_numbers<[1], [0], [0], [1], [0, 0, 1, 1], [], []>} : vector<16x4xf32>, vector<4x8xf32>, vector<16x8xf32> -> vector<16x8xf32>
    %c5 = arith.constant 5 : index
    %c0_57 = arith.constant 0 : index
    %106 = vector.load %arg4[%c5, %c0_57] : memref<13x128xf32, #tpu.memory_space<vmem>>, vector<1x8xf32>
    %107 = vector.broadcast %106 : vector<1x8xf32> to vector<16x8xf32>
    %108 = arith.addf %105, %107 : vector<16x8xf32>
    %109 = arith.addf %108, %75 : vector<16x8xf32>
    %cst_58 = arith.constant 0.000000e+00 : f32
    %110 = vector.broadcast %cst_58 : f32 to vector<16x8xf32>
    %111 = arith.cmpf ogt, %109, %110 : vector<16x8xf32>
    %112 = math.exp %109 : vector<16x8xf32>
    %cst_59 = arith.constant 1.000000e+00 : f32
    %113 = vector.broadcast %cst_59 : f32 to vector<16x8xf32>
    %114 = arith.subf %112, %113 : vector<16x8xf32>
    %115 = arith.select %111, %109, %114 : vector<16x8xi1>, vector<16x8xf32>
    %c88 = arith.constant 88 : index
    %c0_60 = arith.constant 0 : index
    %116 = vector.load %arg3[%c88, %c0_60] : memref<672x128xf32, #tpu.memory_space<vmem>>, vector<17x16xf32>
    %cst_61 = arith.constant dense<0.000000e+00> : vector<17x8xf32>
    %117 = tpu.matmul %116, %115, %cst_61 {dimension_numbers = #tpu.dot_dimension_numbers<[1], [0], [0], [1], [0, 0, 1, 1], [], []>} : vector<17x16xf32>, vector<16x8xf32>, vector<17x8xf32> -> vector<17x8xf32>
    %c288 = arith.constant 288 : index
    %c0_62 = arith.constant 0 : index
    %118 = vector.load %arg3[%c288, %c0_62] : memref<672x128xf32, #tpu.memory_space<vmem>>, vector<8x16xf32>
    %119 = vector.extract_strided_slice %117 {offsets = [0, 0], sizes = [16, 8], strides = [1, 1]} : vector<17x8xf32> to vector<16x8xf32>
    %cst_63 = arith.constant dense<0.000000e+00> : vector<16x16xf32>
    %120 = tpu.matmul %119, %118, %cst_63 {dimension_numbers = #tpu.dot_dimension_numbers<[1], [0], [0], [1], [0, 0, 1, 1], [], []>} : vector<16x8xf32>, vector<8x16xf32>, vector<16x16xf32> -> vector<16x16xf32>
    %c296 = arith.constant 296 : index
    %c0_64 = arith.constant 0 : index
    %121 = vector.load %arg3[%c296, %c0_64] : memref<672x128xf32, #tpu.memory_space<vmem>>, vector<8x16xf32>
    %122 = vector.extract_strided_slice %117 {offsets = [1, 0], sizes = [16, 8], strides = [1, 1]} : vector<17x8xf32> to vector<16x8xf32>
    %cst_65 = arith.constant dense<0.000000e+00> : vector<16x16xf32>
    %123 = tpu.matmul %122, %121, %cst_65 {dimension_numbers = #tpu.dot_dimension_numbers<[1], [0], [0], [1], [0, 0, 1, 1], [], []>} : vector<16x8xf32>, vector<8x16xf32>, vector<16x16xf32> -> vector<16x16xf32>
    %124 = arith.addf %120, %123 : vector<16x16xf32>
    %c6 = arith.constant 6 : index
    %c0_66 = arith.constant 0 : index
    %125 = vector.load %arg4[%c6, %c0_66] : memref<13x128xf32, #tpu.memory_space<vmem>>, vector<1x16xf32>
    %126 = vector.broadcast %125 : vector<1x16xf32> to vector<16x16xf32>
    %127 = arith.addf %124, %126 : vector<16x16xf32>
    %cst_67 = arith.constant 0.000000e+00 : f32
    %128 = vector.broadcast %cst_67 : f32 to vector<16x16xf32>
    %129 = arith.cmpf ogt, %127, %128 : vector<16x16xf32>
    %130 = math.exp %127 : vector<16x16xf32>
    %cst_68 = arith.constant 1.000000e+00 : f32
    %131 = vector.broadcast %cst_68 : f32 to vector<16x16xf32>
    %132 = arith.subf %130, %131 : vector<16x16xf32>
    %133 = arith.select %129, %127, %132 : vector<16x16xi1>, vector<16x16xf32>
    %c40_69 = arith.constant 40 : index
    %c0_70 = arith.constant 0 : index
    %134 = vector.load %arg3[%c40_69, %c0_70] : memref<672x128xf32, #tpu.memory_space<vmem>>, vector<18x16xf32>
    %cst_71 = arith.constant dense<0.000000e+00> : vector<18x16xf32>
    %135 = tpu.matmul %134, %133, %cst_71 {dimension_numbers = #tpu.dot_dimension_numbers<[1], [0], [0], [1], [0, 0, 1, 1], [], []>} : vector<18x16xf32>, vector<16x16xf32>, vector<18x16xf32> -> vector<18x16xf32>
    %c304 = arith.constant 304 : index
    %c0_72 = arith.constant 0 : index
    %136 = vector.load %arg3[%c304, %c0_72] : memref<672x128xf32, #tpu.memory_space<vmem>>, vector<16x8xf32>
    %137 = vector.extract_strided_slice %135 {offsets = [0, 0], sizes = [16, 16], strides = [1, 1]} : vector<18x16xf32> to vector<16x16xf32>
    %cst_73 = arith.constant dense<0.000000e+00> : vector<16x8xf32>
    %138 = tpu.matmul %137, %136, %cst_73 {dimension_numbers = #tpu.dot_dimension_numbers<[1], [0], [0], [1], [0, 0, 1, 1], [], []>} : vector<16x16xf32>, vector<16x8xf32>, vector<16x8xf32> -> vector<16x8xf32>
    %c320 = arith.constant 320 : index
    %c0_74 = arith.constant 0 : index
    %139 = vector.load %arg3[%c320, %c0_74] : memref<672x128xf32, #tpu.memory_space<vmem>>, vector<16x8xf32>
    %140 = vector.extract_strided_slice %135 {offsets = [1, 0], sizes = [16, 16], strides = [1, 1]} : vector<18x16xf32> to vector<16x16xf32>
    %cst_75 = arith.constant dense<0.000000e+00> : vector<16x8xf32>
    %141 = tpu.matmul %140, %139, %cst_75 {dimension_numbers = #tpu.dot_dimension_numbers<[1], [0], [0], [1], [0, 0, 1, 1], [], []>} : vector<16x16xf32>, vector<16x8xf32>, vector<16x8xf32> -> vector<16x8xf32>
    %142 = arith.addf %138, %141 : vector<16x8xf32>
    %c336 = arith.constant 336 : index
    %c0_76 = arith.constant 0 : index
    %143 = vector.load %arg3[%c336, %c0_76] : memref<672x128xf32, #tpu.memory_space<vmem>>, vector<16x8xf32>
    %144 = vector.extract_strided_slice %135 {offsets = [2, 0], sizes = [16, 16], strides = [1, 1]} : vector<18x16xf32> to vector<16x16xf32>
    %cst_77 = arith.constant dense<0.000000e+00> : vector<16x8xf32>
    %145 = tpu.matmul %144, %143, %cst_77 {dimension_numbers = #tpu.dot_dimension_numbers<[1], [0], [0], [1], [0, 0, 1, 1], [], []>} : vector<16x16xf32>, vector<16x8xf32>, vector<16x8xf32> -> vector<16x8xf32>
    %146 = arith.addf %142, %145 : vector<16x8xf32>
    %c7 = arith.constant 7 : index
    %c0_78 = arith.constant 0 : index
    %147 = vector.load %arg4[%c7, %c0_78] : memref<13x128xf32, #tpu.memory_space<vmem>>, vector<1x8xf32>
    %148 = vector.broadcast %147 : vector<1x8xf32> to vector<16x8xf32>
    %149 = arith.addf %146, %148 : vector<16x8xf32>
    %cst_79 = arith.constant 0.000000e+00 : f32
    %150 = vector.broadcast %cst_79 : f32 to vector<16x8xf32>
    %151 = arith.cmpf ogt, %149, %150 : vector<16x8xf32>
    %152 = math.exp %149 : vector<16x8xf32>
    %cst_80 = arith.constant 1.000000e+00 : f32
    %153 = vector.broadcast %cst_80 : f32 to vector<16x8xf32>
    %154 = arith.subf %152, %153 : vector<16x8xf32>
    %155 = arith.select %151, %149, %154 : vector<16x8xi1>, vector<16x8xf32>
    %c352 = arith.constant 352 : index
    %c0_81 = arith.constant 0 : index
    %156 = vector.load %arg3[%c352, %c0_81] : memref<672x128xf32, #tpu.memory_space<vmem>>, vector<8x16xf32>
    %cst_82 = arith.constant dense<0.000000e+00> : vector<16x16xf32>
    %157 = tpu.matmul %155, %156, %cst_82 {dimension_numbers = #tpu.dot_dimension_numbers<[1], [0], [0], [1], [0, 0, 1, 1], [], []>} : vector<16x8xf32>, vector<8x16xf32>, vector<16x16xf32> -> vector<16x16xf32>
    %c8 = arith.constant 8 : index
    %c0_83 = arith.constant 0 : index
    %158 = vector.load %arg4[%c8, %c0_83] : memref<13x128xf32, #tpu.memory_space<vmem>>, vector<1x16xf32>
    %159 = vector.broadcast %158 : vector<1x16xf32> to vector<16x16xf32>
    %160 = arith.addf %157, %159 : vector<16x16xf32>
    %161 = arith.addf %160, %127 : vector<16x16xf32>
    %cst_84 = arith.constant 0.000000e+00 : f32
    %162 = vector.broadcast %cst_84 : f32 to vector<16x16xf32>
    %163 = arith.cmpf ogt, %161, %162 : vector<16x16xf32>
    %164 = math.exp %161 : vector<16x16xf32>
    %cst_85 = arith.constant 1.000000e+00 : f32
    %165 = vector.broadcast %cst_85 : f32 to vector<16x16xf32>
    %166 = arith.subf %164, %165 : vector<16x16xf32>
    %167 = arith.select %163, %161, %166 : vector<16x16xi1>, vector<16x16xf32>
    %c64_86 = arith.constant 64 : index
    %c0_87 = arith.constant 0 : index
    %168 = vector.load %arg3[%c64_86, %c0_87] : memref<672x128xf32, #tpu.memory_space<vmem>>, vector<20x16xf32>
    %cst_88 = arith.constant dense<0.000000e+00> : vector<20x16xf32>
    %169 = tpu.matmul %168, %167, %cst_88 {dimension_numbers = #tpu.dot_dimension_numbers<[1], [0], [0], [1], [0, 0, 1, 1], [], []>} : vector<20x16xf32>, vector<16x16xf32>, vector<20x16xf32> -> vector<20x16xf32>
    %c360 = arith.constant 360 : index
    %c0_89 = arith.constant 0 : index
    %170 = vector.load %arg3[%c360, %c0_89] : memref<672x128xf32, #tpu.memory_space<vmem>>, vector<16x8xf32>
    %171 = vector.extract_strided_slice %169 {offsets = [0, 0], sizes = [16, 16], strides = [1, 1]} : vector<20x16xf32> to vector<16x16xf32>
    %cst_90 = arith.constant dense<0.000000e+00> : vector<16x8xf32>
    %172 = tpu.matmul %171, %170, %cst_90 {dimension_numbers = #tpu.dot_dimension_numbers<[1], [0], [0], [1], [0, 0, 1, 1], [], []>} : vector<16x16xf32>, vector<16x8xf32>, vector<16x8xf32> -> vector<16x8xf32>
    %c376 = arith.constant 376 : index
    %c0_91 = arith.constant 0 : index
    %173 = vector.load %arg3[%c376, %c0_91] : memref<672x128xf32, #tpu.memory_space<vmem>>, vector<16x8xf32>
    %174 = vector.extract_strided_slice %169 {offsets = [2, 0], sizes = [16, 16], strides = [1, 1]} : vector<20x16xf32> to vector<16x16xf32>
    %cst_92 = arith.constant dense<0.000000e+00> : vector<16x8xf32>
    %175 = tpu.matmul %174, %173, %cst_92 {dimension_numbers = #tpu.dot_dimension_numbers<[1], [0], [0], [1], [0, 0, 1, 1], [], []>} : vector<16x16xf32>, vector<16x8xf32>, vector<16x8xf32> -> vector<16x8xf32>
    %176 = arith.addf %172, %175 : vector<16x8xf32>
    %c392 = arith.constant 392 : index
    %c0_93 = arith.constant 0 : index
    %177 = vector.load %arg3[%c392, %c0_93] : memref<672x128xf32, #tpu.memory_space<vmem>>, vector<16x8xf32>
    %178 = vector.extract_strided_slice %169 {offsets = [4, 0], sizes = [16, 16], strides = [1, 1]} : vector<20x16xf32> to vector<16x16xf32>
    %cst_94 = arith.constant dense<0.000000e+00> : vector<16x8xf32>
    %179 = tpu.matmul %178, %177, %cst_94 {dimension_numbers = #tpu.dot_dimension_numbers<[1], [0], [0], [1], [0, 0, 1, 1], [], []>} : vector<16x16xf32>, vector<16x8xf32>, vector<16x8xf32> -> vector<16x8xf32>
    %180 = arith.addf %176, %179 : vector<16x8xf32>
    %c9 = arith.constant 9 : index
    %c0_95 = arith.constant 0 : index
    %181 = vector.load %arg4[%c9, %c0_95] : memref<13x128xf32, #tpu.memory_space<vmem>>, vector<1x8xf32>
    %182 = vector.broadcast %181 : vector<1x8xf32> to vector<16x8xf32>
    %183 = arith.addf %180, %182 : vector<16x8xf32>
    %cst_96 = arith.constant 0.000000e+00 : f32
    %184 = vector.broadcast %cst_96 : f32 to vector<16x8xf32>
    %185 = arith.cmpf ogt, %183, %184 : vector<16x8xf32>
    %186 = math.exp %183 : vector<16x8xf32>
    %cst_97 = arith.constant 1.000000e+00 : f32
    %187 = vector.broadcast %cst_97 : f32 to vector<16x8xf32>
    %188 = arith.subf %186, %187 : vector<16x8xf32>
    %189 = arith.select %185, %183, %188 : vector<16x8xi1>, vector<16x8xf32>
    %c408 = arith.constant 408 : index
    %c0_98 = arith.constant 0 : index
    %190 = vector.load %arg3[%c408, %c0_98] : memref<672x128xf32, #tpu.memory_space<vmem>>, vector<8x16xf32>
    %cst_99 = arith.constant dense<0.000000e+00> : vector<16x16xf32>
    %191 = tpu.matmul %189, %190, %cst_99 {dimension_numbers = #tpu.dot_dimension_numbers<[1], [0], [0], [1], [0, 0, 1, 1], [], []>} : vector<16x8xf32>, vector<8x16xf32>, vector<16x16xf32> -> vector<16x16xf32>
    %c10 = arith.constant 10 : index
    %c0_100 = arith.constant 0 : index
    %192 = vector.load %arg4[%c10, %c0_100] : memref<13x128xf32, #tpu.memory_space<vmem>>, vector<1x16xf32>
    %193 = vector.broadcast %192 : vector<1x16xf32> to vector<16x16xf32>
    %194 = arith.addf %191, %193 : vector<16x16xf32>
    %195 = arith.addf %194, %161 : vector<16x16xf32>
    %cst_101 = arith.constant 0.000000e+00 : f32
    %196 = vector.broadcast %cst_101 : f32 to vector<16x16xf32>
    %197 = arith.cmpf ogt, %195, %196 : vector<16x16xf32>
    %198 = math.exp %195 : vector<16x16xf32>
    %cst_102 = arith.constant 1.000000e+00 : f32
    %199 = vector.broadcast %cst_102 : f32 to vector<16x16xf32>
    %200 = arith.subf %198, %199 : vector<16x16xf32>
    %201 = arith.select %197, %195, %200 : vector<16x16xi1>, vector<16x16xf32>
    %c88_103 = arith.constant 88 : index
    %c0_104 = arith.constant 0 : index
    %202 = vector.load %arg3[%c88_103, %c0_104] : memref<672x128xf32, #tpu.memory_space<vmem>>, vector<17x16xf32>
    %cst_105 = arith.constant dense<0.000000e+00> : vector<17x16xf32>
    %203 = tpu.matmul %202, %201, %cst_105 {dimension_numbers = #tpu.dot_dimension_numbers<[1], [0], [0], [1], [0, 0, 1, 1], [], []>} : vector<17x16xf32>, vector<16x16xf32>, vector<17x16xf32> -> vector<17x16xf32>
    %c416 = arith.constant 416 : index
    %c0_106 = arith.constant 0 : index
    %204 = vector.load %arg3[%c416, %c0_106] : memref<672x128xf32, #tpu.memory_space<vmem>>, vector<16x32xf32>
    %205 = vector.extract_strided_slice %203 {offsets = [0, 0], sizes = [16, 16], strides = [1, 1]} : vector<17x16xf32> to vector<16x16xf32>
    %cst_107 = arith.constant dense<0.000000e+00> : vector<16x32xf32>
    %206 = tpu.matmul %205, %204, %cst_107 {dimension_numbers = #tpu.dot_dimension_numbers<[1], [0], [0], [1], [0, 0, 1, 1], [], []>} : vector<16x16xf32>, vector<16x32xf32>, vector<16x32xf32> -> vector<16x32xf32>
    %c432 = arith.constant 432 : index
    %c0_108 = arith.constant 0 : index
    %207 = vector.load %arg3[%c432, %c0_108] : memref<672x128xf32, #tpu.memory_space<vmem>>, vector<16x32xf32>
    %208 = vector.extract_strided_slice %203 {offsets = [1, 0], sizes = [16, 16], strides = [1, 1]} : vector<17x16xf32> to vector<16x16xf32>
    %cst_109 = arith.constant dense<0.000000e+00> : vector<16x32xf32>
    %209 = tpu.matmul %208, %207, %cst_109 {dimension_numbers = #tpu.dot_dimension_numbers<[1], [0], [0], [1], [0, 0, 1, 1], [], []>} : vector<16x16xf32>, vector<16x32xf32>, vector<16x32xf32> -> vector<16x32xf32>
    %210 = arith.addf %206, %209 : vector<16x32xf32>
    %c11 = arith.constant 11 : index
    %c0_110 = arith.constant 0 : index
    %211 = vector.load %arg4[%c11, %c0_110] : memref<13x128xf32, #tpu.memory_space<vmem>>, vector<1x32xf32>
    %212 = vector.broadcast %211 : vector<1x32xf32> to vector<16x32xf32>
    %213 = arith.addf %210, %212 : vector<16x32xf32>
    %cst_111 = arith.constant 0.000000e+00 : f32
    %214 = vector.broadcast %cst_111 : f32 to vector<16x32xf32>
    %215 = arith.cmpf ogt, %213, %214 : vector<16x32xf32>
    %216 = math.exp %213 : vector<16x32xf32>
    %cst_112 = arith.constant 1.000000e+00 : f32
    %217 = vector.broadcast %cst_112 : f32 to vector<16x32xf32>
    %218 = arith.subf %216, %217 : vector<16x32xf32>
    %219 = arith.select %215, %213, %218 : vector<16x32xi1>, vector<16x32xf32>
    %c16_113 = arith.constant 16 : index
    %c0_114 = arith.constant 0 : index
    %220 = vector.load %arg3[%c16_113, %c0_114] : memref<672x128xf32, #tpu.memory_space<vmem>>, vector<22x16xf32>
    %cst_115 = arith.constant dense<0.000000e+00> : vector<22x32xf32>
    %221 = tpu.matmul %220, %219, %cst_115 {dimension_numbers = #tpu.dot_dimension_numbers<[1], [0], [0], [1], [0, 0, 1, 1], [], []>} : vector<22x16xf32>, vector<16x32xf32>, vector<22x32xf32> -> vector<22x32xf32>
    %c448 = arith.constant 448 : index
    %c0_116 = arith.constant 0 : index
    %222 = vector.load %arg3[%c448, %c0_116] : memref<672x128xf32, #tpu.memory_space<vmem>>, vector<32x16xf32>
    %223 = vector.extract_strided_slice %221 {offsets = [0, 0], sizes = [16, 32], strides = [1, 1]} : vector<22x32xf32> to vector<16x32xf32>
    %cst_117 = arith.constant dense<0.000000e+00> : vector<16x16xf32>
    %224 = tpu.matmul %223, %222, %cst_117 {dimension_numbers = #tpu.dot_dimension_numbers<[1], [0], [0], [1], [0, 0, 1, 1], [], []>} : vector<16x32xf32>, vector<32x16xf32>, vector<16x16xf32> -> vector<16x16xf32>
    %c480 = arith.constant 480 : index
    %c0_118 = arith.constant 0 : index
    %225 = vector.load %arg3[%c480, %c0_118] : memref<672x128xf32, #tpu.memory_space<vmem>>, vector<32x16xf32>
    %226 = vector.extract_strided_slice %221 {offsets = [1, 0], sizes = [16, 32], strides = [1, 1]} : vector<22x32xf32> to vector<16x32xf32>
    %cst_119 = arith.constant dense<0.000000e+00> : vector<16x16xf32>
    %227 = tpu.matmul %226, %225, %cst_119 {dimension_numbers = #tpu.dot_dimension_numbers<[1], [0], [0], [1], [0, 0, 1, 1], [], []>} : vector<16x32xf32>, vector<32x16xf32>, vector<16x16xf32> -> vector<16x16xf32>
    %228 = arith.addf %224, %227 : vector<16x16xf32>
    %c512 = arith.constant 512 : index
    %c0_120 = arith.constant 0 : index
    %229 = vector.load %arg3[%c512, %c0_120] : memref<672x128xf32, #tpu.memory_space<vmem>>, vector<32x16xf32>
    %230 = vector.extract_strided_slice %221 {offsets = [2, 0], sizes = [16, 32], strides = [1, 1]} : vector<22x32xf32> to vector<16x32xf32>
    %cst_121 = arith.constant dense<0.000000e+00> : vector<16x16xf32>
    %231 = tpu.matmul %230, %229, %cst_121 {dimension_numbers = #tpu.dot_dimension_numbers<[1], [0], [0], [1], [0, 0, 1, 1], [], []>} : vector<16x32xf32>, vector<32x16xf32>, vector<16x16xf32> -> vector<16x16xf32>
    %232 = arith.addf %228, %231 : vector<16x16xf32>
    %c544 = arith.constant 544 : index
    %c0_122 = arith.constant 0 : index
    %233 = vector.load %arg3[%c544, %c0_122] : memref<672x128xf32, #tpu.memory_space<vmem>>, vector<32x16xf32>
    %234 = vector.extract_strided_slice %221 {offsets = [3, 0], sizes = [16, 32], strides = [1, 1]} : vector<22x32xf32> to vector<16x32xf32>
    %cst_123 = arith.constant dense<0.000000e+00> : vector<16x16xf32>
    %235 = tpu.matmul %234, %233, %cst_123 {dimension_numbers = #tpu.dot_dimension_numbers<[1], [0], [0], [1], [0, 0, 1, 1], [], []>} : vector<16x32xf32>, vector<32x16xf32>, vector<16x16xf32> -> vector<16x16xf32>
    %236 = arith.addf %232, %235 : vector<16x16xf32>
    %c576 = arith.constant 576 : index
    %c0_124 = arith.constant 0 : index
    %237 = vector.load %arg3[%c576, %c0_124] : memref<672x128xf32, #tpu.memory_space<vmem>>, vector<32x16xf32>
    %238 = vector.extract_strided_slice %221 {offsets = [4, 0], sizes = [16, 32], strides = [1, 1]} : vector<22x32xf32> to vector<16x32xf32>
    %cst_125 = arith.constant dense<0.000000e+00> : vector<16x16xf32>
    %239 = tpu.matmul %238, %237, %cst_125 {dimension_numbers = #tpu.dot_dimension_numbers<[1], [0], [0], [1], [0, 0, 1, 1], [], []>} : vector<16x32xf32>, vector<32x16xf32>, vector<16x16xf32> -> vector<16x16xf32>
    %240 = arith.addf %236, %239 : vector<16x16xf32>
    %c608 = arith.constant 608 : index
    %c0_126 = arith.constant 0 : index
    %241 = vector.load %arg3[%c608, %c0_126] : memref<672x128xf32, #tpu.memory_space<vmem>>, vector<32x16xf32>
    %242 = vector.extract_strided_slice %221 {offsets = [5, 0], sizes = [16, 32], strides = [1, 1]} : vector<22x32xf32> to vector<16x32xf32>
    %cst_127 = arith.constant dense<0.000000e+00> : vector<16x16xf32>
    %243 = tpu.matmul %242, %241, %cst_127 {dimension_numbers = #tpu.dot_dimension_numbers<[1], [0], [0], [1], [0, 0, 1, 1], [], []>} : vector<16x32xf32>, vector<32x16xf32>, vector<16x16xf32> -> vector<16x16xf32>
    %244 = arith.addf %240, %243 : vector<16x16xf32>
    %c640 = arith.constant 640 : index
    %c0_128 = arith.constant 0 : index
    %245 = vector.load %arg3[%c640, %c0_128] : memref<672x128xf32, #tpu.memory_space<vmem>>, vector<32x16xf32>
    %246 = vector.extract_strided_slice %221 {offsets = [6, 0], sizes = [16, 32], strides = [1, 1]} : vector<22x32xf32> to vector<16x32xf32>
    %cst_129 = arith.constant dense<0.000000e+00> : vector<16x16xf32>
    %247 = tpu.matmul %246, %245, %cst_129 {dimension_numbers = #tpu.dot_dimension_numbers<[1], [0], [0], [1], [0, 0, 1, 1], [], []>} : vector<16x32xf32>, vector<32x16xf32>, vector<16x16xf32> -> vector<16x16xf32>
    %248 = arith.addf %244, %247 : vector<16x16xf32>
    %c12 = arith.constant 12 : index
    %c0_130 = arith.constant 0 : index
    %249 = vector.load %arg4[%c12, %c0_130] : memref<13x128xf32, #tpu.memory_space<vmem>>, vector<1x16xf32>
    %250 = vector.broadcast %249 : vector<1x16xf32> to vector<16x16xf32>
    %251 = arith.addf %248, %250 : vector<16x16xf32>
    %c0_131 = arith.constant 0 : index
    %c0_132 = arith.constant 0 : index
    %c0_133 = arith.constant 0 : index
    %252 = vector.load %arg5[%c0_131, %c0_132, %c0_133] : memref<1x16x16xf32, #tpu.memory_space<vmem>>, vector<1x16x16xf32>
    %253 = vector.shape_cast %252 : vector<1x16x16xf32> to vector<16x16xf32>
    %254 = vector.shape_cast %251 : vector<16x16xf32> to vector<1x16x16xf32>
    tpu.vector_store %arg5[%c0_131, %c0_132, %c0_133], %254 {strides = array<i32>} : memref<1x16x16xf32, #tpu.memory_space<vmem>>, vector<1x16x16xf32>,
    return
  }
  func.func @transform_0(%arg0: i32) -> (i32, i32, i32) {
    %c0_i32 = arith.constant 0 : i32
    %c0_i32_0 = arith.constant 0 : i32
    %c0_i32_1 = arith.constant 0 : i32
    return %arg0, %c0_i32, %c0_i32_0 : i32, i32, i32
  }
  func.func @transform_1(%arg0: i32) -> (i32, i32, i32) {
    %c0_i32 = arith.constant 0 : i32
    %c0_i32_0 = arith.constant 0 : i32
    %c0_i32_1 = arith.constant 0 : i32
    return %arg0, %c0_i32, %c0_i32_0 : i32, i32, i32
  }
  func.func @transform_2(%arg0: i32) -> (i32, i32) {
    %c0_i32 = arith.constant 0 : i32
    %c0_i32_0 = arith.constant 0 : i32
    %c0_i32_1 = arith.constant 0 : i32
    return %c0_i32, %c0_i32_0 : i32, i32
  }
  func.func @transform_3(%arg0: i32) -> (i32, i32) {
    %c0_i32 = arith.constant 0 : i32
    %c0_i32_0 = arith.constant 0 : i32
    %c0_i32_1 = arith.constant 0 : i32
    return %c0_i32, %c0_i32_0 : i32, i32
  }
  func.func @transform_4(%arg0: i32) -> (i32, i32, i32) {
    %c0_i32 = arith.constant 0 : i32
    %c0_i32_0 = arith.constant 0 : i32
    %c0_i32_1 = arith.constant 0 : i32
    return %arg0, %c0_i32, %c0_i32_0 : i32, i32, i32
  }
}

</mosaic_0001>

<llo_original>
// kernel: encoder_forward.1
$region0: #{encoder_forward.1}
  #allocation0 [shape = 'u32[]', space=smem, size = 0x4, offset = 0x4, fixed_abs, tag = 'smem constant byte address 0x4 - core index']
  #allocation1 [shape = 'u32[144,128]{1,0:T(1,128)}', space=vmem, size = 0x12000, scoped, tag = 'internal scratch']
  %s0 = inlined_call_operand.vmem [shape: f32[2,16,16], index: 0, kind: input, shape index: {}]
  %s1 = inlined_call_operand.vmem [shape: f32[2,16,12], index: 1, kind: input, shape index: {}]
  %s2 = inlined_call_operand.vmem [shape: f32[672,128], index: 2, kind: input, shape index: {}]
  %s3 = inlined_call_operand.vmem [shape: f32[13,128], index: 3, kind: input, shape index: {}]
  %s4 = inlined_call_operand.vmem [shape: f32[2,16,16], index: 4, kind: output, shape index: {}]
  %s5 = sld [smem:[#allocation0]]
  $region49: #{encoder_forward.1} parent=0
    _
  %s7 = ssub.s32 1, %s5
  %s8 = scalar_select 0, %s7, %s5
  loop: start=0, step=1, limit=4
  $region2: #{encoder_forward.1} parent=0 // loop_pre_header
    _
  $region3: #{encoder_forward.1} parent=0 // loop_header
    %s10 = sphi 0, %s14
    %p11 = scmp.ge.s32.totalorder %s10, 4
    %s20 = sphi 0, %s22
    %s23 = sphi 0, %s20
    %s24 = sphi 0, %s23
    %s40 = sphi 0, %s24
    %s46 = sphi 0, %s48
    %s49 = sphi 0, %s46
    %s50 = sphi 0, %s49
    %s66 = sphi 0, %s50
    %s70 = sphi 0, %s70
    %s72 = sphi 0, %s70
    %s73 = sphi 0, %s72
    %s87 = sphi 0, %s73
    %s91 = sphi 0, %s91
    %s93 = sphi 0, %s91
    %s94 = sphi 0, %s93
    %s108 = sphi 0, %s94
    %s114 = sphi 0, %s116
    %s117 = sphi 0, %s114
    %s118 = sphi 0, %s117
    %s134 = sphi 0, %s118
  $region4: #{encoder_forward.1} parent=0 // loop_header_branch
    %13 = sbr.rel (%p11) target = $region8
  $region5: #{encoder_forward.1} parent=0 // loop_body
    %s15 = ssub.s32 %s10, 1
    %s16 = ssub.s32 %s10, 2
    %s17 = sadd.s32 %s10, 1
    %s18 = ssub.s32 %s10, %s17
    %p19 = scmp.eq.s32.totalorder %s18, 0
    %s21 = sadd.s32 %s20, 1
    %s22 = scalar_select %p19, %s20, %s21
    %p25 = pneg %p19
    %p26 = scmp.eq.s32.totalorder %s10, 1
    %p27 = por %p25, %p26
    %p28 = scmp.ne.s32.totalorder %s20, %s23
    %p29 = scmp.eq.s32.totalorder %s10, 0
    %p30 = por %p28, %p29
    %p31 = scmp.ne.s32.totalorder %s20, %s23
    %p32 = scmp.eq.s32.totalorder %s15, 1
    %p33 = por %p31, %p32
    %p34 = scmp.ne.s32.totalorder %s23, %s24
    %p35 = scmp.eq.s32.totalorder %s15, 0
    %p36 = por %p34, %p35
    %p37 = scmp.ne.s32.totalorder %s23, %s24
    %p38 = scmp.eq.s32.totalorder %s16, 1
    %p39 = por %p37, %p38
    %p41 = scmp.ne.s32.totalorder %s24, %s40
    %p42 = scmp.eq.s32.totalorder %s16, 0
    %p43 = por %p41, %p42
    %s44 = ssub.s32 %s10, %s17
    %p45 = scmp.eq.s32.totalorder %s44, 0
    %s47 = sadd.s32 %s46, 1
    %s48 = scalar_select %p45, %s46, %s47
    %p51 = pneg %p45
    %p52 = scmp.eq.s32.totalorder %s10, 1
    %p53 = por %p51, %p52
    %p54 = scmp.ne.s32.totalorder %s46, %s49
    %p55 = scmp.eq.s32.totalorder %s10, 0
    %p56 = por %p54, %p55
    %p57 = scmp.ne.s32.totalorder %s46, %s49
    %p58 = scmp.eq.s32.totalorder %s15, 1
    %p59 = por %p57, %p58
    %p60 = scmp.ne.s32.totalorder %s49, %s50
    %p61 = scmp.eq.s32.totalorder %s15, 0
    %p62 = por %p60, %p61
    %p63 = scmp.ne.s32.totalorder %s49, %s50
    %p64 = scmp.eq.s32.totalorder %s16, 1
    %p65 = por %p63, %p64
    %p67 = scmp.ne.s32.totalorder %s50, %s66
    %p68 = scmp.eq.s32.totalorder %s16, 0
    %p69 = por %p67, %p68
    %s71 = sadd.s32 %s70, 1
    %p74 = scmp.eq.s32.totalorder %s10, 1
    %p75 = scmp.ne.s32.totalorder %s70, %s72
    %p76 = scmp.eq.s32.totalorder %s10, 0
    %p77 = por %p75, %p76
    %p78 = scmp.ne.s32.totalorder %s70, %s72
    %p79 = scmp.eq.s32.totalorder %s15, 1
    %p80 = por %p78, %p79
    %p81 = scmp.ne.s32.totalorder %s72, %s73
    %p82 = scmp.eq.s32.totalorder %s15, 0
    %p83 = por %p81, %p82
    %p84 = scmp.ne.s32.totalorder %s72, %s73
    %p85 = scmp.eq.s32.totalorder %s16, 1
    %p86 = por %p84, %p85
    %p88 = scmp.ne.s32.totalorder %s73, %s87
    %p89 = scmp.eq.s32.totalorder %s16, 0
    %p90 = por %p88, %p89
    %s92 = sadd.s32 %s91, 1
    %p95 = scmp.eq.s32.totalorder %s10, 1
    %p96 = scmp.ne.s32.totalorder %s91, %s93
    %p97 = scmp.eq.s32.totalorder %s10, 0
    %p98 = por %p96, %p97
    %p99 = scmp.ne.s32.totalorder %s91, %s93
    %p100 = scmp.eq.s32.totalorder %s15, 1
    %p101 = por %p99, %p100
    %p102 = scmp.ne.s32.totalorder %s93, %s94
    %p103 = scmp.eq.s32.totalorder %s15, 0
    %p104 = por %p102, %p103
    %p105 = scmp.ne.s32.totalorder %s93, %s94
    %p106 = scmp.eq.s32.totalorder %s16, 1
    %p107 = por %p105, %p106
    %p109 = scmp.ne.s32.totalorder %s94, %s108
    %p110 = scmp.eq.s32.totalorder %s16, 0
    %p111 = por %p109, %p110
    %s112 = ssub.s32 %s10, %s17
    %p113 = scmp.eq.s32.totalorder %s112, 0
    %s115 = sadd.s32 %s114, 1
    %s116 = scalar_select %p113, %s114, %s115
    %p119 = pneg %p113
    %p120 = scmp.eq.s32.totalorder %s10, 1
    %p121 = por %p119, %p120
    %p122 = scmp.ne.s32.totalorder %s114, %s117
    %p123 = scmp.eq.s32.totalorder %s10, 0
    %p124 = por %p122, %p123
    %p125 = scmp.ne.s32.totalorder %s114, %s117
    %p126 = scmp.eq.s32.totalorder %s15, 1
    %p127 = por %p125, %p126
    %p128 = scmp.ne.s32.totalorder %s117, %s118
    %p129 = scmp.eq.s32.totalorder %s15, 0
    %p130 = por %p128, %p129
    %p131 = scmp.ne.s32.totalorder %s117, %s118
    %p132 = scmp.eq.s32.totalorder %s16, 1
    %p133 = por %p131, %p132
    %p135 = scmp.ne.s32.totalorder %s118, %s134
    %p136 = scmp.eq.s32.totalorder %s16, 0
    %p137 = por %p135, %p136
    %p138 = scmp.le.s32.totalorder 1, %s10
    %p139 = scmp.lt.s32.totalorder %s10, 3
    %p140 = pnand %p138, %p139
    %p141 = pneg %p140
    // Predicated region
    $region9: #{encoder_forward.1} parent=5 // pred_check
      _
    $region10: #{encoder_forward.1} parent=5 // pred_check_branch
      %143 = sbr.rel (%p140) target = $region12
    $region11: #{encoder_forward.1} parent=5 // pred_region
      %s144 = ssub.s32 %s10, 1
      // Predicated region
      $region13: #{encoder_forward.1} parent=11 // pred_check
        %p145 = pneg %p83
      $region14: #{encoder_forward.1} parent=11 // pred_check_branch
        %147 = sbr.rel (%p145) target = $region16
      $region15: #{encoder_forward.1} parent=11 // pred_region
        _
      $region16: #{encoder_forward.1} parent=11 // pred_fallthru
        _
      // Predicated region
      $region17: #{encoder_forward.1} parent=11 // pred_check
        %p148 = pneg %p104
      $region18: #{encoder_forward.1} parent=11 // pred_check_branch
        %150 = sbr.rel (%p148) target = $region20
      $region19: #{encoder_forward.1} parent=11 // pred_region
        _
      $region20: #{encoder_forward.1} parent=11 // pred_fallthru
        _
    $region12: #{encoder_forward.1} parent=5 // pred_fallthru
      _
    %p151 = scmp.lt.s32.totalorder %s10, 2
    // Predicated region
    $region21: #{encoder_forward.1} parent=5 // pred_check
      %p152 = pneg %p151
    $region22: #{encoder_forward.1} parent=5 // pred_check_branch
      %154 = sbr.rel (%p152) target = $region24
    $region23: #{encoder_forward.1} parent=5 // pred_region
      // Predicated region
      $region25: #{encoder_forward.1} parent=23 // pred_check
        %p155 = pneg %p30
      $region26: #{encoder_forward.1} parent=23 // pred_check_branch
        %157 = sbr.rel (%p155) target = $region28
      $region27: #{encoder_forward.1} parent=23 // pred_region
        %p158 = scmp.lt.s32.totalorder %s10, 1
        %s159 = scalar_select %p158, %s10, 1
        %s160 = smul.addr %s159, 2
        %s161 = smul.addr %s160, 8
        %s162 = scalar_lea.vmem %s0, %s161
      $region28: #{encoder_forward.1} parent=23 // pred_fallthru
        _
      // Predicated region
      $region29: #{encoder_forward.1} parent=23 // pred_check
        %p163 = pneg %p56
      $region30: #{encoder_forward.1} parent=23 // pred_check_branch
        %165 = sbr.rel (%p163) target = $region32
      $region31: #{encoder_forward.1} parent=23 // pred_region
        %p166 = scmp.lt.s32.totalorder %s10, 1
        %s167 = scalar_select %p166, %s10, 1
        %s168 = smul.addr %s167, 2
        %s169 = smul.addr %s168, 8
        %s170 = scalar_lea.vmem %s1, %s169
      $region32: #{encoder_forward.1} parent=23 // pred_fallthru
        _
    $region24: #{encoder_forward.1} parent=5 // pred_fallthru
      _
    %p171 = scmp.le.s32.totalorder 1, %s10
    %p172 = scmp.lt.s32.totalorder %s10, 3
    %p173 = pnand %p171, %p172
    %p174 = pneg %p173
    // Predicated region
    $region33: #{encoder_forward.1} parent=5 // pred_check
      _
    $region34: #{encoder_forward.1} parent=5 // pred_check_branch
      %176 = sbr.rel (%p173) target = $region36
    $region35: #{encoder_forward.1} parent=5 // pred_region
      %s177 = ssub.s32 %s10, 1
      %p178 = scmp.lt.s32.totalorder %s15, 1
      %s179 = scalar_select %p178, %s15, 1
      %s180 = smul.addr %s179, 2
      %s181 = smul.addr %s180, 8
      %s182 = scalar_lea.vmem %s0, %s181
      %p183 = pneg %p36
      %p184 = pneg %p33
      %p185 = scmp.lt.s32.totalorder %s15, 1
      %s186 = scalar_select %p185, %s15, 1
      %s187 = smul.addr %s186, 2
      %s188 = smul.addr %s187, 8
      %s189 = scalar_lea.vmem %s1, %s188
      %p190 = pneg %p62
      %p191 = pneg %p59
      %p192 = pneg %p83
      %p193 = pneg %p80
      %p194 = pneg %p104
      %p195 = pneg %p101
      %p196 = pneg %p130
      %p197 = pneg %p127
      %p198 = scmp.lt.s32.totalorder %s15, 1
      %s199 = scalar_select %p198, %s15, 1
      %s200 = smul.addr %s199, 2
      %s201 = smul.addr %s200, 8
      %s202 = scalar_lea.vmem %s4, %s201
      %p203 = scmp.lt.s32.totalorder %s15, 1
      %s204 = scalar_select %p203, %s15, 1
      %s205 = smul.addr %s204, 2
      %s206 = smul.addr %s205, 8
      %s207 = scalar_lea.vmem %s0, %s206
      %p208 = scmp.lt.s32.totalorder %s15, 1
      %s209 = scalar_select %p208, %s15, 1
      %s210 = smul.addr %s209, 2
      %s211 = smul.addr %s210, 8
      %s212 = scalar_lea.vmem %s1, %s211
      %p213 = scmp.lt.s32.totalorder %s15, 1
      %s214 = scalar_select %p213, %s15, 1
      %s215 = smul.addr %s214, 2
      %s216 = smul.addr %s215, 8
      %s217 = scalar_lea.vmem %s4, %s216
      %v218 = vld [vmem:[%s2] sm:$0xff]
      %v219 = vld [vmem:[%s2 + $0x8] sm:$0xf]
      %v220 = vld [vmem:[%s212] sm:$0xff]
      %v221 = vld [vmem:[%s212 + $0x8] sm:$0xff]
      %vm222 = vcmask 97280
      %v224 = vsel %vm222, %v220, 0
      %v227 = vsel %vm222, %v221, 0
      %vm229 = vcmask 1043456
      %v231 = vsel %vm229, %v219, 0
      %233 = vmatprep.subr.mxu0 0.0
      %234 = vmatpush1.msra.mxu0 %v218
      %235 = vmatprep.subr.mxu0 0.0
      %236 = vmatpush1.msra.mxu0 %v231
      %237 = vmatprep.subr.mxu0 0.0
      %238 = vmatpush1.msra.mxu0 0.0
      %239 = vmatprep.subr.mxu0 0.0
      %240 = vmatpush1.msra.mxu0 0.0
      %241 = vmatprep.subr.mxu0 0.0
      %242 = vmatpush1.msra.mxu0 0.0
      %243 = vmatprep.subr.mxu0 0.0
      %244 = vmatpush1.msra.mxu0 0.0
      %245 = vmatprep.subr.mxu0 0.0
      %246 = vmatpush1.msra.mxu0 0.0
      %247 = vmatprep.subr.mxu0 0.0
      %248 = vmatpush1.msra.mxu0 0.0
      %249 = vmatprep.subr.mxu0 0.0
      %250 = vmatpush1.msra.mxu0 0.0
      %251 = vmatprep.subr.mxu0 0.0
      %252 = vmatpush1.msra.mxu0 0.0
      %253 = vmatprep.subr.mxu0 0.0
      %254 = vmatpush1.msra.mxu0 0.0
      %255 = vmatprep.subr.mxu0 0.0
      %256 = vmatpush1.msra.mxu0 0.0
      %257 = vmatprep.subr.mxu0 0.0
      %258 = vmatpush1.msra.mxu0 0.0
      %259 = vmatprep.subr.mxu0 0.0
      %260 = vmatpush1.msra.mxu0 0.0
      %261 = vmatprep.subr.mxu0 0.0
      %262 = vmatpush1.msra.mxu0 0.0
      %263 = vmatprep.subr.mxu0 0.0
      %264 = vmatpush1.msra.mxu0 0.0
      %265 = vmatprep.subr.mxu0 0.0
      %266 = vmatpush1.msra.mxu0 0.0
      %267 = vmatprep.subr.mxu0 0.0
      %268 = vmatpush1.msra.mxu0 0.0
      %269 = vmatprep.subr.mxu0 0.0
      %270 = vmatpush1.msra.mxu0 0.0
      %271 = vmatprep.subr.mxu0 0.0
      %272 = vmatpush1.msra.mxu0 0.0
      %273 = vmatprep.subr.mxu0 0.0
      %274 = vmatpush1.msra.mxu0 0.0
      %275 = vmatprep.subr.mxu0 0.0
      %276 = vmatpush1.msra.mxu0 0.0
      %277 = vmatprep.subr.mxu0 0.0
      %278 = vmatpush1.msra.mxu0 0.0
      %279 = vmatprep.subr.mxu0 0.0
      %280 = vmatpush1.msra.mxu0 0.0
      %281 = vmatprep.subr.mxu0 0.0
      %282 = vmatpush1.msra.mxu0 0.0
      %283 = vmatprep.subr.mxu0 0.0
      %284 = vmatpush1.msra.mxu0 0.0
      %285 = vmatprep.subr.mxu0 0.0
      %286 = vmatpush1.msra.mxu0 0.0
      %287 = vmatprep.subr.mxu0 0.0
      %288 = vmatpush1.msra.mxu0 0.0
      %289 = vmatprep.subr.mxu0 0.0
      %290 = vmatpush1.msra.mxu0 0.0
      %291 = vmatprep.subr.mxu0 0.0
      %292 = vmatpush1.msra.mxu0 0.0
      %293 = vmatprep.subr.mxu0 0.0
      %294 = vmatpush1.msra.mxu0 0.0
      %295 = vmatprep.subr.mxu0 0.0
      %296 = vmatpush1.msra.mxu0 0.0
      %297 = vmatprep.mubr.f32.mxu0 0.0
      %298 = vmatmul.mubr.f32.gmra.mrb[0].mxu0 %v224
      %v299 = vpop.f32.mrb[0].mxu0
      %v300 = vadd.f32 0.0, %v299
      %v301 = vpop.f32.mrb[0].mxu0
      %302 = vmatprep.mubr.f32.mxu0 0.0
      %303 = vmatmul.mubr.f32.gmra.mrb[0].mxu0 %v227
      %v304 = vpop.f32.mrb[0].mxu0
      %v305 = vadd.f32 0.0, %v304
      %v306 = vpop.f32.mrb[0].mxu0
      %307 = vdwg.mxu0
      %v308 = vld [vmem:[%s207] sm:$0xff]
      %v309 = vld [vmem:[%s207 + $0x8] sm:$0xff]
      %v310 = vadd.f32 %v308, %v300
      %v311 = vadd.f32 %v309, %v305
      %v312 = vld [vmem:[%s3] sm:$0x1]
      %v313 = vlaneseq
      %v314 = vshrl.u32 %v313, 7
      %v315 = vsub.s32 0, %v314
      %v316 = vrot.slane %v312, %v315
      %v317 = vadd.f32 %v310, %v316
      %v318 = vadd.f32 %v311, %v316
      %v319 = vld [vmem:[%s2 + $0x10] sm:$0xff]
      %v320 = vld [vmem:[%s2 + $0x18] sm:$0xff]
      %v321 = vld [vmem:[%s2 + $0x20] sm:$0x3f]
      %vm322 = vcmask 130048
      %v324 = vsel %vm322, %v319, 0
      %v327 = vsel %vm322, %v320, 0
      %v330 = vsel %vm322, %v321, 0
      %332 = vmatprep.subr.mxu0 0.0
      %333 = vmatpush1.msra.mxu0 %v317
      %334 = vmatprep.subr.mxu0 0.0
      %335 = vmatpush1.msra.mxu0 %v318
      %336 = vmatprep.subr.mxu0 0.0
      %337 = vmatpush1.msra.mxu0 0.0
      %338 = vmatprep.subr.mxu0 0.0
      %339 = vmatpush1.msra.mxu0 0.0
      %340 = vmatprep.subr.mxu0 0.0
      %341 = vmatpush1.msra.mxu0 0.0
      %342 = vmatprep.subr.mxu0 0.0
      %343 = vmatpush1.msra.mxu0 0.0
      %344 = vmatprep.subr.mxu0 0.0
      %345 = vmatpush1.msra.mxu0 0.0
      %346 = vmatprep.subr.mxu0 0.0
      %347 = vmatpush1.msra.mxu0 0.0
      %348 = vmatprep.subr.mxu0 0.0
      %349 = vmatpush1.msra.mxu0 0.0
      %350 = vmatprep.subr.mxu0 0.0
      %351 = vmatpush1.msra.mxu0 0.0
      %352 = vmatprep.subr.mxu0 0.0
      %353 = vmatpush1.msra.mxu0 0.0
      %354 = vmatprep.subr.mxu0 0.0
      %355 = vmatpush1.msra.mxu0 0.0
      %356 = vmatprep.subr.mxu0 0.0
      %357 = vmatpush1.msra.mxu0 0.0
      %358 = vmatprep.subr.mxu0 0.0
      %359 = vmatpush1.msra.mxu0 0.0
      %360 = vmatprep.subr.mxu0 0.0
      %361 = vmatpush1.msra.mxu0 0.0
      %362 = vmatprep.subr.mxu0 0.0
      %363 = vmatpush1.msra.mxu0 0.0
      %364 = vmatprep.subr.mxu0 0.0
      %365 = vmatpush1.msra.mxu0 0.0
      %366 = vmatprep.subr.mxu0 0.0
      %367 = vmatpush1.msra.mxu0 0.0
      %368 = vmatprep.subr.mxu0 0.0
      %369 = vmatpush1.msra.mxu0 0.0
      %370 = vmatprep.subr.mxu0 0.0
      %371 = vmatpush1.msra.mxu0 0.0
      %372 = vmatprep.subr.mxu0 0.0
      %373 = vmatpush1.msra.mxu0 0.0
      %374 = vmatprep.subr.mxu0 0.0
      %375 = vmatpush1.msra.mxu0 0.0
      %376 = vmatprep.subr.mxu0 0.0
      %377 = vmatpush1.msra.mxu0 0.0
      %378 = vmatprep.subr.mxu0 0.0
      %379 = vmatpush1.msra.mxu0 0.0
      %380 = vmatprep.subr.mxu0 0.0
      %381 = vmatpush1.msra.mxu0 0.0
      %382 = vmatprep.subr.mxu0 0.0
      %383 = vmatpush1.msra.mxu0 0.0
      %384 = vmatprep.subr.mxu0 0.0
      %385 = vmatpush1.msra.mxu0 0.0
      %386 = vmatprep.subr.mxu0 0.0
      %387 = vmatpush1.msra.mxu0 0.0
      %388 = vmatprep.subr.mxu0 0.0
      %389 = vmatpush1.msra.mxu0 0.0
      %390 = vmatprep.subr.mxu0 0.0
      %391 = vmatpush1.msra.mxu0 0.0
      %392 = vmatprep.subr.mxu0 0.0
      %393 = vmatpush1.msra.mxu0 0.0
      %394 = vmatprep.subr.mxu0 0.0
      %395 = vmatpush1.msra.mxu0 0.0
      %396 = vmatprep.mubr.f32.mxu0 0.0
      %397 = vmatmul.mubr.f32.gmra.mrb[0].mxu0 %v324
      %v398 = vpop.f32.mrb[0].mxu0
      %v399 = vadd.f32 0.0, %v398
      %v400 = vpop.f32.mrb[0].mxu0
      %401 = vmatprep.mubr.f32.mxu0 0.0
      %402 = vmatmul.mubr.f32.gmra.mrb[0].mxu0 %v327
      %v403 = vpop.f32.mrb[0].mxu0
      %v404 = vadd.f32 0.0, %v403
      %v405 = vpop.f32.mrb[0].mxu0
      %406 = vmatprep.mubr.f32.mxu0 0.0
      %407 = vmatmul.mubr.f32.gmra.mrb[0].mxu0 %v330
      %v408 = vpop.f32.mrb[0].mxu0
      %v409 = vadd.f32 0.0, %v408
      %v410 = vpop.f32.mrb[0].mxu0
      %411 = vdwg.mxu0
      %v412 = vld [vmem:[%s2 + $0x70] sm:$0xff]
      %v413 = vld [vmem:[%s2 + $0x78] sm:$0xff]
      %v414 = vld [vmem:[%s2 + $0x80] sm:$0xff]
      %v415 = vld [vmem:[%s2 + $0x88] sm:$0xff]
      %vm419 = vcmask 1046528
      %v420 = vrot.slane %v399, 1
      %v421 = vrot.slane %v404, 1
      %v422 = vsel %vm419, %v420, %v421
      %v423 = vrot.slane %v409, 1
      %v424 = vsel %vm419, %v421, %v423
      %v425 = vsel %vm322, %v422, 0
      %v427 = vsel %vm322, %v424, 0
      %429 = vmatprep.subr.mxu0 0.0
      %430 = vmatpush1.msra.mxu0 %v414
      %431 = vmatprep.subr.mxu0 0.0
      %432 = vmatpush1.msra.mxu0 %v415
      %433 = vmatprep.subr.mxu0 0.0
      %434 = vmatpush1.msra.mxu0 0.0
      %435 = vmatprep.subr.mxu0 0.0
      %436 = vmatpush1.msra.mxu0 0.0
      %437 = vmatprep.subr.mxu0 0.0
      %438 = vmatpush1.msra.mxu0 0.0
      %439 = vmatprep.subr.mxu0 0.0
      %440 = vmatpush1.msra.mxu0 0.0
      %441 = vmatprep.subr.mxu0 0.0
      %442 = vmatpush1.msra.mxu0 0.0
      %443 = vmatprep.subr.mxu0 0.0
      %444 = vmatpush1.msra.mxu0 0.0
      %445 = vmatprep.subr.mxu0 0.0
      %446 = vmatpush1.msra.mxu0 0.0
      %447 = vmatprep.subr.mxu0 0.0
      %448 = vmatpush1.msra.mxu0 0.0
      %449 = vmatprep.subr.mxu0 0.0
      %450 = vmatpush1.msra.mxu0 0.0
      %451 = vmatprep.subr.mxu0 0.0
      %452 = vmatpush1.msra.mxu0 0.0
      %453 = vmatprep.subr.mxu0 0.0
      %454 = vmatpush1.msra.mxu0 0.0
      %455 = vmatprep.subr.mxu0 0.0
      %456 = vmatpush1.msra.mxu0 0.0
      %457 = vmatprep.subr.mxu0 0.0
      %458 = vmatpush1.msra.mxu0 0.0
      %459 = vmatprep.subr.mxu0 0.0
      %460 = vmatpush1.msra.mxu0 0.0
      %461 = vmatprep.subr.mxu0 0.0
      %462 = vmatpush1.msra.mxu0 0.0
      %463 = vmatprep.subr.mxu0 0.0
      %464 = vmatpush1.msra.mxu0 0.0
      %465 = vmatprep.subr.mxu0 0.0
      %466 = vmatpush1.msra.mxu0 0.0
      %467 = vmatprep.subr.mxu0 0.0
      %468 = vmatpush1.msra.mxu0 0.0
      %469 = vmatprep.subr.mxu0 0.0
      %470 = vmatpush1.msra.mxu0 0.0
      %471 = vmatprep.subr.mxu0 0.0
      %472 = vmatpush1.msra.mxu0 0.0
      %473 = vmatprep.subr.mxu0 0.0
      %474 = vmatpush1.msra.mxu0 0.0
      %475 = vmatprep.subr.mxu0 0.0
      %476 = vmatpush1.msra.mxu0 0.0
      %477 = vmatprep.subr.mxu0 0.0
      %478 = vmatpush1.msra.mxu0 0.0
      %479 = vmatprep.subr.mxu0 0.0
      %480 = vmatpush1.msra.mxu0 0.0
      %481 = vmatprep.subr.mxu0 0.0
      %482 = vmatpush1.msra.mxu0 0.0
      %483 = vmatprep.subr.mxu0 0.0
      %484 = vmatpush1.msra.mxu0 0.0
      %485 = vmatprep.subr.mxu0 0.0
      %486 = vmatpush1.msra.mxu0 0.0
      %487 = vmatprep.subr.mxu0 0.0
      %488 = vmatpush1.msra.mxu0 0.0
      %489 = vmatprep.subr.mxu0 0.0
      %490 = vmatpush1.msra.mxu0 0.0
      %491 = vmatprep.subr.mxu0 0.0
      %492 = vmatpush1.msra.mxu0 0.0
      %493 = vmatprep.mubr.f32.mxu0 0.0
      %494 = vmatmul.mubr.f32.gmra.mrb[0].mxu0 %v425
      %v495 = vpop.f32.mrb[0].mxu0
      %v496 = vadd.f32 0.0, %v495
      %v497 = vpop.f32.mrb[0].mxu0
      %498 = vmatprep.mubr.f32.mxu0 0.0
      %499 = vmatmul.mubr.f32.gmra.mrb[0].mxu0 %v427
      %v500 = vpop.f32.mrb[0].mxu0
      %v501 = vadd.f32 0.0, %v500
      %v502 = vpop.f32.mrb[0].mxu0
      %503 = vdwg.mxu0
      %v504 = vsel %vm322, %v399, 0
      %v506 = vsel %vm322, %v404, 0
      %508 = vmatprep.subr.mxu0 0.0
      %509 = vmatpush1.msra.mxu0 %v412
      %510 = vmatprep.subr.mxu0 0.0
      %511 = vmatpush1.msra.mxu0 %v413
      %512 = vmatprep.subr.mxu0 0.0
      %513 = vmatpush1.msra.mxu0 0.0
      %514 = vmatprep.subr.mxu0 0.0
      %515 = vmatpush1.msra.mxu0 0.0
      %516 = vmatprep.subr.mxu0 0.0
      %517 = vmatpush1.msra.mxu0 0.0
      %518 = vmatprep.subr.mxu0 0.0
      %519 = vmatpush1.msra.mxu0 0.0
      %520 = vmatprep.subr.mxu0 0.0
      %521 = vmatpush1.msra.mxu0 0.0
      %522 = vmatprep.subr.mxu0 0.0
      %523 = vmatpush1.msra.mxu0 0.0
      %524 = vmatprep.subr.mxu0 0.0
      %525 = vmatpush1.msra.mxu0 0.0
      %526 = vmatprep.subr.mxu0 0.0
      %527 = vmatpush1.msra.mxu0 0.0
      %528 = vmatprep.subr.mxu0 0.0
      %529 = vmatpush1.msra.mxu0 0.0
      %530 = vmatprep.subr.mxu0 0.0
      %531 = vmatpush1.msra.mxu0 0.0
      %532 = vmatprep.subr.mxu0 0.0
      %533 = vmatpush1.msra.mxu0 0.0
      %534 = vmatprep.subr.mxu0 0.0
      %535 = vmatpush1.msra.mxu0 0.0
      %536 = vmatprep.subr.mxu0 0.0
      %537 = vmatpush1.msra.mxu0 0.0
      %538 = vmatprep.subr.mxu0 0.0
      %539 = vmatpush1.msra.mxu0 0.0
      %540 = vmatprep.subr.mxu0 0.0
      %541 = vmatpush1.msra.mxu0 0.0
      %542 = vmatprep.subr.mxu0 0.0
      %543 = vmatpush1.msra.mxu0 0.0
      %544 = vmatprep.subr.mxu0 0.0
      %545 = vmatpush1.msra.mxu0 0.0
      %546 = vmatprep.subr.mxu0 0.0
      %547 = vmatpush1.msra.mxu0 0.0
      %548 = vmatprep.subr.mxu0 0.0
      %549 = vmatpush1.msra.mxu0 0.0
      %550 = vmatprep.subr.mxu0 0.0
      %551 = vmatpush1.msra.mxu0 0.0
      %552 = vmatprep.subr.mxu0 0.0
      %553 = vmatpush1.msra.mxu0 0.0
      %554 = vmatprep.subr.mxu0 0.0
      %555 = vmatpush1.msra.mxu0 0.0
      %556 = vmatprep.subr.mxu0 0.0
      %557 = vmatpush1.msra.mxu0 0.0
      %558 = vmatprep.subr.mxu0 0.0
      %559 = vmatpush1.msra.mxu0 0.0
      %560 = vmatprep.subr.mxu0 0.0
      %561 = vmatpush1.msra.mxu0 0.0
      %562 = vmatprep.subr.mxu0 0.0
      %563 = vmatpush1.msra.mxu0 0.0
      %564 = vmatprep.subr.mxu0 0.0
      %565 = vmatpush1.msra.mxu0 0.0
      %566 = vmatprep.subr.mxu0 0.0
      %567 = vmatpush1.msra.mxu0 0.0
      %568 = vmatprep.subr.mxu0 0.0
      %569 = vmatpush1.msra.mxu0 0.0
      %570 = vmatprep.subr.mxu0 0.0
      %571 = vmatpush1.msra.mxu0 0.0
      %572 = vmatprep.mubr.f32.mxu0 0.0
      %573 = vmatmul.mubr.f32.gmra.mrb[0].mxu0 %v504
      %v574 = vpop.f32.mrb[0].mxu0
      %v575 = vadd.f32 %v496, %v574
      %v576 = vpop.f32.mrb[0].mxu0
      %577 = vmatprep.mubr.f32.mxu0 0.0
      %578 = vmatmul.mubr.f32.gmra.mrb[0].mxu0 %v506
      %v579 = vpop.f32.mrb[0].mxu0
      %v580 = vadd.f32 %v501, %v579
      %v581 = vpop.f32.mrb[0].mxu0
      %582 = vdwg.mxu0
      %v583 = vld [vmem:[%s2 + $0x90] sm:$0xff]
      %v584 = vld [vmem:[%s2 + $0x98] sm:$0xff]
      %vm585 = vcmask 1045504
      %v586 = vrot.slane %v399, 2
      %v587 = vrot.slane %v404, 2
      %v588 = vsel %vm585, %v586, %v587
      %v589 = vrot.slane %v409, 2
      %v590 = vsel %vm585, %v587, %v589
      %v591 = vsel %vm322, %v588, 0
      %v593 = vsel %vm322, %v590, 0
      %595 = vmatprep.subr.mxu0 0.0
      %596 = vmatpush1.msra.mxu0 %v583
      %597 = vmatprep.subr.mxu0 0.0
      %598 = vmatpush1.msra.mxu0 %v584
      %599 = vmatprep.subr.mxu0 0.0
      %600 = vmatpush1.msra.mxu0 0.0
      %601 = vmatprep.subr.mxu0 0.0
      %602 = vmatpush1.msra.mxu0 0.0
      %603 = vmatprep.subr.mxu0 0.0
      %604 = vmatpush1.msra.mxu0 0.0
      %605 = vmatprep.subr.mxu0 0.0
      %606 = vmatpush1.msra.mxu0 0.0
      %607 = vmatprep.subr.mxu0 0.0
      %608 = vmatpush1.msra.mxu0 0.0
      %609 = vmatprep.subr.mxu0 0.0
      %610 = vmatpush1.msra.mxu0 0.0
      %611 = vmatprep.subr.mxu0 0.0
      %612 = vmatpush1.msra.mxu0 0.0
      %613 = vmatprep.subr.mxu0 0.0
      %614 = vmatpush1.msra.mxu0 0.0
      %615 = vmatprep.subr.mxu0 0.0
      %616 = vmatpush1.msra.mxu0 0.0
      %617 = vmatprep.subr.mxu0 0.0
      %618 = vmatpush1.msra.mxu0 0.0
      %619 = vmatprep.subr.mxu0 0.0
      %620 = vmatpush1.msra.mxu0 0.0
      %621 = vmatprep.subr.mxu0 0.0
      %622 = vmatpush1.msra.mxu0 0.0
      %623 = vmatprep.subr.mxu0 0.0
      %624 = vmatpush1.msra.mxu0 0.0
      %625 = vmatprep.subr.mxu0 0.0
      %626 = vmatpush1.msra.mxu0 0.0
      %627 = vmatprep.subr.mxu0 0.0
      %628 = vmatpush1.msra.mxu0 0.0
      %629 = vmatprep.subr.mxu0 0.0
      %630 = vmatpush1.msra.mxu0 0.0
      %631 = vmatprep.subr.mxu0 0.0
      %632 = vmatpush1.msra.mxu0 0.0
      %633 = vmatprep.subr.mxu0 0.0
      %634 = vmatpush1.msra.mxu0 0.0
      %635 = vmatprep.subr.mxu0 0.0
      %636 = vmatpush1.msra.mxu0 0.0
      %637 = vmatprep.subr.mxu0 0.0
      %638 = vmatpush1.msra.mxu0 0.0
      %639 = vmatprep.subr.mxu0 0.0
      %640 = vmatpush1.msra.mxu0 0.0
      %641 = vmatprep.subr.mxu0 0.0
      %642 = vmatpush1.msra.mxu0 0.0
      %643 = vmatprep.subr.mxu0 0.0
      %644 = vmatpush1.msra.mxu0 0.0
      %645 = vmatprep.subr.mxu0 0.0
      %646 = vmatpush1.msra.mxu0 0.0
      %647 = vmatprep.subr.mxu0 0.0
      %648 = vmatpush1.msra.mxu0 0.0
      %649 = vmatprep.subr.mxu0 0.0
      %650 = vmatpush1.msra.mxu0 0.0
      %651 = vmatprep.subr.mxu0 0.0
      %652 = vmatpush1.msra.mxu0 0.0
      %653 = vmatprep.subr.mxu0 0.0
      %654 = vmatpush1.msra.mxu0 0.0
      %655 = vmatprep.subr.mxu0 0.0
      %656 = vmatpush1.msra.mxu0 0.0
      %657 = vmatprep.subr.mxu0 0.0
      %658 = vmatpush1.msra.mxu0 0.0
      %659 = vmatprep.mubr.f32.mxu0 0.0
      %660 = vmatmul.mubr.f32.gmra.mrb[0].mxu0 %v591
      %v661 = vpop.f32.mrb[0].mxu0
      %v662 = vadd.f32 0.0, %v661
      %v663 = vpop.f32.mrb[0].mxu0
      %664 = vmatprep.mubr.f32.mxu0 0.0
      %665 = vmatmul.mubr.f32.gmra.mrb[0].mxu0 %v593
      %v666 = vpop.f32.mrb[0].mxu0
      %v667 = vadd.f32 0.0, %v666
      %v668 = vpop.f32.mrb[0].mxu0
      %669 = vdwg.mxu0
      %v670 = vadd.f32 %v575, %v662
      %v671 = vadd.f32 %v580, %v667
      %v672 = vld [vmem:[%s2 + $0xa0] sm:$0xff]
      %v673 = vld [vmem:[%s2 + $0xa8] sm:$0xff]
      %vm674 = vcmask 1044480
      %v675 = vrot.slane %v399, 3
      %v676 = vrot.slane %v404, 3
      %v677 = vsel %vm674, %v675, %v676
      %v678 = vrot.slane %v409, 3
      %v679 = vsel %vm674, %v676, %v678
      %v680 = vsel %vm322, %v677, 0
      %v682 = vsel %vm322, %v679, 0
      %684 = vmatprep.subr.mxu0 0.0
      %685 = vmatpush1.msra.mxu0 %v672
      %686 = vmatprep.subr.mxu0 0.0
      %687 = vmatpush1.msra.mxu0 %v673
      %688 = vmatprep.subr.mxu0 0.0
      %689 = vmatpush1.msra.mxu0 0.0
      %690 = vmatprep.subr.mxu0 0.0
      %691 = vmatpush1.msra.mxu0 0.0
      %692 = vmatprep.subr.mxu0 0.0
      %693 = vmatpush1.msra.mxu0 0.0
      %694 = vmatprep.subr.mxu0 0.0
      %695 = vmatpush1.msra.mxu0 0.0
      %696 = vmatprep.subr.mxu0 0.0
      %697 = vmatpush1.msra.mxu0 0.0
      %698 = vmatprep.subr.mxu0 0.0
      %699 = vmatpush1.msra.mxu0 0.0
      %700 = vmatprep.subr.mxu0 0.0
      %701 = vmatpush1.msra.mxu0 0.0
      %702 = vmatprep.subr.mxu0 0.0
      %703 = vmatpush1.msra.mxu0 0.0
      %704 = vmatprep.subr.mxu0 0.0
      %705 = vmatpush1.msra.mxu0 0.0
      %706 = vmatprep.subr.mxu0 0.0
      %707 = vmatpush1.msra.mxu0 0.0
      %708 = vmatprep.subr.mxu0 0.0
      %709 = vmatpush1.msra.mxu0 0.0
      %710 = vmatprep.subr.mxu0 0.0
      %711 = vmatpush1.msra.mxu0 0.0
      %712 = vmatprep.subr.mxu0 0.0
      %713 = vmatpush1.msra.mxu0 0.0
      %714 = vmatprep.subr.mxu0 0.0
      %715 = vmatpush1.msra.mxu0 0.0
      %716 = vmatprep.subr.mxu0 0.0
      %717 = vmatpush1.msra.mxu0 0.0
      %718 = vmatprep.subr.mxu0 0.0
      %719 = vmatpush1.msra.mxu0 0.0
      %720 = vmatprep.subr.mxu0 0.0
      %721 = vmatpush1.msra.mxu0 0.0
      %722 = vmatprep.subr.mxu0 0.0
      %723 = vmatpush1.msra.mxu0 0.0
      %724 = vmatprep.subr.mxu0 0.0
      %725 = vmatpush1.msra.mxu0 0.0
      %726 = vmatprep.subr.mxu0 0.0
      %727 = vmatpush1.msra.mxu0 0.0
      %728 = vmatprep.subr.mxu0 0.0
      %729 = vmatpush1.msra.mxu0 0.0
      %730 = vmatprep.subr.mxu0 0.0
      %731 = vmatpush1.msra.mxu0 0.0
      %732 = vmatprep.subr.mxu0 0.0
      %733 = vmatpush1.msra.mxu0 0.0
      %734 = vmatprep.subr.mxu0 0.0
      %735 = vmatpush1.msra.mxu0 0.0
      %736 = vmatprep.subr.mxu0 0.0
      %737 = vmatpush1.msra.mxu0 0.0
      %738 = vmatprep.subr.mxu0 0.0
      %739 = vmatpush1.msra.mxu0 0.0
      %740 = vmatprep.subr.mxu0 0.0
      %741 = vmatpush1.msra.mxu0 0.0
      %742 = vmatprep.subr.mxu0 0.0
      %743 = vmatpush1.msra.mxu0 0.0
      %744 = vmatprep.subr.mxu0 0.0
      %745 = vmatpush1.msra.mxu0 0.0
      %746 = vmatprep.subr.mxu0 0.0
      %747 = vmatpush1.msra.mxu0 0.0
      %748 = vmatprep.mubr.f32.mxu0 0.0
      %749 = vmatmul.mubr.f32.gmra.mrb[0].mxu0 %v680
      %v750 = vpop.f32.mrb[0].mxu0
      %v751 = vadd.f32 0.0, %v750
      %v752 = vpop.f32.mrb[0].mxu0
      %753 = vmatprep.mubr.f32.mxu0 0.0
      %754 = vmatmul.mubr.f32.gmra.mrb[0].mxu0 %v682
      %v755 = vpop.f32.mrb[0].mxu0
      %v756 = vadd.f32 0.0, %v755
      %v757 = vpop.f32.mrb[0].mxu0
      %758 = vdwg.mxu0
      %v759 = vadd.f32 %v670, %v751
      %v760 = vadd.f32 %v671, %v756
      %v761 = vld [vmem:[%s2 + $0xb0] sm:$0xff]
      %v762 = vld [vmem:[%s2 + $0xb8] sm:$0xff]
      %v763 = vrot.slane %v399, 4
      %v764 = vrot.slane %v404, 4
      %v765 = vsel %vm229, %v763, %v764
      %v766 = vrot.slane %v409, 4
      %v767 = vsel %vm229, %v764, %v766
      %v768 = vsel %vm322, %v765, 0
      %v770 = vsel %vm322, %v767, 0
      %772 = vmatprep.subr.mxu0 0.0
      %773 = vmatpush1.msra.mxu0 %v761
      %774 = vmatprep.subr.mxu0 0.0
      %775 = vmatpush1.msra.mxu0 %v762
      %776 = vmatprep.subr.mxu0 0.0
      %777 = vmatpush1.msra.mxu0 0.0
      %778 = vmatprep.subr.mxu0 0.0
      %779 = vmatpush1.msra.mxu0 0.0
      %780 = vmatprep.subr.mxu0 0.0
      %781 = vmatpush1.msra.mxu0 0.0
      %782 = vmatprep.subr.mxu0 0.0
      %783 = vmatpush1.msra.mxu0 0.0
      %784 = vmatprep.subr.mxu0 0.0
      %785 = vmatpush1.msra.mxu0 0.0
      %786 = vmatprep.subr.mxu0 0.0
      %787 = vmatpush1.msra.mxu0 0.0
      %788 = vmatprep.subr.mxu0 0.0
      %789 = vmatpush1.msra.mxu0 0.0
      %790 = vmatprep.subr.mxu0 0.0
      %791 = vmatpush1.msra.mxu0 0.0
      %792 = vmatprep.subr.mxu0 0.0
      %793 = vmatpush1.msra.mxu0 0.0
      %794 = vmatprep.subr.mxu0 0.0
      %795 = vmatpush1.msra.mxu0 0.0
      %796 = vmatprep.subr.mxu0 0.0
      %797 = vmatpush1.msra.mxu0 0.0
      %798 = vmatprep.subr.mxu0 0.0
      %799 = vmatpush1.msra.mxu0 0.0
      %800 = vmatprep.subr.mxu0 0.0
      %801 = vmatpush1.msra.mxu0 0.0
      %802 = vmatprep.subr.mxu0 0.0
      %803 = vmatpush1.msra.mxu0 0.0
      %804 = vmatprep.subr.mxu0 0.0
      %805 = vmatpush1.msra.mxu0 0.0
      %806 = vmatprep.subr.mxu0 0.0
      %807 = vmatpush1.msra.mxu0 0.0
      %808 = vmatprep.subr.mxu0 0.0
      %809 = vmatpush1.msra.mxu0 0.0
      %810 = vmatprep.subr.mxu0 0.0
      %811 = vmatpush1.msra.mxu0 0.0
      %812 = vmatprep.subr.mxu0 0.0
      %813 = vmatpush1.msra.mxu0 0.0
      %814 = vmatprep.subr.mxu0 0.0
      %815 = vmatpush1.msra.mxu0 0.0
      %816 = vmatprep.subr.mxu0 0.0
      %817 = vmatpush1.msra.mxu0 0.0
      %818 = vmatprep.subr.mxu0 0.0
      %819 = vmatpush1.msra.mxu0 0.0
      %820 = vmatprep.subr.mxu0 0.0
      %821 = vmatpush1.msra.mxu0 0.0
      %822 = vmatprep.subr.mxu0 0.0
      %823 = vmatpush1.msra.mxu0 0.0
      %824 = vmatprep.subr.mxu0 0.0
      %825 = vmatpush1.msra.mxu0 0.0
      %826 = vmatprep.subr.mxu0 0.0
      %827 = vmatpush1.msra.mxu0 0.0
      %828 = vmatprep.subr.mxu0 0.0
      %829 = vmatpush1.msra.mxu0 0.0
      %830 = vmatprep.subr.mxu0 0.0
      %831 = vmatpush1.msra.mxu0 0.0
      %832 = vmatprep.subr.mxu0 0.0
      %833 = vmatpush1.msra.mxu0 0.0
      %834 = vmatprep.subr.mxu0 0.0
      %835 = vmatpush1.msra.mxu0 0.0
      %836 = vmatprep.mubr.f32.mxu0 0.0
      %837 = vmatmul.mubr.f32.gmra.mrb[0].mxu0 %v768
      %v838 = vpop.f32.mrb[0].mxu0
      %v839 = vadd.f32 0.0, %v838
      %v840 = vpop.f32.mrb[0].mxu0
      %841 = vmatprep.mubr.f32.mxu0 0.0
      %842 = vmatmul.mubr.f32.gmra.mrb[0].mxu0 %v770
      %v843 = vpop.f32.mrb[0].mxu0
      %v844 = vadd.f32 0.0, %v843
      %v845 = vpop.f32.mrb[0].mxu0
      %846 = vdwg.mxu0
      %v847 = vadd.f32 %v759, %v839
      %v848 = vadd.f32 %v760, %v844
      %v849 = vld [vmem:[%s2 + $0xc0] sm:$0xff]
      %v850 = vld [vmem:[%s2 + $0xc8] sm:$0xff]
      %vm851 = vcmask 1042432
      %v852 = vrot.slane %v399, 5
      %v853 = vrot.slane %v404, 5
      %v854 = vsel %vm851, %v852, %v853
      %v855 = vrot.slane %v409, 5
      %v856 = vsel %vm851, %v853, %v855
      %v857 = vsel %vm322, %v854, 0
      %v859 = vsel %vm322, %v856, 0
      %861 = vmatprep.subr.mxu0 0.0
      %862 = vmatpush1.msra.mxu0 %v849
      %863 = vmatprep.subr.mxu0 0.0
      %864 = vmatpush1.msra.mxu0 %v850
      %865 = vmatprep.subr.mxu0 0.0
      %866 = vmatpush1.msra.mxu0 0.0
      %867 = vmatprep.subr.mxu0 0.0
      %868 = vmatpush1.msra.mxu0 0.0
      %869 = vmatprep.subr.mxu0 0.0
      %870 = vmatpush1.msra.mxu0 0.0
      %871 = vmatprep.subr.mxu0 0.0
      %872 = vmatpush1.msra.mxu0 0.0
      %873 = vmatprep.subr.mxu0 0.0
      %874 = vmatpush1.msra.mxu0 0.0
      %875 = vmatprep.subr.mxu0 0.0
      %876 = vmatpush1.msra.mxu0 0.0
      %877 = vmatprep.subr.mxu0 0.0
      %878 = vmatpush1.msra.mxu0 0.0
      %879 = vmatprep.subr.mxu0 0.0
      %880 = vmatpush1.msra.mxu0 0.0
      %881 = vmatprep.subr.mxu0 0.0
      %882 = vmatpush1.msra.mxu0 0.0
      %883 = vmatprep.subr.mxu0 0.0
      %884 = vmatpush1.msra.mxu0 0.0
      %885 = vmatprep.subr.mxu0 0.0
      %886 = vmatpush1.msra.mxu0 0.0
      %887 = vmatprep.subr.mxu0 0.0
      %888 = vmatpush1.msra.mxu0 0.0
      %889 = vmatprep.subr.mxu0 0.0
      %890 = vmatpush1.msra.mxu0 0.0
      %891 = vmatprep.subr.mxu0 0.0
      %892 = vmatpush1.msra.mxu0 0.0
      %893 = vmatprep.subr.mxu0 0.0
      %894 = vmatpush1.msra.mxu0 0.0
      %895 = vmatprep.subr.mxu0 0.0
      %896 = vmatpush1.msra.mxu0 0.0
      %897 = vmatprep.subr.mxu0 0.0
      %898 = vmatpush1.msra.mxu0 0.0
      %899 = vmatprep.subr.mxu0 0.0
      %900 = vmatpush1.msra.mxu0 0.0
      %901 = vmatprep.subr.mxu0 0.0
      %902 = vmatpush1.msra.mxu0 0.0
      %903 = vmatprep.subr.mxu0 0.0
      %904 = vmatpush1.msra.mxu0 0.0
      %905 = vmatprep.subr.mxu0 0.0
      %906 = vmatpush1.msra.mxu0 0.0
      %907 = vmatprep.subr.mxu0 0.0
      %908 = vmatpush1.msra.mxu0 0.0
      %909 = vmatprep.subr.mxu0 0.0
      %910 = vmatpush1.msra.mxu0 0.0
      %911 = vmatprep.subr.mxu0 0.0
      %912 = vmatpush1.msra.mxu0 0.0
      %913 = vmatprep.subr.mxu0 0.0
      %914 = vmatpush1.msra.mxu0 0.0
      %915 = vmatprep.subr.mxu0 0.0
      %916 = vmatpush1.msra.mxu0 0.0
      %917 = vmatprep.subr.mxu0 0.0
      %918 = vmatpush1.msra.mxu0 0.0
      %919 = vmatprep.subr.mxu0 0.0
      %920 = vmatpush1.msra.mxu0 0.0
      %921 = vmatprep.subr.mxu0 0.0
      %922 = vmatpush1.msra.mxu0 0.0
      %923 = vmatprep.subr.mxu0 0.0
      %924 = vmatpush1.msra.mxu0 0.0
      %925 = vmatprep.mubr.f32.mxu0 0.0
      %926 = vmatmul.mubr.f32.gmra.mrb[0].mxu0 %v857
      %v927 = vpop.f32.mrb[0].mxu0
      %v928 = vadd.f32 0.0, %v927
      %v929 = vpop.f32.mrb[0].mxu0
      %930 = vmatprep.mubr.f32.mxu0 0.0
      %931 = vmatmul.mubr.f32.gmra.mrb[0].mxu0 %v859
      %v932 = vpop.f32.mrb[0].mxu0
      %v933 = vadd.f32 0.0, %v932
      %v934 = vpop.f32.mrb[0].mxu0
      %935 = vdwg.mxu0
      %v936 = vadd.f32 %v847, %v928
      %v937 = vadd.f32 %v848, %v933
      %v938 = vld [vmem:[%s2 + $0xd0] sm:$0xff]
      %v939 = vld [vmem:[%s2 + $0xd8] sm:$0xff]
      %vm940 = vcmask 1041408
      %v941 = vrot.slane %v399, 6
      %v942 = vrot.slane %v404, 6
      %v943 = vsel %vm940, %v941, %v942
      %v944 = vrot.slane %v409, 6
      %v945 = vsel %vm940, %v942, %v944
      %v946 = vsel %vm322, %v943, 0
      %v948 = vsel %vm322, %v945, 0
      %950 = vmatprep.subr.mxu0 0.0
      %951 = vmatpush1.msra.mxu0 %v938
      %952 = vmatprep.subr.mxu0 0.0
      %953 = vmatpush1.msra.mxu0 %v939
      %954 = vmatprep.subr.mxu0 0.0
      %955 = vmatpush1.msra.mxu0 0.0
      %956 = vmatprep.subr.mxu0 0.0
      %957 = vmatpush1.msra.mxu0 0.0
      %958 = vmatprep.subr.mxu0 0.0
      %959 = vmatpush1.msra.mxu0 0.0
      %960 = vmatprep.subr.mxu0 0.0
      %961 = vmatpush1.msra.mxu0 0.0
      %962 = vmatprep.subr.mxu0 0.0
      %963 = vmatpush1.msra.mxu0 0.0
      %964 = vmatprep.subr.mxu0 0.0
      %965 = vmatpush1.msra.mxu0 0.0
      %966 = vmatprep.subr.mxu0 0.0
      %967 = vmatpush1.msra.mxu0 0.0
      %968 = vmatprep.subr.mxu0 0.0
      %969 = vmatpush1.msra.mxu0 0.0
      %970 = vmatprep.subr.mxu0 0.0
      %971 = vmatpush1.msra.mxu0 0.0
      %972 = vmatprep.subr.mxu0 0.0
      %973 = vmatpush1.msra.mxu0 0.0
      %974 = vmatprep.subr.mxu0 0.0
      %975 = vmatpush1.msra.mxu0 0.0
      %976 = vmatprep.subr.mxu0 0.0
      %977 = vmatpush1.msra.mxu0 0.0
      %978 = vmatprep.subr.mxu0 0.0
      %979 = vmatpush1.msra.mxu0 0.0
      %980 = vmatprep.subr.mxu0 0.0
      %981 = vmatpush1.msra.mxu0 0.0
      %982 = vmatprep.subr.mxu0 0.0
      %983 = vmatpush1.msra.mxu0 0.0
      %984 = vmatprep.subr.mxu0 0.0
      %985 = vmatpush1.msra.mxu0 0.0
      %986 = vmatprep.subr.mxu0 0.0
      %987 = vmatpush1.msra.mxu0 0.0
      %988 = vmatprep.subr.mxu0 0.0
      %989 = vmatpush1.msra.mxu0 0.0
      %990 = vmatprep.subr.mxu0 0.0
      %991 = vmatpush1.msra.mxu0 0.0
      %992 = vmatprep.subr.mxu0 0.0
      %993 = vmatpush1.msra.mxu0 0.0
      %994 = vmatprep.subr.mxu0 0.0
      %995 = vmatpush1.msra.mxu0 0.0
      %996 = vmatprep.subr.mxu0 0.0
      %997 = vmatpush1.msra.mxu0 0.0
      %998 = vmatprep.subr.mxu0 0.0
      %999 = vmatpush1.msra.mxu0 0.0
      %1000 = vmatprep.subr.mxu0 0.0
      %1001 = vmatpush1.msra.mxu0 0.0
      %1002 = vmatprep.subr.mxu0 0.0
      %1003 = vmatpush1.msra.mxu0 0.0
      %1004 = vmatprep.subr.mxu0 0.0
      %1005 = vmatpush1.msra.mxu0 0.0
      %1006 = vmatprep.subr.mxu0 0.0
      %1007 = vmatpush1.msra.mxu0 0.0
      %1008 = vmatprep.subr.mxu0 0.0
      %1009 = vmatpush1.msra.mxu0 0.0
      %1010 = vmatprep.subr.mxu0 0.0
      %1011 = vmatpush1.msra.mxu0 0.0
      %1012 = vmatprep.subr.mxu0 0.0
      %1013 = vmatpush1.msra.mxu0 0.0
      %1014 = vmatprep.mubr.f32.mxu0 0.0
      %1015 = vmatmul.mubr.f32.gmra.mrb[0].mxu0 %v946
      %v1016 = vpop.f32.mrb[0].mxu0
      %v1017 = vadd.f32 0.0, %v1016
      %v1018 = vpop.f32.mrb[0].mxu0
      %1019 = vmatprep.mubr.f32.mxu0 0.0
      %1020 = vmatmul.mubr.f32.gmra.mrb[0].mxu0 %v948
      %v1021 = vpop.f32.mrb[0].mxu0
      %v1022 = vadd.f32 0.0, %v1021
      %v1023 = vpop.f32.mrb[0].mxu0
      %1024 = vdwg.mxu0
      %v1025 = vadd.f32 %v936, %v1017
      %v1026 = vadd.f32 %v937, %v1022
      %v1027 = vld [vmem:[%s3 + $0x1] sm:$0x1]
      %v1028 = vlaneseq
      %v1029 = vshrl.u32 %v1028, 7
      %v1030 = vsub.s32 0, %v1029
      %v1031 = vrot.slane %v1027, %v1030
      %v1032 = vadd.f32 %v1025, %v1031
      %v1033 = vadd.f32 %v1026, %v1031
      %vm1034 = vcmp.gt.f32.partialorder %v1032, 0.0
      %vm1035 = vcmp.gt.f32.partialorder %v1033, 0.0
      %v1036 = vmul.f32 %v1032, 1.442695
      %v1037 = vpow.pop %v1036
      %v1038 = vmul.f32 %v1033, 1.442695
      %v1039 = vpow.pop %v1038
      %v1040 = vsub.f32 %v1037, 1.0
      %v1041 = vsub.f32 %v1039, 1.0
      %v1042 = vsel %vm1034, %v1032, %v1040
      %v1043 = vsel %vm1035, %v1033, %v1041
      %v1044 = vld [vmem:[%s2 + $0x28] sm:$0xff]
      %v1045 = vld [vmem:[%s2 + $0x30] sm:$0xff]
      %v1046 = vld [vmem:[%s2 + $0x38] sm:$0x3]
      %v1048 = vsel %vm322, %v1044, 0
      %v1051 = vsel %vm322, %v1045, 0
      %v1054 = vsel %vm322, %v1046, 0
      %1056 = vmatprep.subr.mxu0 0.0
      %1057 = vmatpush1.msra.mxu0 %v1042
      %1058 = vmatprep.subr.mxu0 0.0
      %1059 = vmatpush1.msra.mxu0 %v1043
      %1060 = vmatprep.subr.mxu0 0.0
      %1061 = vmatpush1.msra.mxu0 0.0
      %1062 = vmatprep.subr.mxu0 0.0
      %1063 = vmatpush1.msra.mxu0 0.0
      %1064 = vmatprep.subr.mxu0 0.0
      %1065 = vmatpush1.msra.mxu0 0.0
      %1066 = vmatprep.subr.mxu0 0.0
      %1067 = vmatpush1.msra.mxu0 0.0
      %1068 = vmatprep.subr.mxu0 0.0
      %1069 = vmatpush1.msra.mxu0 0.0
      %1070 = vmatprep.subr.mxu0 0.0
      %1071 = vmatpush1.msra.mxu0 0.0
      %1072 = vmatprep.subr.mxu0 0.0
      %1073 = vmatpush1.msra.mxu0 0.0
      %1074 = vmatprep.subr.mxu0 0.0
      %1075 = vmatpush1.msra.mxu0 0.0
      %1076 = vmatprep.subr.mxu0 0.0
      %1077 = vmatpush1.msra.mxu0 0.0
      %1078 = vmatprep.subr.mxu0 0.0
      %1079 = vmatpush1.msra.mxu0 0.0
      %1080 = vmatprep.subr.mxu0 0.0
      %1081 = vmatpush1.msra.mxu0 0.0
      %1082 = vmatprep.subr.mxu0 0.0
      %1083 = vmatpush1.msra.mxu0 0.0
      %1084 = vmatprep.subr.mxu0 0.0
      %1085 = vmatpush1.msra.mxu0 0.0
      %1086 = vmatprep.subr.mxu0 0.0
      %1087 = vmatpush1.msra.mxu0 0.0
      %1088 = vmatprep.subr.mxu0 0.0
      %1089 = vmatpush1.msra.mxu0 0.0
      %1090 = vmatprep.subr.mxu0 0.0
      %1091 = vmatpush1.msra.mxu0 0.0
      %1092 = vmatprep.subr.mxu0 0.0
      %1093 = vmatpush1.msra.mxu0 0.0
      %1094 = vmatprep.subr.mxu0 0.0
      %1095 = vmatpush1.msra.mxu0 0.0
      %1096 = vmatprep.subr.mxu0 0.0
      %1097 = vmatpush1.msra.mxu0 0.0
      %1098 = vmatprep.subr.mxu0 0.0
      %1099 = vmatpush1.msra.mxu0 0.0
      %1100 = vmatprep.subr.mxu0 0.0
      %1101 = vmatpush1.msra.mxu0 0.0
      %1102 = vmatprep.subr.mxu0 0.0
      %1103 = vmatpush1.msra.mxu0 0.0
      %1104 = vmatprep.subr.mxu0 0.0
      %1105 = vmatpush1.msra.mxu0 0.0
      %1106 = vmatprep.subr.mxu0 0.0
      %1107 = vmatpush1.msra.mxu0 0.0
      %1108 = vmatprep.subr.mxu0 0.0
      %1109 = vmatpush1.msra.mxu0 0.0
      %1110 = vmatprep.subr.mxu0 0.0
      %1111 = vmatpush1.msra.mxu0 0.0
      %1112 = vmatprep.subr.mxu0 0.0
      %1113 = vmatpush1.msra.mxu0 0.0
      %1114 = vmatprep.subr.mxu0 0.0
      %1115 = vmatpush1.msra.mxu0 0.0
      %1116 = vmatprep.subr.mxu0 0.0
      %1117 = vmatpush1.msra.mxu0 0.0
      %1118 = vmatprep.subr.mxu0 0.0
      %1119 = vmatpush1.msra.mxu0 0.0
      %1120 = vmatprep.mubr.f32.mxu0 0.0
      %1121 = vmatmul.mubr.f32.gmra.mrb[0].mxu0 %v1048
      %v1122 = vpop.f32.mrb[0].mxu0
      %v1123 = vadd.f32 0.0, %v1122
      %v1124 = vpop.f32.mrb[0].mxu0
      %1125 = vmatprep.mubr.f32.mxu0 0.0
      %1126 = vmatmul.mubr.f32.gmra.mrb[0].mxu0 %v1051
      %v1127 = vpop.f32.mrb[0].mxu0
      %v1128 = vadd.f32 0.0, %v1127
      %v1129 = vpop.f32.mrb[0].mxu0
      %1130 = vmatprep.mubr.f32.mxu0 0.0
      %1131 = vmatmul.mubr.f32.gmra.mrb[0].mxu0 %v1054
      %v1132 = vpop.f32.mrb[0].mxu0
      %v1133 = vadd.f32 0.0, %v1132
      %v1134 = vpop.f32.mrb[0].mxu0
      %1135 = vdwg.mxu0
      %v1136 = vld [vmem:[%s2 + $0xe0] sm:$0xff]
      %v1137 = vld [vmem:[%s2 + $0xe8] sm:$0xff]
      %v1141 = vrot.slane %v1123, 1
      %v1142 = vrot.slane %v1128, 1
      %v1143 = vsel %vm419, %v1141, %v1142
      %v1144 = vrot.slane %v1133, 1
      %v1145 = vsel %vm419, %v1142, %v1144
      %vm1146 = vcmask 64512
      %v1147 = vsel %vm1146, %v1143, 0
      %v1149 = vsel %vm1146, %v1145, 0
      %1151 = vmatprep.subr.mxu0 0.0
      %1152 = vmatpush1.msra.mxu0 %v1137
      %1153 = vmatprep.subr.mxu0 0.0
      %1154 = vmatpush1.msra.mxu0 0.0
      %1155 = vmatprep.subr.mxu0 0.0
      %1156 = vmatpush1.msra.mxu0 0.0
      %1157 = vmatprep.subr.mxu0 0.0
      %1158 = vmatpush1.msra.mxu0 0.0
      %1159 = vmatprep.subr.mxu0 0.0
      %1160 = vmatpush1.msra.mxu0 0.0
      %1161 = vmatprep.subr.mxu0 0.0
      %1162 = vmatpush1.msra.mxu0 0.0
      %1163 = vmatprep.subr.mxu0 0.0
      %1164 = vmatpush1.msra.mxu0 0.0
      %1165 = vmatprep.subr.mxu0 0.0
      %1166 = vmatpush1.msra.mxu0 0.0
      %1167 = vmatprep.subr.mxu0 0.0
      %1168 = vmatpush1.msra.mxu0 0.0
      %1169 = vmatprep.subr.mxu0 0.0
      %1170 = vmatpush1.msra.mxu0 0.0
      %1171 = vmatprep.subr.mxu0 0.0
      %1172 = vmatpush1.msra.mxu0 0.0
      %1173 = vmatprep.subr.mxu0 0.0
      %1174 = vmatpush1.msra.mxu0 0.0
      %1175 = vmatprep.subr.mxu0 0.0
      %1176 = vmatpush1.msra.mxu0 0.0
      %1177 = vmatprep.subr.mxu0 0.0
      %1178 = vmatpush1.msra.mxu0 0.0
      %1179 = vmatprep.subr.mxu0 0.0
      %1180 = vmatpush1.msra.mxu0 0.0
      %1181 = vmatprep.subr.mxu0 0.0
      %1182 = vmatpush1.msra.mxu0 0.0
      %1183 = vmatprep.subr.mxu0 0.0
      %1184 = vmatpush1.msra.mxu0 0.0
      %1185 = vmatprep.subr.mxu0 0.0
      %1186 = vmatpush1.msra.mxu0 0.0
      %1187 = vmatprep.subr.mxu0 0.0
      %1188 = vmatpush1.msra.mxu0 0.0
      %1189 = vmatprep.subr.mxu0 0.0
      %1190 = vmatpush1.msra.mxu0 0.0
      %1191 = vmatprep.subr.mxu0 0.0
      %1192 = vmatpush1.msra.mxu0 0.0
      %1193 = vmatprep.subr.mxu0 0.0
      %1194 = vmatpush1.msra.mxu0 0.0
      %1195 = vmatprep.subr.mxu0 0.0
      %1196 = vmatpush1.msra.mxu0 0.0
      %1197 = vmatprep.subr.mxu0 0.0
      %1198 = vmatpush1.msra.mxu0 0.0
      %1199 = vmatprep.subr.mxu0 0.0
      %1200 = vmatpush1.msra.mxu0 0.0
      %1201 = vmatprep.subr.mxu0 0.0
      %1202 = vmatpush1.msra.mxu0 0.0
      %1203 = vmatprep.subr.mxu0 0.0
      %1204 = vmatpush1.msra.mxu0 0.0
      %1205 = vmatprep.subr.mxu0 0.0
      %1206 = vmatpush1.msra.mxu0 0.0
      %1207 = vmatprep.subr.mxu0 0.0
      %1208 = vmatpush1.msra.mxu0 0.0
      %1209 = vmatprep.subr.mxu0 0.0
      %1210 = vmatpush1.msra.mxu0 0.0
      %1211 = vmatprep.subr.mxu0 0.0
      %1212 = vmatpush1.msra.mxu0 0.0
      %1213 = vmatprep.subr.mxu0 0.0
      %1214 = vmatpush1.msra.mxu0 0.0
      %1215 = vmatprep.mubr.f32.mxu0 0.0
      %1216 = vmatmul.mubr.f32.gmra.mrb[0].mxu0 %v1147
      %v1217 = vpop.f32.mrb[0].mxu0
      %v1218 = vadd.f32 0.0, %v1217
      %v1219 = vpop.f32.mrb[0].mxu0
      %1220 = vmatprep.mubr.f32.mxu0 0.0
      %1221 = vmatmul.mubr.f32.gmra.mrb[0].mxu0 %v1149
      %v1222 = vpop.f32.mrb[0].mxu0
      %v1223 = vadd.f32 0.0, %v1222
      %v1224 = vpop.f32.mrb[0].mxu0
      %1225 = vdwg.mxu0
      %v1226 = vsel %vm1146, %v1123, 0
      %v1228 = vsel %vm1146, %v1128, 0
      %1230 = vmatprep.subr.mxu0 0.0
      %1231 = vmatpush1.msra.mxu0 %v1136
      %1232 = vmatprep.subr.mxu0 0.0
      %1233 = vmatpush1.msra.mxu0 0.0
      %1234 = vmatprep.subr.mxu0 0.0
      %1235 = vmatpush1.msra.mxu0 0.0
      %1236 = vmatprep.subr.mxu0 0.0
      %1237 = vmatpush1.msra.mxu0 0.0
      %1238 = vmatprep.subr.mxu0 0.0
      %1239 = vmatpush1.msra.mxu0 0.0
      %1240 = vmatprep.subr.mxu0 0.0
      %1241 = vmatpush1.msra.mxu0 0.0
      %1242 = vmatprep.subr.mxu0 0.0
      %1243 = vmatpush1.msra.mxu0 0.0
      %1244 = vmatprep.subr.mxu0 0.0
      %1245 = vmatpush1.msra.mxu0 0.0
      %1246 = vmatprep.subr.mxu0 0.0
      %1247 = vmatpush1.msra.mxu0 0.0
      %1248 = vmatprep.subr.mxu0 0.0
      %1249 = vmatpush1.msra.mxu0 0.0
      %1250 = vmatprep.subr.mxu0 0.0
      %1251 = vmatpush1.msra.mxu0 0.0
      %1252 = vmatprep.subr.mxu0 0.0
      %1253 = vmatpush1.msra.mxu0 0.0
      %1254 = vmatprep.subr.mxu0 0.0
      %1255 = vmatpush1.msra.mxu0 0.0
      %1256 = vmatprep.subr.mxu0 0.0
      %1257 = vmatpush1.msra.mxu0 0.0
      %1258 = vmatprep.subr.mxu0 0.0
      %1259 = vmatpush1.msra.mxu0 0.0
      %1260 = vmatprep.subr.mxu0 0.0
      %1261 = vmatpush1.msra.mxu0 0.0
      %1262 = vmatprep.subr.mxu0 0.0
      %1263 = vmatpush1.msra.mxu0 0.0
      %1264 = vmatprep.subr.mxu0 0.0
      %1265 = vmatpush1.msra.mxu0 0.0
      %1266 = vmatprep.subr.mxu0 0.0
      %1267 = vmatpush1.msra.mxu0 0.0
      %1268 = vmatprep.subr.mxu0 0.0
      %1269 = vmatpush1.msra.mxu0 0.0
      %1270 = vmatprep.subr.mxu0 0.0
      %1271 = vmatpush1.msra.mxu0 0.0
      %1272 = vmatprep.subr.mxu0 0.0
      %1273 = vmatpush1.msra.mxu0 0.0
      %1274 = vmatprep.subr.mxu0 0.0
      %1275 = vmatpush1.msra.mxu0 0.0
      %1276 = vmatprep.subr.mxu0 0.0
      %1277 = vmatpush1.msra.mxu0 0.0
      %1278 = vmatprep.subr.mxu0 0.0
      %1279 = vmatpush1.msra.mxu0 0.0
      %1280 = vmatprep.subr.mxu0 0.0
      %1281 = vmatpush1.msra.mxu0 0.0
      %1282 = vmatprep.subr.mxu0 0.0
      %1283 = vmatpush1.msra.mxu0 0.0
      %1284 = vmatprep.subr.mxu0 0.0
      %1285 = vmatpush1.msra.mxu0 0.0
      %1286 = vmatprep.subr.mxu0 0.0
      %1287 = vmatpush1.msra.mxu0 0.0
      %1288 = vmatprep.subr.mxu0 0.0
      %1289 = vmatpush1.msra.mxu0 0.0
      %1290 = vmatprep.subr.mxu0 0.0
      %1291 = vmatpush1.msra.mxu0 0.0
      %1292 = vmatprep.subr.mxu0 0.0
      %1293 = vmatpush1.msra.mxu0 0.0
      %1294 = vmatprep.mubr.f32.mxu0 0.0
      %1295 = vmatmul.mubr.f32.gmra.mrb[0].mxu0 %v1226
      %v1296 = vpop.f32.mrb[0].mxu0
      %v1297 = vadd.f32 %v1218, %v1296
      %v1298 = vpop.f32.mrb[0].mxu0
      %1299 = vmatprep.mubr.f32.mxu0 0.0
      %1300 = vmatmul.mubr.f32.gmra.mrb[0].mxu0 %v1228
      %v1301 = vpop.f32.mrb[0].mxu0
      %v1302 = vadd.f32 %v1223, %v1301
      %v1303 = vpop.f32.mrb[0].mxu0
      %1304 = vdwg.mxu0
      %v1305 = vld [vmem:[%s2 + $0xf0] sm:$0xff]
      %v1306 = vrot.slane %v1123, 2
      %v1307 = vrot.slane %v1128, 2
      %v1308 = vsel %vm585, %v1306, %v1307
      %v1309 = vrot.slane %v1133, 2
      %v1310 = vsel %vm585, %v1307, %v1309
      %v1311 = vsel %vm1146, %v1308, 0
      %v1313 = vsel %vm1146, %v1310, 0
      %1315 = vmatprep.subr.mxu0 0.0
      %1316 = vmatpush1.msra.mxu0 %v1305
      %1317 = vmatprep.subr.mxu0 0.0
      %1318 = vmatpush1.msra.mxu0 0.0
      %1319 = vmatprep.subr.mxu0 0.0
      %1320 = vmatpush1.msra.mxu0 0.0
      %1321 = vmatprep.subr.mxu0 0.0
      %1322 = vmatpush1.msra.mxu0 0.0
      %1323 = vmatprep.subr.mxu0 0.0
      %1324 = vmatpush1.msra.mxu0 0.0
      %1325 = vmatprep.subr.mxu0 0.0
      %1326 = vmatpush1.msra.mxu0 0.0
      %1327 = vmatprep.subr.mxu0 0.0
      %1328 = vmatpush1.msra.mxu0 0.0
      %1329 = vmatprep.subr.mxu0 0.0
      %1330 = vmatpush1.msra.mxu0 0.0
      %1331 = vmatprep.subr.mxu0 0.0
      %1332 = vmatpush1.msra.mxu0 0.0
      %1333 = vmatprep.subr.mxu0 0.0
      %1334 = vmatpush1.msra.mxu0 0.0
      %1335 = vmatprep.subr.mxu0 0.0
      %1336 = vmatpush1.msra.mxu0 0.0
      %1337 = vmatprep.subr.mxu0 0.0
      %1338 = vmatpush1.msra.mxu0 0.0
      %1339 = vmatprep.subr.mxu0 0.0
      %1340 = vmatpush1.msra.mxu0 0.0
      %1341 = vmatprep.subr.mxu0 0.0
      %1342 = vmatpush1.msra.mxu0 0.0
      %1343 = vmatprep.subr.mxu0 0.0
      %1344 = vmatpush1.msra.mxu0 0.0
      %1345 = vmatprep.subr.mxu0 0.0
      %1346 = vmatpush1.msra.mxu0 0.0
      %1347 = vmatprep.subr.mxu0 0.0
      %1348 = vmatpush1.msra.mxu0 0.0
      %1349 = vmatprep.subr.mxu0 0.0
      %1350 = vmatpush1.msra.mxu0 0.0
      %1351 = vmatprep.subr.mxu0 0.0
      %1352 = vmatpush1.msra.mxu0 0.0
      %1353 = vmatprep.subr.mxu0 0.0
      %1354 = vmatpush1.msra.mxu0 0.0
      %1355 = vmatprep.subr.mxu0 0.0
      %1356 = vmatpush1.msra.mxu0 0.0
      %1357 = vmatprep.subr.mxu0 0.0
      %1358 = vmatpush1.msra.mxu0 0.0
      %1359 = vmatprep.subr.mxu0 0.0
      %1360 = vmatpush1.msra.mxu0 0.0
      %1361 = vmatprep.subr.mxu0 0.0
      %1362 = vmatpush1.msra.mxu0 0.0
      %1363 = vmatprep.subr.mxu0 0.0
      %1364 = vmatpush1.msra.mxu0 0.0
      %1365 = vmatprep.subr.mxu0 0.0
      %1366 = vmatpush1.msra.mxu0 0.0
      %1367 = vmatprep.subr.mxu0 0.0
      %1368 = vmatpush1.msra.mxu0 0.0
      %1369 = vmatprep.subr.mxu0 0.0
      %1370 = vmatpush1.msra.mxu0 0.0
      %1371 = vmatprep.subr.mxu0 0.0
      %1372 = vmatpush1.msra.mxu0 0.0
      %1373 = vmatprep.subr.mxu0 0.0
      %1374 = vmatpush1.msra.mxu0 0.0
      %1375 = vmatprep.subr.mxu0 0.0
      %1376 = vmatpush1.msra.mxu0 0.0
      %1377 = vmatprep.subr.mxu0 0.0
      %1378 = vmatpush1.msra.mxu0 0.0
      %1379 = vmatprep.mubr.f32.mxu0 0.0
      %1380 = vmatmul.mubr.f32.gmra.mrb[0].mxu0 %v1311
      %v1381 = vpop.f32.mrb[0].mxu0
      %v1382 = vadd.f32 0.0, %v1381
      %v1383 = vpop.f32.mrb[0].mxu0
      %1384 = vmatprep.mubr.f32.mxu0 0.0
      %1385 = vmatmul.mubr.f32.gmra.mrb[0].mxu0 %v1313
      %v1386 = vpop.f32.mrb[0].mxu0
      %v1387 = vadd.f32 0.0, %v1386
      %v1388 = vpop.f32.mrb[0].mxu0
      %1389 = vdwg.mxu0
      %v1390 = vadd.f32 %v1297, %v1382
      %v1391 = vadd.f32 %v1302, %v1387
      %v1392 = vld [vmem:[%s3 + $0x2] sm:$0x1]
      %v1393 = vlaneseq
      %v1394 = vshrl.u32 %v1393, 7
      %v1395 = vsub.s32 0, %v1394
      %v1396 = vrot.slane %v1392, %v1395
      %v1397 = vadd.f32 %v1390, %v1396
      %v1398 = vadd.f32 %v1391, %v1396
      %vm1399 = vcmp.gt.f32.partialorder %v1397, 0.0
      %vm1400 = vcmp.gt.f32.partialorder %v1398, 0.0
      %v1401 = vmul.f32 %v1397, 1.442695
      %v1402 = vpow.pop %v1401
      %v1403 = vmul.f32 %v1398, 1.442695
      %v1404 = vpow.pop %v1403
      %v1405 = vsub.f32 %v1402, 1.0
      %v1406 = vsub.f32 %v1404, 1.0
      %v1407 = vsel %vm1399, %v1397, %v1405
      %v1408 = vsel %vm1400, %v1398, %v1406
      %v1409 = vld [vmem:[%s2 + $0xf8] sm:$0xf]
      %v1410 = vld [vmem:[%s3 + $0x3] sm:$0x1]
      %v1411 = vlaneseq
      %v1412 = vshrl.u32 %v1411, 7
      %v1413 = vsub.s32 0, %v1412
      %v1414 = vrot.slane %v1410, %v1413
      %vm1415 = vcmask 31744
      %v1417 = vsel %vm1415, %v1407, 0
      %v1420 = vsel %vm1415, %v1408, 0
      %v1423 = vsel %vm229, %v1409, 0
      %1425 = vmatprep.subr.mxu0 0.0
      %1426 = vmatpush1.msra.mxu0 %v1423
      %1427 = vmatprep.subr.mxu0 0.0
      %1428 = vmatpush1.msra.mxu0 0.0
      %1429 = vmatprep.subr.mxu0 0.0
      %1430 = vmatpush1.msra.mxu0 0.0
      %1431 = vmatprep.subr.mxu0 0.0
      %1432 = vmatpush1.msra.mxu0 0.0
      %1433 = vmatprep.subr.mxu0 0.0
      %1434 = vmatpush1.msra.mxu0 0.0
      %1435 = vmatprep.subr.mxu0 0.0
      %1436 = vmatpush1.msra.mxu0 0.0
      %1437 = vmatprep.subr.mxu0 0.0
      %1438 = vmatpush1.msra.mxu0 0.0
      %1439 = vmatprep.subr.mxu0 0.0
      %1440 = vmatpush1.msra.mxu0 0.0
      %1441 = vmatprep.subr.mxu0 0.0
      %1442 = vmatpush1.msra.mxu0 0.0
      %1443 = vmatprep.subr.mxu0 0.0
      %1444 = vmatpush1.msra.mxu0 0.0
      %1445 = vmatprep.subr.mxu0 0.0
      %1446 = vmatpush1.msra.mxu0 0.0
      %1447 = vmatprep.subr.mxu0 0.0
      %1448 = vmatpush1.msra.mxu0 0.0
      %1449 = vmatprep.subr.mxu0 0.0
      %1450 = vmatpush1.msra.mxu0 0.0
      %1451 = vmatprep.subr.mxu0 0.0
      %1452 = vmatpush1.msra.mxu0 0.0
      %1453 = vmatprep.subr.mxu0 0.0
      %1454 = vmatpush1.msra.mxu0 0.0
      %1455 = vmatprep.subr.mxu0 0.0
      %1456 = vmatpush1.msra.mxu0 0.0
      %1457 = vmatprep.subr.mxu0 0.0
      %1458 = vmatpush1.msra.mxu0 0.0
      %1459 = vmatprep.subr.mxu0 0.0
      %1460 = vmatpush1.msra.mxu0 0.0
      %1461 = vmatprep.subr.mxu0 0.0
      %1462 = vmatpush1.msra.mxu0 0.0
      %1463 = vmatprep.subr.mxu0 0.0
      %1464 = vmatpush1.msra.mxu0 0.0
      %1465 = vmatprep.subr.mxu0 0.0
      %1466 = vmatpush1.msra.mxu0 0.0
      %1467 = vmatprep.subr.mxu0 0.0
      %1468 = vmatpush1.msra.mxu0 0.0
      %1469 = vmatprep.subr.mxu0 0.0
      %1470 = vmatpush1.msra.mxu0 0.0
      %1471 = vmatprep.subr.mxu0 0.0
      %1472 = vmatpush1.msra.mxu0 0.0
      %1473 = vmatprep.subr.mxu0 0.0
      %1474 = vmatpush1.msra.mxu0 0.0
      %1475 = vmatprep.subr.mxu0 0.0
      %1476 = vmatpush1.msra.mxu0 0.0
      %1477 = vmatprep.subr.mxu0 0.0
      %1478 = vmatpush1.msra.mxu0 0.0
      %1479 = vmatprep.subr.mxu0 0.0
      %1480 = vmatpush1.msra.mxu0 0.0
      %1481 = vmatprep.subr.mxu0 0.0
      %1482 = vmatpush1.msra.mxu0 0.0
      %1483 = vmatprep.subr.mxu0 0.0
      %1484 = vmatpush1.msra.mxu0 0.0
      %1485 = vmatprep.subr.mxu0 0.0
      %1486 = vmatpush1.msra.mxu0 0.0
      %1487 = vmatprep.subr.mxu0 0.0
      %1488 = vmatpush1.msra.mxu0 0.0
      %1489 = vmatprep.mubr.f32.mxu0 0.0
      %1490 = vmatmul.mubr.f32.gmra.mrb[0].mxu0 %v1417
      %v1491 = vpop.f32.mrb[0].mxu0
      %v1492 = vadd.f32 %v1414, %v1491
      %v1493 = vpop.f32.mrb[0].mxu0
      %1494 = vmatprep.mubr.f32.mxu0 0.0
      %1495 = vmatmul.mubr.f32.gmra.mrb[0].mxu0 %v1420
      %v1496 = vpop.f32.mrb[0].mxu0
      %v1497 = vadd.f32 %v1414, %v1496
      %v1498 = vpop.f32.mrb[0].mxu0
      %1499 = vdwg.mxu0
      %v1500 = vadd.f32 %v1492, %v1032
      %v1501 = vadd.f32 %v1497, %v1033
      %vm1502 = vcmp.gt.f32.partialorder %v1500, 0.0
      %vm1503 = vcmp.gt.f32.partialorder %v1501, 0.0
      %v1504 = vmul.f32 %v1500, 1.442695
      %v1505 = vpow.pop %v1504
      %v1506 = vmul.f32 %v1501, 1.442695
      %v1507 = vpow.pop %v1506
      %v1508 = vsub.f32 %v1505, 1.0
      %v1509 = vsub.f32 %v1507, 1.0
      %v1510 = vsel %vm1502, %v1500, %v1508
      %v1511 = vsel %vm1503, %v1501, %v1509
      %v1512 = vld [vmem:[%s2 + $0x40] sm:$0xff]
      %v1513 = vld [vmem:[%s2 + $0x48] sm:$0xff]
      %v1514 = vld [vmem:[%s2 + $0x50] sm:$0xf]
      %v1516 = vsel %vm322, %v1512, 0
      %v1519 = vsel %vm322, %v1513, 0
      %v1522 = vsel %vm322, %v1514, 0
      %1524 = vmatprep.subr.mxu0 0.0
      %1525 = vmatpush1.msra.mxu0 %v1510
      %1526 = vmatprep.subr.mxu0 0.0
      %1527 = vmatpush1.msra.mxu0 %v1511
      %1528 = vmatprep.subr.mxu0 0.0
      %1529 = vmatpush1.msra.mxu0 0.0
      %1530 = vmatprep.subr.mxu0 0.0
      %1531 = vmatpush1.msra.mxu0 0.0
      %1532 = vmatprep.subr.mxu0 0.0
      %1533 = vmatpush1.msra.mxu0 0.0
      %1534 = vmatprep.subr.mxu0 0.0
      %1535 = vmatpush1.msra.mxu0 0.0
      %1536 = vmatprep.subr.mxu0 0.0
      %1537 = vmatpush1.msra.mxu0 0.0
      %1538 = vmatprep.subr.mxu0 0.0
      %1539 = vmatpush1.msra.mxu0 0.0
      %1540 = vmatprep.subr.mxu0 0.0
      %1541 = vmatpush1.msra.mxu0 0.0
      %1542 = vmatprep.subr.mxu0 0.0
      %1543 = vmatpush1.msra.mxu0 0.0
      %1544 = vmatprep.subr.mxu0 0.0
      %1545 = vmatpush1.msra.mxu0 0.0
      %1546 = vmatprep.subr.mxu0 0.0
      %1547 = vmatpush1.msra.mxu0 0.0
      %1548 = vmatprep.subr.mxu0 0.0
      %1549 = vmatpush1.msra.mxu0 0.0
      %1550 = vmatprep.subr.mxu0 0.0
      %1551 = vmatpush1.msra.mxu0 0.0
      %1552 = vmatprep.subr.mxu0 0.0
      %1553 = vmatpush1.msra.mxu0 0.0
      %1554 = vmatprep.subr.mxu0 0.0
      %1555 = vmatpush1.msra.mxu0 0.0
      %1556 = vmatprep.subr.mxu0 0.0
      %1557 = vmatpush1.msra.mxu0 0.0
      %1558 = vmatprep.subr.mxu0 0.0
      %1559 = vmatpush1.msra.mxu0 0.0
      %1560 = vmatprep.subr.mxu0 0.0
      %1561 = vmatpush1.msra.mxu0 0.0
      %1562 = vmatprep.subr.mxu0 0.0
      %1563 = vmatpush1.msra.mxu0 0.0
      %1564 = vmatprep.subr.mxu0 0.0
      %1565 = vmatpush1.msra.mxu0 0.0
      %1566 = vmatprep.subr.mxu0 0.0
      %1567 = vmatpush1.msra.mxu0 0.0
      %1568 = vmatprep.subr.mxu0 0.0
      %1569 = vmatpush1.msra.mxu0 0.0
      %1570 = vmatprep.subr.mxu0 0.0
      %1571 = vmatpush1.msra.mxu0 0.0
      %1572 = vmatprep.subr.mxu0 0.0
      %1573 = vmatpush1.msra.mxu0 0.0
      %1574 = vmatprep.subr.mxu0 0.0
      %1575 = vmatpush1.msra.mxu0 0.0
      %1576 = vmatprep.subr.mxu0 0.0
      %1577 = vmatpush1.msra.mxu0 0.0
      %1578 = vmatprep.subr.mxu0 0.0
      %1579 = vmatpush1.msra.mxu0 0.0
      %1580 = vmatprep.subr.mxu0 0.0
      %1581 = vmatpush1.msra.mxu0 0.0
      %1582 = vmatprep.subr.mxu0 0.0
      %1583 = vmatpush1.msra.mxu0 0.0
      %1584 = vmatprep.subr.mxu0 0.0
      %1585 = vmatpush1.msra.mxu0 0.0
      %1586 = vmatprep.subr.mxu0 0.0
      %1587 = vmatpush1.msra.mxu0 0.0
      %1588 = vmatprep.mubr.f32.mxu0 0.0
      %1589 = vmatmul.mubr.f32.gmra.mrb[0].mxu0 %v1516
      %v1590 = vpop.f32.mrb[0].mxu0
      %v1591 = vadd.f32 0.0, %v1590
      %v1592 = vpop.f32.mrb[0].mxu0
      %1593 = vmatprep.mubr.f32.mxu0 0.0
      %1594 = vmatmul.mubr.f32.gmra.mrb[0].mxu0 %v1519
      %v1595 = vpop.f32.mrb[0].mxu0
      %v1596 = vadd.f32 0.0, %v1595
      %v1597 = vpop.f32.mrb[0].mxu0
      %1598 = vmatprep.mubr.f32.mxu0 0.0
      %1599 = vmatmul.mubr.f32.gmra.mrb[0].mxu0 %v1522
      %v1600 = vpop.f32.mrb[0].mxu0
      %v1601 = vadd.f32 0.0, %v1600
      %v1602 = vpop.f32.mrb[0].mxu0
      %1603 = vdwg.mxu0
      %v1604 = vld [vmem:[%s2 + $0x100] sm:$0xff]
      %v1605 = vld [vmem:[%s2 + $0x108] sm:$0xff]
      %v1609 = vrot.slane %v1591, 2
      %v1610 = vrot.slane %v1596, 2
      %v1611 = vsel %vm585, %v1609, %v1610
      %v1612 = vrot.slane %v1601, 2
      %v1613 = vsel %vm585, %v1610, %v1612
      %v1614 = vsel %vm1146, %v1611, 0
      %v1616 = vsel %vm1146, %v1613, 0
      %1618 = vmatprep.subr.mxu0 0.0
      %1619 = vmatpush1.msra.mxu0 %v1605
      %1620 = vmatprep.subr.mxu0 0.0
      %1621 = vmatpush1.msra.mxu0 0.0
      %1622 = vmatprep.subr.mxu0 0.0
      %1623 = vmatpush1.msra.mxu0 0.0
      %1624 = vmatprep.subr.mxu0 0.0
      %1625 = vmatpush1.msra.mxu0 0.0
      %1626 = vmatprep.subr.mxu0 0.0
      %1627 = vmatpush1.msra.mxu0 0.0
      %1628 = vmatprep.subr.mxu0 0.0
      %1629 = vmatpush1.msra.mxu0 0.0
      %1630 = vmatprep.subr.mxu0 0.0
      %1631 = vmatpush1.msra.mxu0 0.0
      %1632 = vmatprep.subr.mxu0 0.0
      %1633 = vmatpush1.msra.mxu0 0.0
      %1634 = vmatprep.subr.mxu0 0.0
      %1635 = vmatpush1.msra.mxu0 0.0
      %1636 = vmatprep.subr.mxu0 0.0
      %1637 = vmatpush1.msra.mxu0 0.0
      %1638 = vmatprep.subr.mxu0 0.0
      %1639 = vmatpush1.msra.mxu0 0.0
      %1640 = vmatprep.subr.mxu0 0.0
      %1641 = vmatpush1.msra.mxu0 0.0
      %1642 = vmatprep.subr.mxu0 0.0
      %1643 = vmatpush1.msra.mxu0 0.0
      %1644 = vmatprep.subr.mxu0 0.0
      %1645 = vmatpush1.msra.mxu0 0.0
      %1646 = vmatprep.subr.mxu0 0.0
      %1647 = vmatpush1.msra.mxu0 0.0
      %1648 = vmatprep.subr.mxu0 0.0
      %1649 = vmatpush1.msra.mxu0 0.0
      %1650 = vmatprep.subr.mxu0 0.0
      %1651 = vmatpush1.msra.mxu0 0.0
      %1652 = vmatprep.subr.mxu0 0.0
      %1653 = vmatpush1.msra.mxu0 0.0
      %1654 = vmatprep.subr.mxu0 0.0
      %1655 = vmatpush1.msra.mxu0 0.0
      %1656 = vmatprep.subr.mxu0 0.0
      %1657 = vmatpush1.msra.mxu0 0.0
      %1658 = vmatprep.subr.mxu0 0.0
      %1659 = vmatpush1.msra.mxu0 0.0
      %1660 = vmatprep.subr.mxu0 0.0
      %1661 = vmatpush1.msra.mxu0 0.0
      %1662 = vmatprep.subr.mxu0 0.0
      %1663 = vmatpush1.msra.mxu0 0.0
      %1664 = vmatprep.subr.mxu0 0.0
      %1665 = vmatpush1.msra.mxu0 0.0
      %1666 = vmatprep.subr.mxu0 0.0
      %1667 = vmatpush1.msra.mxu0 0.0
      %1668 = vmatprep.subr.mxu0 0.0
      %1669 = vmatpush1.msra.mxu0 0.0
      %1670 = vmatprep.subr.mxu0 0.0
      %1671 = vmatpush1.msra.mxu0 0.0
      %1672 = vmatprep.subr.mxu0 0.0
      %1673 = vmatpush1.msra.mxu0 0.0
      %1674 = vmatprep.subr.mxu0 0.0
      %1675 = vmatpush1.msra.mxu0 0.0
      %1676 = vmatprep.subr.mxu0 0.0
      %1677 = vmatpush1.msra.mxu0 0.0
      %1678 = vmatprep.subr.mxu0 0.0
      %1679 = vmatpush1.msra.mxu0 0.0
      %1680 = vmatprep.subr.mxu0 0.0
      %1681 = vmatpush1.msra.mxu0 0.0
      %1682 = vmatprep.mubr.f32.mxu0 0.0
      %1683 = vmatmul.mubr.f32.gmra.mrb[0].mxu0 %v1614
      %v1684 = vpop.f32.mrb[0].mxu0
      %v1685 = vadd.f32 0.0, %v1684
      %v1686 = vpop.f32.mrb[0].mxu0
      %1687 = vmatprep.mubr.f32.mxu0 0.0
      %1688 = vmatmul.mubr.f32.gmra.mrb[0].mxu0 %v1616
      %v1689 = vpop.f32.mrb[0].mxu0
      %v1690 = vadd.f32 0.0, %v1689
      %v1691 = vpop.f32.mrb[0].mxu0
      %1692 = vdwg.mxu0
      %v1693 = vsel %vm1146, %v1591, 0
      %v1695 = vsel %vm1146, %v1596, 0
      %1697 = vmatprep.subr.mxu0 0.0
      %1698 = vmatpush1.msra.mxu0 %v1604
      %1699 = vmatprep.subr.mxu0 0.0
      %1700 = vmatpush1.msra.mxu0 0.0
      %1701 = vmatprep.subr.mxu0 0.0
      %1702 = vmatpush1.msra.mxu0 0.0
      %1703 = vmatprep.subr.mxu0 0.0
      %1704 = vmatpush1.msra.mxu0 0.0
      %1705 = vmatprep.subr.mxu0 0.0
      %1706 = vmatpush1.msra.mxu0 0.0
      %1707 = vmatprep.subr.mxu0 0.0
      %1708 = vmatpush1.msra.mxu0 0.0
      %1709 = vmatprep.subr.mxu0 0.0
      %1710 = vmatpush1.msra.mxu0 0.0
      %1711 = vmatprep.subr.mxu0 0.0
      %1712 = vmatpush1.msra.mxu0 0.0
      %1713 = vmatprep.subr.mxu0 0.0
      %1714 = vmatpush1.msra.mxu0 0.0
      %1715 = vmatprep.subr.mxu0 0.0
      %1716 = vmatpush1.msra.mxu0 0.0
      %1717 = vmatprep.subr.mxu0 0.0
      %1718 = vmatpush1.msra.mxu0 0.0
      %1719 = vmatprep.subr.mxu0 0.0
      %1720 = vmatpush1.msra.mxu0 0.0
      %1721 = vmatprep.subr.mxu0 0.0
      %1722 = vmatpush1.msra.mxu0 0.0
      %1723 = vmatprep.subr.mxu0 0.0
      %1724 = vmatpush1.msra.mxu0 0.0
      %1725 = vmatprep.subr.mxu0 0.0
      %1726 = vmatpush1.msra.mxu0 0.0
      %1727 = vmatprep.subr.mxu0 0.0
      %1728 = vmatpush1.msra.mxu0 0.0
      %1729 = vmatprep.subr.mxu0 0.0
      %1730 = vmatpush1.msra.mxu0 0.0
      %1731 = vmatprep.subr.mxu0 0.0
      %1732 = vmatpush1.msra.mxu0 0.0
      %1733 = vmatprep.subr.mxu0 0.0
      %1734 = vmatpush1.msra.mxu0 0.0
      %1735 = vmatprep.subr.mxu0 0.0
      %1736 = vmatpush1.msra.mxu0 0.0
      %1737 = vmatprep.subr.mxu0 0.0
      %1738 = vmatpush1.msra.mxu0 0.0
      %1739 = vmatprep.subr.mxu0 0.0
      %1740 = vmatpush1.msra.mxu0 0.0
      %1741 = vmatprep.subr.mxu0 0.0
      %1742 = vmatpush1.msra.mxu0 0.0
      %1743 = vmatprep.subr.mxu0 0.0
      %1744 = vmatpush1.msra.mxu0 0.0
      %1745 = vmatprep.subr.mxu0 0.0
      %1746 = vmatpush1.msra.mxu0 0.0
      %1747 = vmatprep.subr.mxu0 0.0
      %1748 = vmatpush1.msra.mxu0 0.0
      %1749 = vmatprep.subr.mxu0 0.0
      %1750 = vmatpush1.msra.mxu0 0.0
      %1751 = vmatprep.subr.mxu0 0.0
      %1752 = vmatpush1.msra.mxu0 0.0
      %1753 = vmatprep.subr.mxu0 0.0
      %1754 = vmatpush1.msra.mxu0 0.0
      %1755 = vmatprep.subr.mxu0 0.0
      %1756 = vmatpush1.msra.mxu0 0.0
      %1757 = vmatprep.subr.mxu0 0.0
      %1758 = vmatpush1.msra.mxu0 0.0
      %1759 = vmatprep.subr.mxu0 0.0
      %1760 = vmatpush1.msra.mxu0 0.0
      %1761 = vmatprep.mubr.f32.mxu0 0.0
      %1762 = vmatmul.mubr.f32.gmra.mrb[0].mxu0 %v1693
      %v1763 = vpop.f32.mrb[0].mxu0
      %v1764 = vadd.f32 %v1685, %v1763
      %v1765 = vpop.f32.mrb[0].mxu0
      %1766 = vmatprep.mubr.f32.mxu0 0.0
      %1767 = vmatmul.mubr.f32.gmra.mrb[0].mxu0 %v1695
      %v1768 = vpop.f32.mrb[0].mxu0
      %v1769 = vadd.f32 %v1690, %v1768
      %v1770 = vpop.f32.mrb[0].mxu0
      %1771 = vdwg.mxu0
      %v1772 = vld [vmem:[%s2 + $0x110] sm:$0xff]
      %v1773 = vrot.slane %v1591, 4
      %v1774 = vrot.slane %v1596, 4
      %v1775 = vsel %vm229, %v1773, %v1774
      %v1776 = vrot.slane %v1601, 4
      %v1777 = vsel %vm229, %v1774, %v1776
      %v1778 = vsel %vm1146, %v1775, 0
      %v1780 = vsel %vm1146, %v1777, 0
      %1782 = vmatprep.subr.mxu0 0.0
      %1783 = vmatpush1.msra.mxu0 %v1772
      %1784 = vmatprep.subr.mxu0 0.0
      %1785 = vmatpush1.msra.mxu0 0.0
      %1786 = vmatprep.subr.mxu0 0.0
      %1787 = vmatpush1.msra.mxu0 0.0
      %1788 = vmatprep.subr.mxu0 0.0
      %1789 = vmatpush1.msra.mxu0 0.0
      %1790 = vmatprep.subr.mxu0 0.0
      %1791 = vmatpush1.msra.mxu0 0.0
      %1792 = vmatprep.subr.mxu0 0.0
      %1793 = vmatpush1.msra.mxu0 0.0
      %1794 = vmatprep.subr.mxu0 0.0
      %1795 = vmatpush1.msra.mxu0 0.0
      %1796 = vmatprep.subr.mxu0 0.0
      %1797 = vmatpush1.msra.mxu0 0.0
      %1798 = vmatprep.subr.mxu0 0.0
      %1799 = vmatpush1.msra.mxu0 0.0
      %1800 = vmatprep.subr.mxu0 0.0
      %1801 = vmatpush1.msra.mxu0 0.0
      %1802 = vmatprep.subr.mxu0 0.0
      %1803 = vmatpush1.msra.mxu0 0.0
      %1804 = vmatprep.subr.mxu0 0.0
      %1805 = vmatpush1.msra.mxu0 0.0
      %1806 = vmatprep.subr.mxu0 0.0
      %1807 = vmatpush1.msra.mxu0 0.0
      %1808 = vmatprep.subr.mxu0 0.0
      %1809 = vmatpush1.msra.mxu0 0.0
      %1810 = vmatprep.subr.mxu0 0.0
      %1811 = vmatpush1.msra.mxu0 0.0
      %1812 = vmatprep.subr.mxu0 0.0
      %1813 = vmatpush1.msra.mxu0 0.0
      %1814 = vmatprep.subr.mxu0 0.0
      %1815 = vmatpush1.msra.mxu0 0.0
      %1816 = vmatprep.subr.mxu0 0.0
      %1817 = vmatpush1.msra.mxu0 0.0
      %1818 = vmatprep.subr.mxu0 0.0
      %1819 = vmatpush1.msra.mxu0 0.0
      %1820 = vmatprep.subr.mxu0 0.0
      %1821 = vmatpush1.msra.mxu0 0.0
      %1822 = vmatprep.subr.mxu0 0.0
      %1823 = vmatpush1.msra.mxu0 0.0
      %1824 = vmatprep.subr.mxu0 0.0
      %1825 = vmatpush1.msra.mxu0 0.0
      %1826 = vmatprep.subr.mxu0 0.0
      %1827 = vmatpush1.msra.mxu0 0.0
      %1828 = vmatprep.subr.mxu0 0.0
      %1829 = vmatpush1.msra.mxu0 0.0
      %1830 = vmatprep.subr.mxu0 0.0
      %1831 = vmatpush1.msra.mxu0 0.0
      %1832 = vmatprep.subr.mxu0 0.0
      %1833 = vmatpush1.msra.mxu0 0.0
      %1834 = vmatprep.subr.mxu0 0.0
      %1835 = vmatpush1.msra.mxu0 0.0
      %1836 = vmatprep.subr.mxu0 0.0
      %1837 = vmatpush1.msra.mxu0 0.0
      %1838 = vmatprep.subr.mxu0 0.0
      %1839 = vmatpush1.msra.mxu0 0.0
      %1840 = vmatprep.subr.mxu0 0.0
      %1841 = vmatpush1.msra.mxu0 0.0
      %1842 = vmatprep.subr.mxu0 0.0
      %1843 = vmatpush1.msra.mxu0 0.0
      %1844 = vmatprep.subr.mxu0 0.0
      %1845 = vmatpush1.msra.mxu0 0.0
      %1846 = vmatprep.mubr.f32.mxu0 0.0
      %1847 = vmatmul.mubr.f32.gmra.mrb[0].mxu0 %v1778
      %v1848 = vpop.f32.mrb[0].mxu0
      %v1849 = vadd.f32 0.0, %v1848
      %v1850 = vpop.f32.mrb[0].mxu0
      %1851 = vmatprep.mubr.f32.mxu0 0.0
      %1852 = vmatmul.mubr.f32.gmra.mrb[0].mxu0 %v1780
      %v1853 = vpop.f32.mrb[0].mxu0
      %v1854 = vadd.f32 0.0, %v1853
      %v1855 = vpop.f32.mrb[0].mxu0
      %1856 = vdwg.mxu0
      %v1857 = vadd.f32 %v1764, %v1849
      %v1858 = vadd.f32 %v1769, %v1854
      %v1859 = vld [vmem:[%s3 + $0x4] sm:$0x1]
      %v1860 = vlaneseq
      %v1861 = vshrl.u32 %v1860, 7
      %v1862 = vsub.s32 0, %v1861
      %v1863 = vrot.slane %v1859, %v1862
      %v1864 = vadd.f32 %v1857, %v1863
      %v1865 = vadd.f32 %v1858, %v1863
      %vm1866 = vcmp.gt.f32.partialorder %v1864, 0.0
      %vm1867 = vcmp.gt.f32.partialorder %v1865, 0.0
      %v1868 = vmul.f32 %v1864, 1.442695
      %v1869 = vpow.pop %v1868
      %v1870 = vmul.f32 %v1865, 1.442695
      %v1871 = vpow.pop %v1870
      %v1872 = vsub.f32 %v1869, 1.0
      %v1873 = vsub.f32 %v1871, 1.0
      %v1874 = vsel %vm1866, %v1864, %v1872
      %v1875 = vsel %vm1867, %v1865, %v1873
      %v1876 = vld [vmem:[%s2 + $0x118] sm:$0xf]
      %v1877 = vld [vmem:[%s3 + $0x5] sm:$0x1]
      %v1878 = vlaneseq
      %v1879 = vshrl.u32 %v1878, 7
      %v1880 = vsub.s32 0, %v1879
      %v1881 = vrot.slane %v1877, %v1880
      %v1883 = vsel %vm1415, %v1874, 0
      %v1886 = vsel %vm1415, %v1875, 0
      %v1889 = vsel %vm229, %v1876, 0
      %1891 = vmatprep.subr.mxu0 0.0
      %1892 = vmatpush1.msra.mxu0 %v1889
      %1893 = vmatprep.subr.mxu0 0.0
      %1894 = vmatpush1.msra.mxu0 0.0
      %1895 = vmatprep.subr.mxu0 0.0
      %1896 = vmatpush1.msra.mxu0 0.0
      %1897 = vmatprep.subr.mxu0 0.0
      %1898 = vmatpush1.msra.mxu0 0.0
      %1899 = vmatprep.subr.mxu0 0.0
      %1900 = vmatpush1.msra.mxu0 0.0
      %1901 = vmatprep.subr.mxu0 0.0
      %1902 = vmatpush1.msra.mxu0 0.0
      %1903 = vmatprep.subr.mxu0 0.0
      %1904 = vmatpush1.msra.mxu0 0.0
      %1905 = vmatprep.subr.mxu0 0.0
      %1906 = vmatpush1.msra.mxu0 0.0
      %1907 = vmatprep.subr.mxu0 0.0
      %1908 = vmatpush1.msra.mxu0 0.0
      %1909 = vmatprep.subr.mxu0 0.0
      %1910 = vmatpush1.msra.mxu0 0.0
      %1911 = vmatprep.subr.mxu0 0.0
      %1912 = vmatpush1.msra.mxu0 0.0
      %1913 = vmatprep.subr.mxu0 0.0
      %1914 = vmatpush1.msra.mxu0 0.0
      %1915 = vmatprep.subr.mxu0 0.0
      %1916 = vmatpush1.msra.mxu0 0.0
      %1917 = vmatprep.subr.mxu0 0.0
      %1918 = vmatpush1.msra.mxu0 0.0
      %1919 = vmatprep.subr.mxu0 0.0
      %1920 = vmatpush1.msra.mxu0 0.0
      %1921 = vmatprep.subr.mxu0 0.0
      %1922 = vmatpush1.msra.mxu0 0.0
      %1923 = vmatprep.subr.mxu0 0.0
      %1924 = vmatpush1.msra.mxu0 0.0
      %1925 = vmatprep.subr.mxu0 0.0
      %1926 = vmatpush1.msra.mxu0 0.0
      %1927 = vmatprep.subr.mxu0 0.0
      %1928 = vmatpush1.msra.mxu0 0.0
      %1929 = vmatprep.subr.mxu0 0.0
      %1930 = vmatpush1.msra.mxu0 0.0
      %1931 = vmatprep.subr.mxu0 0.0
      %1932 = vmatpush1.msra.mxu0 0.0
      %1933 = vmatprep.subr.mxu0 0.0
      %1934 = vmatpush1.msra.mxu0 0.0
      %1935 = vmatprep.subr.mxu0 0.0
      %1936 = vmatpush1.msra.mxu0 0.0
      %1937 = vmatprep.subr.mxu0 0.0
      %1938 = vmatpush1.msra.mxu0 0.0
      %1939 = vmatprep.subr.mxu0 0.0
      %1940 = vmatpush1.msra.mxu0 0.0
      %1941 = vmatprep.subr.mxu0 0.0
      %1942 = vmatpush1.msra.mxu0 0.0
      %1943 = vmatprep.subr.mxu0 0.0
      %1944 = vmatpush1.msra.mxu0 0.0
      %1945 = vmatprep.subr.mxu0 0.0
      %1946 = vmatpush1.msra.mxu0 0.0
      %1947 = vmatprep.subr.mxu0 0.0
      %1948 = vmatpush1.msra.mxu0 0.0
      %1949 = vmatprep.subr.mxu0 0.0
      %1950 = vmatpush1.msra.mxu0 0.0
      %1951 = vmatprep.subr.mxu0 0.0
      %1952 = vmatpush1.msra.mxu0 0.0
      %1953 = vmatprep.subr.mxu0 0.0
      %1954 = vmatpush1.msra.mxu0 0.0
      %1955 = vmatprep.mubr.f32.mxu0 0.0
      %1956 = vmatmul.mubr.f32.gmra.mrb[0].mxu0 %v1883
      %v1957 = vpop.f32.mrb[0].mxu0
      %v1958 = vadd.f32 %v1881, %v1957
      %v1959 = vpop.f32.mrb[0].mxu0
      %1960 = vmatprep.mubr.f32.mxu0 0.0
      %1961 = vmatmul.mubr.f32.gmra.mrb[0].mxu0 %v1886
      %v1962 = vpop.f32.mrb[0].mxu0
      %v1963 = vadd.f32 %v1881, %v1962
      %v1964 = vpop.f32.mrb[0].mxu0
      %1965 = vdwg.mxu0
      %v1966 = vadd.f32 %v1958, %v1500
      %v1967 = vadd.f32 %v1963, %v1501
      %vm1968 = vcmp.gt.f32.partialorder %v1966, 0.0
      %vm1969 = vcmp.gt.f32.partialorder %v1967, 0.0
      %v1970 = vmul.f32 %v1966, 1.442695
      %v1971 = vpow.pop %v1970
      %v1972 = vmul.f32 %v1967, 1.442695
      %v1973 = vpow.pop %v1972
      %v1974 = vsub.f32 %v1971, 1.0
      %v1975 = vsub.f32 %v1973, 1.0
      %v1976 = vsel %vm1968, %v1966, %v1974
      %v1977 = vsel %vm1969, %v1967, %v1975
      %v1978 = vld [vmem:[%s2 + $0x58] sm:$0xff]
      %v1979 = vld [vmem:[%s2 + $0x60] sm:$0xff]
      %v1980 = vld [vmem:[%s2 + $0x68] sm:$0x1]
      %v1982 = vsel %vm322, %v1978, 0
      %v1985 = vsel %vm322, %v1979, 0
      %v1988 = vsel %vm322, %v1980, 0
      %1990 = vmatprep.subr.mxu0 0.0
      %1991 = vmatpush1.msra.mxu0 %v1976
      %1992 = vmatprep.subr.mxu0 0.0
      %1993 = vmatpush1.msra.mxu0 %v1977
      %1994 = vmatprep.subr.mxu0 0.0
      %1995 = vmatpush1.msra.mxu0 0.0
      %1996 = vmatprep.subr.mxu0 0.0
      %1997 = vmatpush1.msra.mxu0 0.0
      %1998 = vmatprep.subr.mxu0 0.0
      %1999 = vmatpush1.msra.mxu0 0.0
      %2000 = vmatprep.subr.mxu0 0.0
      %2001 = vmatpush1.msra.mxu0 0.0
      %2002 = vmatprep.subr.mxu0 0.0
      %2003 = vmatpush1.msra.mxu0 0.0
      %2004 = vmatprep.subr.mxu0 0.0
      %2005 = vmatpush1.msra.mxu0 0.0
      %2006 = vmatprep.subr.mxu0 0.0
      %2007 = vmatpush1.msra.mxu0 0.0
      %2008 = vmatprep.subr.mxu0 0.0
      %2009 = vmatpush1.msra.mxu0 0.0
      %2010 = vmatprep.subr.mxu0 0.0
      %2011 = vmatpush1.msra.mxu0 0.0
      %2012 = vmatprep.subr.mxu0 0.0
      %2013 = vmatpush1.msra.mxu0 0.0
      %2014 = vmatprep.subr.mxu0 0.0
      %2015 = vmatpush1.msra.mxu0 0.0
      %2016 = vmatprep.subr.mxu0 0.0
      %2017 = vmatpush1.msra.mxu0 0.0
      %2018 = vmatprep.subr.mxu0 0.0
      %2019 = vmatpush1.msra.mxu0 0.0
      %2020 = vmatprep.subr.mxu0 0.0
      %2021 = vmatpush1.msra.mxu0 0.0
      %2022 = vmatprep.subr.mxu0 0.0
      %2023 = vmatpush1.msra.mxu0 0.0
      %2024 = vmatprep.subr.mxu0 0.0
      %2025 = vmatpush1.msra.mxu0 0.0
      %2026 = vmatprep.subr.mxu0 0.0
      %2027 = vmatpush1.msra.mxu0 0.0
      %2028 = vmatprep.subr.mxu0 0.0
      %2029 = vmatpush1.msra.mxu0 0.0
      %2030 = vmatprep.subr.mxu0 0.0
      %2031 = vmatpush1.msra.mxu0 0.0
      %2032 = vmatprep.subr.mxu0 0.0
      %2033 = vmatpush1.msra.mxu0 0.0
      %2034 = vmatprep.subr.mxu0 0.0
      %2035 = vmatpush1.msra.mxu0 0.0
      %2036 = vmatprep.subr.mxu0 0.0
      %2037 = vmatpush1.msra.mxu0 0.0
      %2038 = vmatprep.subr.mxu0 0.0
      %2039 = vmatpush1.msra.mxu0 0.0
      %2040 = vmatprep.subr.mxu0 0.0
      %2041 = vmatpush1.msra.mxu0 0.0
      %2042 = vmatprep.subr.mxu0 0.0
      %2043 = vmatpush1.msra.mxu0 0.0
      %2044 = vmatprep.subr.mxu0 0.0
      %2045 = vmatpush1.msra.mxu0 0.0
      %2046 = vmatprep.subr.mxu0 0.0
      %2047 = vmatpush1.msra.mxu0 0.0
      %2048 = vmatprep.subr.mxu0 0.0
      %2049 = vmatpush1.msra.mxu0 0.0
      %2050 = vmatprep.subr.mxu0 0.0
      %2051 = vmatpush1.msra.mxu0 0.0
      %2052 = vmatprep.subr.mxu0 0.0
      %2053 = vmatpush1.msra.mxu0 0.0
      %2054 = vmatprep.mubr.f32.mxu0 0.0
      %2055 = vmatmul.mubr.f32.gmra.mrb[0].mxu0 %v1982
      %v2056 = vpop.f32.mrb[0].mxu0
      %v2057 = vadd.f32 0.0, %v2056
      %v2058 = vpop.f32.mrb[0].mxu0
      %2059 = vmatprep.mubr.f32.mxu0 0.0
      %2060 = vmatmul.mubr.f32.gmra.mrb[0].mxu0 %v1985
      %v2061 = vpop.f32.mrb[0].mxu0
      %v2062 = vadd.f32 0.0, %v2061
      %v2063 = vpop.f32.mrb[0].mxu0
      %2064 = vmatprep.mubr.f32.mxu0 0.0
      %2065 = vmatmul.mubr.f32.gmra.mrb[0].mxu0 %v1988
      %v2066 = vpop.f32.mrb[0].mxu0
      %v2067 = vadd.f32 0.0, %v2066
      %v2068 = vpop.f32.mrb[0].mxu0
      %2069 = vdwg.mxu0
      %v2070 = vld [vmem:[%s2 + $0x120] sm:$0xff]
      %v2071 = vld [vmem:[%s2 + $0x128] sm:$0xff]
      %v2075 = vrot.slane %v2057, 1
      %v2076 = vrot.slane %v2062, 1
      %v2077 = vsel %vm419, %v2075, %v2076
      %v2078 = vrot.slane %v2067, 1
      %v2079 = vsel %vm419, %v2076, %v2078
      %v2080 = vsel %vm1146, %v2077, 0
      %v2082 = vsel %vm1146, %v2079, 0
      %2084 = vmatprep.subr.mxu0 0.0
      %2085 = vmatpush1.msra.mxu0 %v2071
      %2086 = vmatprep.subr.mxu0 0.0
      %2087 = vmatpush1.msra.mxu0 0.0
      %2088 = vmatprep.subr.mxu0 0.0
      %2089 = vmatpush1.msra.mxu0 0.0
      %2090 = vmatprep.subr.mxu0 0.0
      %2091 = vmatpush1.msra.mxu0 0.0
      %2092 = vmatprep.subr.mxu0 0.0
      %2093 = vmatpush1.msra.mxu0 0.0
      %2094 = vmatprep.subr.mxu0 0.0
      %2095 = vmatpush1.msra.mxu0 0.0
      %2096 = vmatprep.subr.mxu0 0.0
      %2097 = vmatpush1.msra.mxu0 0.0
      %2098 = vmatprep.subr.mxu0 0.0
      %2099 = vmatpush1.msra.mxu0 0.0
      %2100 = vmatprep.subr.mxu0 0.0
      %2101 = vmatpush1.msra.mxu0 0.0
      %2102 = vmatprep.subr.mxu0 0.0
      %2103 = vmatpush1.msra.mxu0 0.0
      %2104 = vmatprep.subr.mxu0 0.0
      %2105 = vmatpush1.msra.mxu0 0.0
      %2106 = vmatprep.subr.mxu0 0.0
      %2107 = vmatpush1.msra.mxu0 0.0
      %2108 = vmatprep.subr.mxu0 0.0
      %2109 = vmatpush1.msra.mxu0 0.0
      %2110 = vmatprep.subr.mxu0 0.0
      %2111 = vmatpush1.msra.mxu0 0.0
      %2112 = vmatprep.subr.mxu0 0.0
      %2113 = vmatpush1.msra.mxu0 0.0
      %2114 = vmatprep.subr.mxu0 0.0
      %2115 = vmatpush1.msra.mxu0 0.0
      %2116 = vmatprep.subr.mxu0 0.0
      %2117 = vmatpush1.msra.mxu0 0.0
      %2118 = vmatprep.subr.mxu0 0.0
      %2119 = vmatpush1.msra.mxu0 0.0
      %2120 = vmatprep.subr.mxu0 0.0
      %2121 = vmatpush1.msra.mxu0 0.0
      %2122 = vmatprep.subr.mxu0 0.0
      %2123 = vmatpush1.msra.mxu0 0.0
      %2124 = vmatprep.subr.mxu0 0.0
      %2125 = vmatpush1.msra.mxu0 0.0
      %2126 = vmatprep.subr.mxu0 0.0
      %2127 = vmatpush1.msra.mxu0 0.0
      %2128 = vmatprep.subr.mxu0 0.0
      %2129 = vmatpush1.msra.mxu0 0.0
      %2130 = vmatprep.subr.mxu0 0.0
      %2131 = vmatpush1.msra.mxu0 0.0
      %2132 = vmatprep.subr.mxu0 0.0
      %2133 = vmatpush1.msra.mxu0 0.0
      %2134 = vmatprep.subr.mxu0 0.0
      %2135 = vmatpush1.msra.mxu0 0.0
      %2136 = vmatprep.subr.mxu0 0.0
      %2137 = vmatpush1.msra.mxu0 0.0
      %2138 = vmatprep.subr.mxu0 0.0
      %2139 = vmatpush1.msra.mxu0 0.0
      %2140 = vmatprep.subr.mxu0 0.0
      %2141 = vmatpush1.msra.mxu0 0.0
      %2142 = vmatprep.subr.mxu0 0.0
      %2143 = vmatpush1.msra.mxu0 0.0
      %2144 = vmatprep.subr.mxu0 0.0
      %2145 = vmatpush1.msra.mxu0 0.0
      %2146 = vmatprep.subr.mxu0 0.0
      %2147 = vmatpush1.msra.mxu0 0.0
      %2148 = vmatprep.mubr.f32.mxu0 0.0
      %2149 = vmatmul.mubr.f32.gmra.mrb[0].mxu0 %v2080
      %v2150 = vpop.f32.mrb[0].mxu0
      %v2151 = vadd.f32 0.0, %v2150
      %v2152 = vpop.f32.mrb[0].mxu0
      %2153 = vmatprep.mubr.f32.mxu0 0.0
      %2154 = vmatmul.mubr.f32.gmra.mrb[0].mxu0 %v2082
      %v2155 = vpop.f32.mrb[0].mxu0
      %v2156 = vadd.f32 0.0, %v2155
      %v2157 = vpop.f32.mrb[0].mxu0
      %2158 = vdwg.mxu0
      %v2159 = vsel %vm1146, %v2057, 0
      %v2161 = vsel %vm1146, %v2062, 0
      %2163 = vmatprep.subr.mxu0 0.0
      %2164 = vmatpush1.msra.mxu0 %v2070
      %2165 = vmatprep.subr.mxu0 0.0
      %2166 = vmatpush1.msra.mxu0 0.0
      %2167 = vmatprep.subr.mxu0 0.0
      %2168 = vmatpush1.msra.mxu0 0.0
      %2169 = vmatprep.subr.mxu0 0.0
      %2170 = vmatpush1.msra.mxu0 0.0
      %2171 = vmatprep.subr.mxu0 0.0
      %2172 = vmatpush1.msra.mxu0 0.0
      %2173 = vmatprep.subr.mxu0 0.0
      %2174 = vmatpush1.msra.mxu0 0.0
      %2175 = vmatprep.subr.mxu0 0.0
      %2176 = vmatpush1.msra.mxu0 0.0
      %2177 = vmatprep.subr.mxu0 0.0
      %2178 = vmatpush1.msra.mxu0 0.0
      %2179 = vmatprep.subr.mxu0 0.0
      %2180 = vmatpush1.msra.mxu0 0.0
      %2181 = vmatprep.subr.mxu0 0.0
      %2182 = vmatpush1.msra.mxu0 0.0
      %2183 = vmatprep.subr.mxu0 0.0
      %2184 = vmatpush1.msra.mxu0 0.0
      %2185 = vmatprep.subr.mxu0 0.0
      %2186 = vmatpush1.msra.mxu0 0.0
      %2187 = vmatprep.subr.mxu0 0.0
      %2188 = vmatpush1.msra.mxu0 0.0
      %2189 = vmatprep.subr.mxu0 0.0
      %2190 = vmatpush1.msra.mxu0 0.0
      %2191 = vmatprep.subr.mxu0 0.0
      %2192 = vmatpush1.msra.mxu0 0.0
      %2193 = vmatprep.subr.mxu0 0.0
      %2194 = vmatpush1.msra.mxu0 0.0
      %2195 = vmatprep.subr.mxu0 0.0
      %2196 = vmatpush1.msra.mxu0 0.0
      %2197 = vmatprep.subr.mxu0 0.0
      %2198 = vmatpush1.msra.mxu0 0.0
      %2199 = vmatprep.subr.mxu0 0.0
      %2200 = vmatpush1.msra.mxu0 0.0
      %2201 = vmatprep.subr.mxu0 0.0
      %2202 = vmatpush1.msra.mxu0 0.0
      %2203 = vmatprep.subr.mxu0 0.0
      %2204 = vmatpush1.msra.mxu0 0.0
      %2205 = vmatprep.subr.mxu0 0.0
      %2206 = vmatpush1.msra.mxu0 0.0
      %2207 = vmatprep.subr.mxu0 0.0
      %2208 = vmatpush1.msra.mxu0 0.0
      %2209 = vmatprep.subr.mxu0 0.0
      %2210 = vmatpush1.msra.mxu0 0.0
      %2211 = vmatprep.subr.mxu0 0.0
      %2212 = vmatpush1.msra.mxu0 0.0
      %2213 = vmatprep.subr.mxu0 0.0
      %2214 = vmatpush1.msra.mxu0 0.0
      %2215 = vmatprep.subr.mxu0 0.0
      %2216 = vmatpush1.msra.mxu0 0.0
      %2217 = vmatprep.subr.mxu0 0.0
      %2218 = vmatpush1.msra.mxu0 0.0
      %2219 = vmatprep.subr.mxu0 0.0
      %2220 = vmatpush1.msra.mxu0 0.0
      %2221 = vmatprep.subr.mxu0 0.0
      %2222 = vmatpush1.msra.mxu0 0.0
      %2223 = vmatprep.subr.mxu0 0.0
      %2224 = vmatpush1.msra.mxu0 0.0
      %2225 = vmatprep.subr.mxu0 0.0
      %2226 = vmatpush1.msra.mxu0 0.0
      %2227 = vmatprep.mubr.f32.mxu0 0.0
      %2228 = vmatmul.mubr.f32.gmra.mrb[0].mxu0 %v2159
      %v2229 = vpop.f32.mrb[0].mxu0
      %v2230 = vadd.f32 %v2151, %v2229
      %v2231 = vpop.f32.mrb[0].mxu0
      %2232 = vmatprep.mubr.f32.mxu0 0.0
      %2233 = vmatmul.mubr.f32.gmra.mrb[0].mxu0 %v2161
      %v2234 = vpop.f32.mrb[0].mxu0
      %v2235 = vadd.f32 %v2156, %v2234
      %v2236 = vpop.f32.mrb[0].mxu0
      %2237 = vdwg.mxu0
      %v2238 = vld [vmem:[%s3 + $0x6] sm:$0x1]
      %v2239 = vlaneseq
      %v2240 = vshrl.u32 %v2239, 7
      %v2241 = vsub.s32 0, %v2240
      %v2242 = vrot.slane %v2238, %v2241
      %v2243 = vadd.f32 %v2230, %v2242
      %v2244 = vadd.f32 %v2235, %v2242
      %vm2245 = vcmp.gt.f32.partialorder %v2243, 0.0
      %vm2246 = vcmp.gt.f32.partialorder %v2244, 0.0
      %v2247 = vmul.f32 %v2243, 1.442695
      %v2248 = vpow.pop %v2247
      %v2249 = vmul.f32 %v2244, 1.442695
      %v2250 = vpow.pop %v2249
      %v2251 = vsub.f32 %v2248, 1.0
      %v2252 = vsub.f32 %v2250, 1.0
      %v2253 = vsel %vm2245, %v2243, %v2251
      %v2254 = vsel %vm2246, %v2244, %v2252
      %2255 = vmatprep.subr.mxu0 0.0
      %2256 = vmatpush1.msra.mxu0 %v2253
      %2257 = vmatprep.subr.mxu0 0.0
      %2258 = vmatpush1.msra.mxu0 %v2254
      %2259 = vmatprep.subr.mxu0 0.0
      %2260 = vmatpush1.msra.mxu0 0.0
      %2261 = vmatprep.subr.mxu0 0.0
      %2262 = vmatpush1.msra.mxu0 0.0
      %2263 = vmatprep.subr.mxu0 0.0
      %2264 = vmatpush1.msra.mxu0 0.0
      %2265 = vmatprep.subr.mxu0 0.0
      %2266 = vmatpush1.msra.mxu0 0.0
      %2267 = vmatprep.subr.mxu0 0.0
      %2268 = vmatpush1.msra.mxu0 0.0
      %2269 = vmatprep.subr.mxu0 0.0
      %2270 = vmatpush1.msra.mxu0 0.0
      %2271 = vmatprep.subr.mxu0 0.0
      %2272 = vmatpush1.msra.mxu0 0.0
      %2273 = vmatprep.subr.mxu0 0.0
      %2274 = vmatpush1.msra.mxu0 0.0
      %2275 = vmatprep.subr.mxu0 0.0
      %2276 = vmatpush1.msra.mxu0 0.0
      %2277 = vmatprep.subr.mxu0 0.0
      %2278 = vmatpush1.msra.mxu0 0.0
      %2279 = vmatprep.subr.mxu0 0.0
      %2280 = vmatpush1.msra.mxu0 0.0
      %2281 = vmatprep.subr.mxu0 0.0
      %2282 = vmatpush1.msra.mxu0 0.0
      %2283 = vmatprep.subr.mxu0 0.0
      %2284 = vmatpush1.msra.mxu0 0.0
      %2285 = vmatprep.subr.mxu0 0.0
      %2286 = vmatpush1.msra.mxu0 0.0
      %2287 = vmatprep.subr.mxu0 0.0
      %2288 = vmatpush1.msra.mxu0 0.0
      %2289 = vmatprep.subr.mxu0 0.0
      %2290 = vmatpush1.msra.mxu0 0.0
      %2291 = vmatprep.subr.mxu0 0.0
      %2292 = vmatpush1.msra.mxu0 0.0
      %2293 = vmatprep.subr.mxu0 0.0
      %2294 = vmatpush1.msra.mxu0 0.0
      %2295 = vmatprep.subr.mxu0 0.0
      %2296 = vmatpush1.msra.mxu0 0.0
      %2297 = vmatprep.subr.mxu0 0.0
      %2298 = vmatpush1.msra.mxu0 0.0
      %2299 = vmatprep.subr.mxu0 0.0
      %2300 = vmatpush1.msra.mxu0 0.0
      %2301 = vmatprep.subr.mxu0 0.0
      %2302 = vmatpush1.msra.mxu0 0.0
      %2303 = vmatprep.subr.mxu0 0.0
      %2304 = vmatpush1.msra.mxu0 0.0
      %2305 = vmatprep.subr.mxu0 0.0
      %2306 = vmatpush1.msra.mxu0 0.0
      %2307 = vmatprep.subr.mxu0 0.0
      %2308 = vmatpush1.msra.mxu0 0.0
      %2309 = vmatprep.subr.mxu0 0.0
      %2310 = vmatpush1.msra.mxu0 0.0
      %2311 = vmatprep.subr.mxu0 0.0
      %2312 = vmatpush1.msra.mxu0 0.0
      %2313 = vmatprep.subr.mxu0 0.0
      %2314 = vmatpush1.msra.mxu0 0.0
      %2315 = vmatprep.subr.mxu0 0.0
      %2316 = vmatpush1.msra.mxu0 0.0
      %2317 = vmatprep.subr.mxu0 0.0
      %2318 = vmatpush1.msra.mxu0 0.0
      %2319 = vmatprep.mubr.f32.mxu0 0.0
      %2320 = vmatmul.mubr.f32.gmra.mrb[0].mxu0 %v1048
      %v2321 = vpop.f32.mrb[0].mxu0
      %v2322 = vadd.f32 0.0, %v2321
      %v2323 = vpop.f32.mrb[0].mxu0
      %2324 = vmatprep.mubr.f32.mxu0 0.0
      %2325 = vmatmul.mubr.f32.gmra.mrb[0].mxu0 %v1051
      %v2326 = vpop.f32.mrb[0].mxu0
      %v2327 = vadd.f32 0.0, %v2326
      %v2328 = vpop.f32.mrb[0].mxu0
      %2329 = vmatprep.mubr.f32.mxu0 0.0
      %2330 = vmatmul.mubr.f32.gmra.mrb[0].mxu0 %v1054
      %v2331 = vpop.f32.mrb[0].mxu0
      %v2332 = vadd.f32 0.0, %v2331
      %v2333 = vpop.f32.mrb[0].mxu0
      %2334 = vdwg.mxu0
      %v2335 = vld [vmem:[%s2 + $0x130] sm:$0xff]
      %v2336 = vld [vmem:[%s2 + $0x138] sm:$0xff]
      %v2337 = vld [vmem:[%s2 + $0x140] sm:$0xff]
      %v2338 = vld [vmem:[%s2 + $0x148] sm:$0xff]
      %v2342 = vrot.slane %v2322, 1
      %v2343 = vrot.slane %v2327, 1
      %v2344 = vsel %vm419, %v2342, %v2343
      %v2345 = vrot.slane %v2332, 1
      %v2346 = vsel %vm419, %v2343, %v2345
      %v2347 = vsel %vm322, %v2344, 0
      %v2349 = vsel %vm322, %v2346, 0
      %2351 = vmatprep.subr.mxu0 0.0
      %2352 = vmatpush1.msra.mxu0 %v2337
      %2353 = vmatprep.subr.mxu0 0.0
      %2354 = vmatpush1.msra.mxu0 %v2338
      %2355 = vmatprep.subr.mxu0 0.0
      %2356 = vmatpush1.msra.mxu0 0.0
      %2357 = vmatprep.subr.mxu0 0.0
      %2358 = vmatpush1.msra.mxu0 0.0
      %2359 = vmatprep.subr.mxu0 0.0
      %2360 = vmatpush1.msra.mxu0 0.0
      %2361 = vmatprep.subr.mxu0 0.0
      %2362 = vmatpush1.msra.mxu0 0.0
      %2363 = vmatprep.subr.mxu0 0.0
      %2364 = vmatpush1.msra.mxu0 0.0
      %2365 = vmatprep.subr.mxu0 0.0
      %2366 = vmatpush1.msra.mxu0 0.0
      %2367 = vmatprep.subr.mxu0 0.0
      %2368 = vmatpush1.msra.mxu0 0.0
      %2369 = vmatprep.subr.mxu0 0.0
      %2370 = vmatpush1.msra.mxu0 0.0
      %2371 = vmatprep.subr.mxu0 0.0
      %2372 = vmatpush1.msra.mxu0 0.0
      %2373 = vmatprep.subr.mxu0 0.0
      %2374 = vmatpush1.msra.mxu0 0.0
      %2375 = vmatprep.subr.mxu0 0.0
      %2376 = vmatpush1.msra.mxu0 0.0
      %2377 = vmatprep.subr.mxu0 0.0
      %2378 = vmatpush1.msra.mxu0 0.0
      %2379 = vmatprep.subr.mxu0 0.0
      %2380 = vmatpush1.msra.mxu0 0.0
      %2381 = vmatprep.subr.mxu0 0.0
      %2382 = vmatpush1.msra.mxu0 0.0
      %2383 = vmatprep.subr.mxu0 0.0
      %2384 = vmatpush1.msra.mxu0 0.0
      %2385 = vmatprep.subr.mxu0 0.0
      %2386 = vmatpush1.msra.mxu0 0.0
      %2387 = vmatprep.subr.mxu0 0.0
      %2388 = vmatpush1.msra.mxu0 0.0
      %2389 = vmatprep.subr.mxu0 0.0
      %2390 = vmatpush1.msra.mxu0 0.0
      %2391 = vmatprep.subr.mxu0 0.0
      %2392 = vmatpush1.msra.mxu0 0.0
      %2393 = vmatprep.subr.mxu0 0.0
      %2394 = vmatpush1.msra.mxu0 0.0
      %2395 = vmatprep.subr.mxu0 0.0
      %2396 = vmatpush1.msra.mxu0 0.0
      %2397 = vmatprep.subr.mxu0 0.0
      %2398 = vmatpush1.msra.mxu0 0.0
      %2399 = vmatprep.subr.mxu0 0.0
      %2400 = vmatpush1.msra.mxu0 0.0
      %2401 = vmatprep.subr.mxu0 0.0
      %2402 = vmatpush1.msra.mxu0 0.0
      %2403 = vmatprep.subr.mxu0 0.0
      %2404 = vmatpush1.msra.mxu0 0.0
      %2405 = vmatprep.subr.mxu0 0.0
      %2406 = vmatpush1.msra.mxu0 0.0
      %2407 = vmatprep.subr.mxu0 0.0
      %2408 = vmatpush1.msra.mxu0 0.0
      %2409 = vmatprep.subr.mxu0 0.0
      %2410 = vmatpush1.msra.mxu0 0.0
      %2411 = vmatprep.subr.mxu0 0.0
      %2412 = vmatpush1.msra.mxu0 0.0
      %2413 = vmatprep.subr.mxu0 0.0
      %2414 = vmatpush1.msra.mxu0 0.0
      %2415 = vmatprep.mubr.f32.mxu0 0.0
      %2416 = vmatmul.mubr.f32.gmra.mrb[0].mxu0 %v2347
      %v2417 = vpop.f32.mrb[0].mxu0
      %v2418 = vadd.f32 0.0, %v2417
      %v2419 = vpop.f32.mrb[0].mxu0
      %2420 = vmatprep.mubr.f32.mxu0 0.0
      %2421 = vmatmul.mubr.f32.gmra.mrb[0].mxu0 %v2349
      %v2422 = vpop.f32.mrb[0].mxu0
      %v2423 = vadd.f32 0.0, %v2422
      %v2424 = vpop.f32.mrb[0].mxu0
      %2425 = vdwg.mxu0
      %v2426 = vsel %vm322, %v2322, 0
      %v2428 = vsel %vm322, %v2327, 0
      %2430 = vmatprep.subr.mxu0 0.0
      %2431 = vmatpush1.msra.mxu0 %v2335
      %2432 = vmatprep.subr.mxu0 0.0
      %2433 = vmatpush1.msra.mxu0 %v2336
      %2434 = vmatprep.subr.mxu0 0.0
      %2435 = vmatpush1.msra.mxu0 0.0
      %2436 = vmatprep.subr.mxu0 0.0
      %2437 = vmatpush1.msra.mxu0 0.0
      %2438 = vmatprep.subr.mxu0 0.0
      %2439 = vmatpush1.msra.mxu0 0.0
      %2440 = vmatprep.subr.mxu0 0.0
      %2441 = vmatpush1.msra.mxu0 0.0
      %2442 = vmatprep.subr.mxu0 0.0
      %2443 = vmatpush1.msra.mxu0 0.0
      %2444 = vmatprep.subr.mxu0 0.0
      %2445 = vmatpush1.msra.mxu0 0.0
      %2446 = vmatprep.subr.mxu0 0.0
      %2447 = vmatpush1.msra.mxu0 0.0
      %2448 = vmatprep.subr.mxu0 0.0
      %2449 = vmatpush1.msra.mxu0 0.0
      %2450 = vmatprep.subr.mxu0 0.0
      %2451 = vmatpush1.msra.mxu0 0.0
      %2452 = vmatprep.subr.mxu0 0.0
      %2453 = vmatpush1.msra.mxu0 0.0
      %2454 = vmatprep.subr.mxu0 0.0
      %2455 = vmatpush1.msra.mxu0 0.0
      %2456 = vmatprep.subr.mxu0 0.0
      %2457 = vmatpush1.msra.mxu0 0.0
      %2458 = vmatprep.subr.mxu0 0.0
      %2459 = vmatpush1.msra.mxu0 0.0
      %2460 = vmatprep.subr.mxu0 0.0
      %2461 = vmatpush1.msra.mxu0 0.0
      %2462 = vmatprep.subr.mxu0 0.0
      %2463 = vmatpush1.msra.mxu0 0.0
      %2464 = vmatprep.subr.mxu0 0.0
      %2465 = vmatpush1.msra.mxu0 0.0
      %2466 = vmatprep.subr.mxu0 0.0
      %2467 = vmatpush1.msra.mxu0 0.0
      %2468 = vmatprep.subr.mxu0 0.0
      %2469 = vmatpush1.msra.mxu0 0.0
      %2470 = vmatprep.subr.mxu0 0.0
      %2471 = vmatpush1.msra.mxu0 0.0
      %2472 = vmatprep.subr.mxu0 0.0
      %2473 = vmatpush1.msra.mxu0 0.0
      %2474 = vmatprep.subr.mxu0 0.0
      %2475 = vmatpush1.msra.mxu0 0.0
      %2476 = vmatprep.subr.mxu0 0.0
      %2477 = vmatpush1.msra.mxu0 0.0
      %2478 = vmatprep.subr.mxu0 0.0
      %2479 = vmatpush1.msra.mxu0 0.0
      %2480 = vmatprep.subr.mxu0 0.0
      %2481 = vmatpush1.msra.mxu0 0.0
      %2482 = vmatprep.subr.mxu0 0.0
      %2483 = vmatpush1.msra.mxu0 0.0
      %2484 = vmatprep.subr.mxu0 0.0
      %2485 = vmatpush1.msra.mxu0 0.0
      %2486 = vmatprep.subr.mxu0 0.0
      %2487 = vmatpush1.msra.mxu0 0.0
      %2488 = vmatprep.subr.mxu0 0.0
      %2489 = vmatpush1.msra.mxu0 0.0
      %2490 = vmatprep.subr.mxu0 0.0
      %2491 = vmatpush1.msra.mxu0 0.0
      %2492 = vmatprep.subr.mxu0 0.0
      %2493 = vmatpush1.msra.mxu0 0.0
      %2494 = vmatprep.mubr.f32.mxu0 0.0
      %2495 = vmatmul.mubr.f32.gmra.mrb[0].mxu0 %v2426
      %v2496 = vpop.f32.mrb[0].mxu0
      %v2497 = vadd.f32 %v2418, %v2496
      %v2498 = vpop.f32.mrb[0].mxu0
      %2499 = vmatprep.mubr.f32.mxu0 0.0
      %2500 = vmatmul.mubr.f32.gmra.mrb[0].mxu0 %v2428
      %v2501 = vpop.f32.mrb[0].mxu0
      %v2502 = vadd.f32 %v2423, %v2501
      %v2503 = vpop.f32.mrb[0].mxu0
      %2504 = vdwg.mxu0
      %v2505 = vld [vmem:[%s2 + $0x150] sm:$0xff]
      %v2506 = vld [vmem:[%s2 + $0x158] sm:$0xff]
      %v2507 = vrot.slane %v2322, 2
      %v2508 = vrot.slane %v2327, 2
      %v2509 = vsel %vm585, %v2507, %v2508
      %v2510 = vrot.slane %v2332, 2
      %v2511 = vsel %vm585, %v2508, %v2510
      %v2512 = vsel %vm322, %v2509, 0
      %v2514 = vsel %vm322, %v2511, 0
      %2516 = vmatprep.subr.mxu0 0.0
      %2517 = vmatpush1.msra.mxu0 %v2505
      %2518 = vmatprep.subr.mxu0 0.0
      %2519 = vmatpush1.msra.mxu0 %v2506
      %2520 = vmatprep.subr.mxu0 0.0
      %2521 = vmatpush1.msra.mxu0 0.0
      %2522 = vmatprep.subr.mxu0 0.0
      %2523 = vmatpush1.msra.mxu0 0.0
      %2524 = vmatprep.subr.mxu0 0.0
      %2525 = vmatpush1.msra.mxu0 0.0
      %2526 = vmatprep.subr.mxu0 0.0
      %2527 = vmatpush1.msra.mxu0 0.0
      %2528 = vmatprep.subr.mxu0 0.0
      %2529 = vmatpush1.msra.mxu0 0.0
      %2530 = vmatprep.subr.mxu0 0.0
      %2531 = vmatpush1.msra.mxu0 0.0
      %2532 = vmatprep.subr.mxu0 0.0
      %2533 = vmatpush1.msra.mxu0 0.0
      %2534 = vmatprep.subr.mxu0 0.0
      %2535 = vmatpush1.msra.mxu0 0.0
      %2536 = vmatprep.subr.mxu0 0.0
      %2537 = vmatpush1.msra.mxu0 0.0
      %2538 = vmatprep.subr.mxu0 0.0
      %2539 = vmatpush1.msra.mxu0 0.0
      %2540 = vmatprep.subr.mxu0 0.0
      %2541 = vmatpush1.msra.mxu0 0.0
      %2542 = vmatprep.subr.mxu0 0.0
      %2543 = vmatpush1.msra.mxu0 0.0
      %2544 = vmatprep.subr.mxu0 0.0
      %2545 = vmatpush1.msra.mxu0 0.0
      %2546 = vmatprep.subr.mxu0 0.0
      %2547 = vmatpush1.msra.mxu0 0.0
      %2548 = vmatprep.subr.mxu0 0.0
      %2549 = vmatpush1.msra.mxu0 0.0
      %2550 = vmatprep.subr.mxu0 0.0
      %2551 = vmatpush1.msra.mxu0 0.0
      %2552 = vmatprep.subr.mxu0 0.0
      %2553 = vmatpush1.msra.mxu0 0.0
      %2554 = vmatprep.subr.mxu0 0.0
      %2555 = vmatpush1.msra.mxu0 0.0
      %2556 = vmatprep.subr.mxu0 0.0
      %2557 = vmatpush1.msra.mxu0 0.0
      %2558 = vmatprep.subr.mxu0 0.0
      %2559 = vmatpush1.msra.mxu0 0.0
      %2560 = vmatprep.subr.mxu0 0.0
      %2561 = vmatpush1.msra.mxu0 0.0
      %2562 = vmatprep.subr.mxu0 0.0
      %2563 = vmatpush1.msra.mxu0 0.0
      %2564 = vmatprep.subr.mxu0 0.0
      %2565 = vmatpush1.msra.mxu0 0.0
      %2566 = vmatprep.subr.mxu0 0.0
      %2567 = vmatpush1.msra.mxu0 0.0
      %2568 = vmatprep.subr.mxu0 0.0
      %2569 = vmatpush1.msra.mxu0 0.0
      %2570 = vmatprep.subr.mxu0 0.0
      %2571 = vmatpush1.msra.mxu0 0.0
      %2572 = vmatprep.subr.mxu0 0.0
      %2573 = vmatpush1.msra.mxu0 0.0
      %2574 = vmatprep.subr.mxu0 0.0
      %2575 = vmatpush1.msra.mxu0 0.0
      %2576 = vmatprep.subr.mxu0 0.0
      %2577 = vmatpush1.msra.mxu0 0.0
      %2578 = vmatprep.subr.mxu0 0.0
      %2579 = vmatpush1.msra.mxu0 0.0
      %2580 = vmatprep.mubr.f32.mxu0 0.0
      %2581 = vmatmul.mubr.f32.gmra.mrb[0].mxu0 %v2512
      %v2582 = vpop.f32.mrb[0].mxu0
      %v2583 = vadd.f32 0.0, %v2582
      %v2584 = vpop.f32.mrb[0].mxu0
      %2585 = vmatprep.mubr.f32.mxu0 0.0
      %2586 = vmatmul.mubr.f32.gmra.mrb[0].mxu0 %v2514
      %v2587 = vpop.f32.mrb[0].mxu0
      %v2588 = vadd.f32 0.0, %v2587
      %v2589 = vpop.f32.mrb[0].mxu0
      %2590 = vdwg.mxu0
      %v2591 = vadd.f32 %v2497, %v2583
      %v2592 = vadd.f32 %v2502, %v2588
      %v2593 = vld [vmem:[%s3 + $0x7] sm:$0x1]
      %v2594 = vlaneseq
      %v2595 = vshrl.u32 %v2594, 7
      %v2596 = vsub.s32 0, %v2595
      %v2597 = vrot.slane %v2593, %v2596
      %v2598 = vadd.f32 %v2591, %v2597
      %v2599 = vadd.f32 %v2592, %v2597
      %vm2600 = vcmp.gt.f32.partialorder %v2598, 0.0
      %vm2601 = vcmp.gt.f32.partialorder %v2599, 0.0
      %v2602 = vmul.f32 %v2598, 1.442695
      %v2603 = vpow.pop %v2602
      %v2604 = vmul.f32 %v2599, 1.442695
      %v2605 = vpow.pop %v2604
      %v2606 = vsub.f32 %v2603, 1.0
      %v2607 = vsub.f32 %v2605, 1.0
      %v2608 = vsel %vm2600, %v2598, %v2606
      %v2609 = vsel %vm2601, %v2599, %v2607
      %v2610 = vld [vmem:[%s2 + $0x160] sm:$0xff]
      %v2611 = vld [vmem:[%s3 + $0x8] sm:$0x1]
      %v2612 = vlaneseq
      %v2613 = vshrl.u32 %v2612, 7
      %v2614 = vsub.s32 0, %v2613
      %v2615 = vrot.slane %v2611, %v2614
      %v2617 = vsel %vm1146, %v2608, 0
      %v2620 = vsel %vm1146, %v2609, 0
      %2622 = vmatprep.subr.mxu0 0.0
      %2623 = vmatpush1.msra.mxu0 %v2610
      %2624 = vmatprep.subr.mxu0 0.0
      %2625 = vmatpush1.msra.mxu0 0.0
      %2626 = vmatprep.subr.mxu0 0.0
      %2627 = vmatpush1.msra.mxu0 0.0
      %2628 = vmatprep.subr.mxu0 0.0
      %2629 = vmatpush1.msra.mxu0 0.0
      %2630 = vmatprep.subr.mxu0 0.0
      %2631 = vmatpush1.msra.mxu0 0.0
      %2632 = vmatprep.subr.mxu0 0.0
      %2633 = vmatpush1.msra.mxu0 0.0
      %2634 = vmatprep.subr.mxu0 0.0
      %2635 = vmatpush1.msra.mxu0 0.0
      %2636 = vmatprep.subr.mxu0 0.0
      %2637 = vmatpush1.msra.mxu0 0.0
      %2638 = vmatprep.subr.mxu0 0.0
      %2639 = vmatpush1.msra.mxu0 0.0
      %2640 = vmatprep.subr.mxu0 0.0
      %2641 = vmatpush1.msra.mxu0 0.0
      %2642 = vmatprep.subr.mxu0 0.0
      %2643 = vmatpush1.msra.mxu0 0.0
      %2644 = vmatprep.subr.mxu0 0.0
      %2645 = vmatpush1.msra.mxu0 0.0
      %2646 = vmatprep.subr.mxu0 0.0
      %2647 = vmatpush1.msra.mxu0 0.0
      %2648 = vmatprep.subr.mxu0 0.0
      %2649 = vmatpush1.msra.mxu0 0.0
      %2650 = vmatprep.subr.mxu0 0.0
      %2651 = vmatpush1.msra.mxu0 0.0
      %2652 = vmatprep.subr.mxu0 0.0
      %2653 = vmatpush1.msra.mxu0 0.0
      %2654 = vmatprep.subr.mxu0 0.0
      %2655 = vmatpush1.msra.mxu0 0.0
      %2656 = vmatprep.subr.mxu0 0.0
      %2657 = vmatpush1.msra.mxu0 0.0
      %2658 = vmatprep.subr.mxu0 0.0
      %2659 = vmatpush1.msra.mxu0 0.0
      %2660 = vmatprep.subr.mxu0 0.0
      %2661 = vmatpush1.msra.mxu0 0.0
      %2662 = vmatprep.subr.mxu0 0.0
      %2663 = vmatpush1.msra.mxu0 0.0
      %2664 = vmatprep.subr.mxu0 0.0
      %2665 = vmatpush1.msra.mxu0 0.0
      %2666 = vmatprep.subr.mxu0 0.0
      %2667 = vmatpush1.msra.mxu0 0.0
      %2668 = vmatprep.subr.mxu0 0.0
      %2669 = vmatpush1.msra.mxu0 0.0
      %2670 = vmatprep.subr.mxu0 0.0
      %2671 = vmatpush1.msra.mxu0 0.0
      %2672 = vmatprep.subr.mxu0 0.0
      %2673 = vmatpush1.msra.mxu0 0.0
      %2674 = vmatprep.subr.mxu0 0.0
      %2675 = vmatpush1.msra.mxu0 0.0
      %2676 = vmatprep.subr.mxu0 0.0
      %2677 = vmatpush1.msra.mxu0 0.0
      %2678 = vmatprep.subr.mxu0 0.0
      %2679 = vmatpush1.msra.mxu0 0.0
      %2680 = vmatprep.subr.mxu0 0.0
      %2681 = vmatpush1.msra.mxu0 0.0
      %2682 = vmatprep.subr.mxu0 0.0
      %2683 = vmatpush1.msra.mxu0 0.0
      %2684 = vmatprep.subr.mxu0 0.0
      %2685 = vmatpush1.msra.mxu0 0.0
      %2686 = vmatprep.mubr.f32.mxu0 0.0
      %2687 = vmatmul.mubr.f32.gmra.mrb[0].mxu0 %v2617
      %v2688 = vpop.f32.mrb[0].mxu0
      %v2689 = vadd.f32 %v2615, %v2688
      %v2690 = vpop.f32.mrb[0].mxu0
      %2691 = vmatprep.mubr.f32.mxu0 0.0
      %2692 = vmatmul.mubr.f32.gmra.mrb[0].mxu0 %v2620
      %v2693 = vpop.f32.mrb[0].mxu0
      %v2694 = vadd.f32 %v2615, %v2693
      %v2695 = vpop.f32.mrb[0].mxu0
      %2696 = vdwg.mxu0
      %v2697 = vadd.f32 %v2689, %v2243
      %v2698 = vadd.f32 %v2694, %v2244
      %vm2699 = vcmp.gt.f32.partialorder %v2697, 0.0
      %vm2700 = vcmp.gt.f32.partialorder %v2698, 0.0
      %v2701 = vmul.f32 %v2697, 1.442695
      %v2702 = vpow.pop %v2701
      %v2703 = vmul.f32 %v2698, 1.442695
      %v2704 = vpow.pop %v2703
      %v2705 = vsub.f32 %v2702, 1.0
      %v2706 = vsub.f32 %v2704, 1.0
      %v2707 = vsel %vm2699, %v2697, %v2705
      %v2708 = vsel %vm2700, %v2698, %v2706
      %2709 = vmatprep.subr.mxu0 0.0
      %2710 = vmatpush1.msra.mxu0 %v2707
      %2711 = vmatprep.subr.mxu0 0.0
      %2712 = vmatpush1.msra.mxu0 %v2708
      %2713 = vmatprep.subr.mxu0 0.0
      %2714 = vmatpush1.msra.mxu0 0.0
      %2715 = vmatprep.subr.mxu0 0.0
      %2716 = vmatpush1.msra.mxu0 0.0
      %2717 = vmatprep.subr.mxu0 0.0
      %2718 = vmatpush1.msra.mxu0 0.0
      %2719 = vmatprep.subr.mxu0 0.0
      %2720 = vmatpush1.msra.mxu0 0.0
      %2721 = vmatprep.subr.mxu0 0.0
      %2722 = vmatpush1.msra.mxu0 0.0
      %2723 = vmatprep.subr.mxu0 0.0
      %2724 = vmatpush1.msra.mxu0 0.0
      %2725 = vmatprep.subr.mxu0 0.0
      %2726 = vmatpush1.msra.mxu0 0.0
      %2727 = vmatprep.subr.mxu0 0.0
      %2728 = vmatpush1.msra.mxu0 0.0
      %2729 = vmatprep.subr.mxu0 0.0
      %2730 = vmatpush1.msra.mxu0 0.0
      %2731 = vmatprep.subr.mxu0 0.0
      %2732 = vmatpush1.msra.mxu0 0.0
      %2733 = vmatprep.subr.mxu0 0.0
      %2734 = vmatpush1.msra.mxu0 0.0
      %2735 = vmatprep.subr.mxu0 0.0
      %2736 = vmatpush1.msra.mxu0 0.0
      %2737 = vmatprep.subr.mxu0 0.0
      %2738 = vmatpush1.msra.mxu0 0.0
      %2739 = vmatprep.subr.mxu0 0.0
      %2740 = vmatpush1.msra.mxu0 0.0
      %2741 = vmatprep.subr.mxu0 0.0
      %2742 = vmatpush1.msra.mxu0 0.0
      %2743 = vmatprep.subr.mxu0 0.0
      %2744 = vmatpush1.msra.mxu0 0.0
      %2745 = vmatprep.subr.mxu0 0.0
      %2746 = vmatpush1.msra.mxu0 0.0
      %2747 = vmatprep.subr.mxu0 0.0
      %2748 = vmatpush1.msra.mxu0 0.0
      %2749 = vmatprep.subr.mxu0 0.0
      %2750 = vmatpush1.msra.mxu0 0.0
      %2751 = vmatprep.subr.mxu0 0.0
      %2752 = vmatpush1.msra.mxu0 0.0
      %2753 = vmatprep.subr.mxu0 0.0
      %2754 = vmatpush1.msra.mxu0 0.0
      %2755 = vmatprep.subr.mxu0 0.0
      %2756 = vmatpush1.msra.mxu0 0.0
      %2757 = vmatprep.subr.mxu0 0.0
      %2758 = vmatpush1.msra.mxu0 0.0
      %2759 = vmatprep.subr.mxu0 0.0
      %2760 = vmatpush1.msra.mxu0 0.0
      %2761 = vmatprep.subr.mxu0 0.0
      %2762 = vmatpush1.msra.mxu0 0.0
      %2763 = vmatprep.subr.mxu0 0.0
      %2764 = vmatpush1.msra.mxu0 0.0
      %2765 = vmatprep.subr.mxu0 0.0
      %2766 = vmatpush1.msra.mxu0 0.0
      %2767 = vmatprep.subr.mxu0 0.0
      %2768 = vmatpush1.msra.mxu0 0.0
      %2769 = vmatprep.subr.mxu0 0.0
      %2770 = vmatpush1.msra.mxu0 0.0
      %2771 = vmatprep.subr.mxu0 0.0
      %2772 = vmatpush1.msra.mxu0 0.0
      %2773 = vmatprep.mubr.f32.mxu0 0.0
      %2774 = vmatmul.mubr.f32.gmra.mrb[0].mxu0 %v1516
      %v2775 = vpop.f32.mrb[0].mxu0
      %v2776 = vadd.f32 0.0, %v2775
      %v2777 = vpop.f32.mrb[0].mxu0
      %2778 = vmatprep.mubr.f32.mxu0 0.0
      %2779 = vmatmul.mubr.f32.gmra.mrb[0].mxu0 %v1519
      %v2780 = vpop.f32.mrb[0].mxu0
      %v2781 = vadd.f32 0.0, %v2780
      %v2782 = vpop.f32.mrb[0].mxu0
      %2783 = vmatprep.mubr.f32.mxu0 0.0
      %2784 = vmatmul.mubr.f32.gmra.mrb[0].mxu0 %v1522
      %v2785 = vpop.f32.mrb[0].mxu0
      %v2786 = vadd.f32 0.0, %v2785
      %v2787 = vpop.f32.mrb[0].mxu0
      %2788 = vdwg.mxu0
      %v2789 = vld [vmem:[%s2 + $0x168] sm:$0xff]
      %v2790 = vld [vmem:[%s2 + $0x170] sm:$0xff]
      %v2791 = vld [vmem:[%s2 + $0x178] sm:$0xff]
      %v2792 = vld [vmem:[%s2 + $0x180] sm:$0xff]
      %v2796 = vrot.slane %v2776, 2
      %v2797 = vrot.slane %v2781, 2
      %v2798 = vsel %vm585, %v2796, %v2797
      %v2799 = vrot.slane %v2786, 2
      %v2800 = vsel %vm585, %v2797, %v2799
      %v2801 = vsel %vm322, %v2798, 0
      %v2803 = vsel %vm322, %v2800, 0
      %2805 = vmatprep.subr.mxu0 0.0
      %2806 = vmatpush1.msra.mxu0 %v2791
      %2807 = vmatprep.subr.mxu0 0.0
      %2808 = vmatpush1.msra.mxu0 %v2792
      %2809 = vmatprep.subr.mxu0 0.0
      %2810 = vmatpush1.msra.mxu0 0.0
      %2811 = vmatprep.subr.mxu0 0.0
      %2812 = vmatpush1.msra.mxu0 0.0
      %2813 = vmatprep.subr.mxu0 0.0
      %2814 = vmatpush1.msra.mxu0 0.0
      %2815 = vmatprep.subr.mxu0 0.0
      %2816 = vmatpush1.msra.mxu0 0.0
      %2817 = vmatprep.subr.mxu0 0.0
      %2818 = vmatpush1.msra.mxu0 0.0
      %2819 = vmatprep.subr.mxu0 0.0
      %2820 = vmatpush1.msra.mxu0 0.0
      %2821 = vmatprep.subr.mxu0 0.0
      %2822 = vmatpush1.msra.mxu0 0.0
      %2823 = vmatprep.subr.mxu0 0.0
      %2824 = vmatpush1.msra.mxu0 0.0
      %2825 = vmatprep.subr.mxu0 0.0
      %2826 = vmatpush1.msra.mxu0 0.0
      %2827 = vmatprep.subr.mxu0 0.0
      %2828 = vmatpush1.msra.mxu0 0.0
      %2829 = vmatprep.subr.mxu0 0.0
      %2830 = vmatpush1.msra.mxu0 0.0
      %2831 = vmatprep.subr.mxu0 0.0
      %2832 = vmatpush1.msra.mxu0 0.0
      %2833 = vmatprep.subr.mxu0 0.0
      %2834 = vmatpush1.msra.mxu0 0.0
      %2835 = vmatprep.subr.mxu0 0.0
      %2836 = vmatpush1.msra.mxu0 0.0
      %2837 = vmatprep.subr.mxu0 0.0
      %2838 = vmatpush1.msra.mxu0 0.0
      %2839 = vmatprep.subr.mxu0 0.0
      %2840 = vmatpush1.msra.mxu0 0.0
      %2841 = vmatprep.subr.mxu0 0.0
      %2842 = vmatpush1.msra.mxu0 0.0
      %2843 = vmatprep.subr.mxu0 0.0
      %2844 = vmatpush1.msra.mxu0 0.0
      %2845 = vmatprep.subr.mxu0 0.0
      %2846 = vmatpush1.msra.mxu0 0.0
      %2847 = vmatprep.subr.mxu0 0.0
      %2848 = vmatpush1.msra.mxu0 0.0
      %2849 = vmatprep.subr.mxu0 0.0
      %2850 = vmatpush1.msra.mxu0 0.0
      %2851 = vmatprep.subr.mxu0 0.0
      %2852 = vmatpush1.msra.mxu0 0.0
      %2853 = vmatprep.subr.mxu0 0.0
      %2854 = vmatpush1.msra.mxu0 0.0
      %2855 = vmatprep.subr.mxu0 0.0
      %2856 = vmatpush1.msra.mxu0 0.0
      %2857 = vmatprep.subr.mxu0 0.0
      %2858 = vmatpush1.msra.mxu0 0.0
      %2859 = vmatprep.subr.mxu0 0.0
      %2860 = vmatpush1.msra.mxu0 0.0
      %2861 = vmatprep.subr.mxu0 0.0
      %2862 = vmatpush1.msra.mxu0 0.0
      %2863 = vmatprep.subr.mxu0 0.0
      %2864 = vmatpush1.msra.mxu0 0.0
      %2865 = vmatprep.subr.mxu0 0.0
      %2866 = vmatpush1.msra.mxu0 0.0
      %2867 = vmatprep.subr.mxu0 0.0
      %2868 = vmatpush1.msra.mxu0 0.0
      %2869 = vmatprep.mubr.f32.mxu0 0.0
      %2870 = vmatmul.mubr.f32.gmra.mrb[0].mxu0 %v2801
      %v2871 = vpop.f32.mrb[0].mxu0
      %v2872 = vadd.f32 0.0, %v2871
      %v2873 = vpop.f32.mrb[0].mxu0
      %2874 = vmatprep.mubr.f32.mxu0 0.0
      %2875 = vmatmul.mubr.f32.gmra.mrb[0].mxu0 %v2803
      %v2876 = vpop.f32.mrb[0].mxu0
      %v2877 = vadd.f32 0.0, %v2876
      %v2878 = vpop.f32.mrb[0].mxu0
      %2879 = vdwg.mxu0
      %v2880 = vsel %vm322, %v2776, 0
      %v2882 = vsel %vm322, %v2781, 0
      %2884 = vmatprep.subr.mxu0 0.0
      %2885 = vmatpush1.msra.mxu0 %v2789
      %2886 = vmatprep.subr.mxu0 0.0
      %2887 = vmatpush1.msra.mxu0 %v2790
      %2888 = vmatprep.subr.mxu0 0.0
      %2889 = vmatpush1.msra.mxu0 0.0
      %2890 = vmatprep.subr.mxu0 0.0
      %2891 = vmatpush1.msra.mxu0 0.0
      %2892 = vmatprep.subr.mxu0 0.0
      %2893 = vmatpush1.msra.mxu0 0.0
      %2894 = vmatprep.subr.mxu0 0.0
      %2895 = vmatpush1.msra.mxu0 0.0
      %2896 = vmatprep.subr.mxu0 0.0
      %2897 = vmatpush1.msra.mxu0 0.0
      %2898 = vmatprep.subr.mxu0 0.0
      %2899 = vmatpush1.msra.mxu0 0.0
      %2900 = vmatprep.subr.mxu0 0.0
      %2901 = vmatpush1.msra.mxu0 0.0
      %2902 = vmatprep.subr.mxu0 0.0
      %2903 = vmatpush1.msra.mxu0 0.0
      %2904 = vmatprep.subr.mxu0 0.0
      %2905 = vmatpush1.msra.mxu0 0.0
      %2906 = vmatprep.subr.mxu0 0.0
      %2907 = vmatpush1.msra.mxu0 0.0
      %2908 = vmatprep.subr.mxu0 0.0
      %2909 = vmatpush1.msra.mxu0 0.0
      %2910 = vmatprep.subr.mxu0 0.0
      %2911 = vmatpush1.msra.mxu0 0.0
      %2912 = vmatprep.subr.mxu0 0.0
      %2913 = vmatpush1.msra.mxu0 0.0
      %2914 = vmatprep.subr.mxu0 0.0
      %2915 = vmatpush1.msra.mxu0 0.0
      %2916 = vmatprep.subr.mxu0 0.0
      %2917 = vmatpush1.msra.mxu0 0.0
      %2918 = vmatprep.subr.mxu0 0.0
      %2919 = vmatpush1.msra.mxu0 0.0
      %2920 = vmatprep.subr.mxu0 0.0
      %2921 = vmatpush1.msra.mxu0 0.0
      %2922 = vmatprep.subr.mxu0 0.0
      %2923 = vmatpush1.msra.mxu0 0.0
      %2924 = vmatprep.subr.mxu0 0.0
      %2925 = vmatpush1.msra.mxu0 0.0
      %2926 = vmatprep.subr.mxu0 0.0
      %2927 = vmatpush1.msra.mxu0 0.0
      %2928 = vmatprep.subr.mxu0 0.0
      %2929 = vmatpush1.msra.mxu0 0.0
      %2930 = vmatprep.subr.mxu0 0.0
      %2931 = vmatpush1.msra.mxu0 0.0
      %2932 = vmatprep.subr.mxu0 0.0
      %2933 = vmatpush1.msra.mxu0 0.0
      %2934 = vmatprep.subr.mxu0 0.0
      %2935 = vmatpush1.msra.mxu0 0.0
      %2936 = vmatprep.subr.mxu0 0.0
      %2937 = vmatpush1.msra.mxu0 0.0
      %2938 = vmatprep.subr.mxu0 0.0
      %2939 = vmatpush1.msra.mxu0 0.0
      %2940 = vmatprep.subr.mxu0 0.0
      %2941 = vmatpush1.msra.mxu0 0.0
      %2942 = vmatprep.subr.mxu0 0.0
      %2943 = vmatpush1.msra.mxu0 0.0
      %2944 = vmatprep.subr.mxu0 0.0
      %2945 = vmatpush1.msra.mxu0 0.0
      %2946 = vmatprep.subr.mxu0 0.0
      %2947 = vmatpush1.msra.mxu0 0.0
      %2948 = vmatprep.mubr.f32.mxu0 0.0
      %2949 = vmatmul.mubr.f32.gmra.mrb[0].mxu0 %v2880
      %v2950 = vpop.f32.mrb[0].mxu0
      %v2951 = vadd.f32 %v2872, %v2950
      %v2952 = vpop.f32.mrb[0].mxu0
      %2953 = vmatprep.mubr.f32.mxu0 0.0
      %2954 = vmatmul.mubr.f32.gmra.mrb[0].mxu0 %v2882
      %v2955 = vpop.f32.mrb[0].mxu0
      %v2956 = vadd.f32 %v2877, %v2955
      %v2957 = vpop.f32.mrb[0].mxu0
      %2958 = vdwg.mxu0
      %v2959 = vld [vmem:[%s2 + $0x188] sm:$0xff]
      %v2960 = vld [vmem:[%s2 + $0x190] sm:$0xff]
      %v2961 = vrot.slane %v2776, 4
      %v2962 = vrot.slane %v2781, 4
      %v2963 = vsel %vm229, %v2961, %v2962
      %v2964 = vrot.slane %v2786, 4
      %v2965 = vsel %vm229, %v2962, %v2964
      %v2966 = vsel %vm322, %v2963, 0
      %v2968 = vsel %vm322, %v2965, 0
      %2970 = vmatprep.subr.mxu0 0.0
      %2971 = vmatpush1.msra.mxu0 %v2959
      %2972 = vmatprep.subr.mxu0 0.0
      %2973 = vmatpush1.msra.mxu0 %v2960
      %2974 = vmatprep.subr.mxu0 0.0
      %2975 = vmatpush1.msra.mxu0 0.0
      %2976 = vmatprep.subr.mxu0 0.0
      %2977 = vmatpush1.msra.mxu0 0.0
      %2978 = vmatprep.subr.mxu0 0.0
      %2979 = vmatpush1.msra.mxu0 0.0
      %2980 = vmatprep.subr.mxu0 0.0
      %2981 = vmatpush1.msra.mxu0 0.0
      %2982 = vmatprep.subr.mxu0 0.0
      %2983 = vmatpush1.msra.mxu0 0.0
      %2984 = vmatprep.subr.mxu0 0.0
      %2985 = vmatpush1.msra.mxu0 0.0
      %2986 = vmatprep.subr.mxu0 0.0
      %2987 = vmatpush1.msra.mxu0 0.0
      %2988 = vmatprep.subr.mxu0 0.0
      %2989 = vmatpush1.msra.mxu0 0.0
      %2990 = vmatprep.subr.mxu0 0.0
      %2991 = vmatpush1.msra.mxu0 0.0
      %2992 = vmatprep.subr.mxu0 0.0
      %2993 = vmatpush1.msra.mxu0 0.0
      %2994 = vmatprep.subr.mxu0 0.0
      %2995 = vmatpush1.msra.mxu0 0.0
      %2996 = vmatprep.subr.mxu0 0.0
      %2997 = vmatpush1.msra.mxu0 0.0
      %2998 = vmatprep.subr.mxu0 0.0
      %2999 = vmatpush1.msra.mxu0 0.0
      %3000 = vmatprep.subr.mxu0 0.0
      %3001 = vmatpush1.msra.mxu0 0.0
      %3002 = vmatprep.subr.mxu0 0.0
      %3003 = vmatpush1.msra.mxu0 0.0
      %3004 = vmatprep.subr.mxu0 0.0
      %3005 = vmatpush1.msra.mxu0 0.0
      %3006 = vmatprep.subr.mxu0 0.0
      %3007 = vmatpush1.msra.mxu0 0.0
      %3008 = vmatprep.subr.mxu0 0.0
      %3009 = vmatpush1.msra.mxu0 0.0
      %3010 = vmatprep.subr.mxu0 0.0
      %3011 = vmatpush1.msra.mxu0 0.0
      %3012 = vmatprep.subr.mxu0 0.0
      %3013 = vmatpush1.msra.mxu0 0.0
      %3014 = vmatprep.subr.mxu0 0.0
      %3015 = vmatpush1.msra.mxu0 0.0
      %3016 = vmatprep.subr.mxu0 0.0
      %3017 = vmatpush1.msra.mxu0 0.0
      %3018 = vmatprep.subr.mxu0 0.0
      %3019 = vmatpush1.msra.mxu0 0.0
      %3020 = vmatprep.subr.mxu0 0.0
      %3021 = vmatpush1.msra.mxu0 0.0
      %3022 = vmatprep.subr.mxu0 0.0
      %3023 = vmatpush1.msra.mxu0 0.0
      %3024 = vmatprep.subr.mxu0 0.0
      %3025 = vmatpush1.msra.mxu0 0.0
      %3026 = vmatprep.subr.mxu0 0.0
      %3027 = vmatpush1.msra.mxu0 0.0
      %3028 = vmatprep.subr.mxu0 0.0
      %3029 = vmatpush1.msra.mxu0 0.0
      %3030 = vmatprep.subr.mxu0 0.0
      %3031 = vmatpush1.msra.mxu0 0.0
      %3032 = vmatprep.subr.mxu0 0.0
      %3033 = vmatpush1.msra.mxu0 0.0
      %3034 = vmatprep.mubr.f32.mxu0 0.0
      %3035 = vmatmul.mubr.f32.gmra.mrb[0].mxu0 %v2966
      %v3036 = vpop.f32.mrb[0].mxu0
      %v3037 = vadd.f32 0.0, %v3036
      %v3038 = vpop.f32.mrb[0].mxu0
      %3039 = vmatprep.mubr.f32.mxu0 0.0
      %3040 = vmatmul.mubr.f32.gmra.mrb[0].mxu0 %v2968
      %v3041 = vpop.f32.mrb[0].mxu0
      %v3042 = vadd.f32 0.0, %v3041
      %v3043 = vpop.f32.mrb[0].mxu0
      %3044 = vdwg.mxu0
      %v3045 = vadd.f32 %v2951, %v3037
      %v3046 = vadd.f32 %v2956, %v3042
      %v3047 = vld [vmem:[%s3 + $0x9] sm:$0x1]
      %v3048 = vlaneseq
      %v3049 = vshrl.u32 %v3048, 7
      %v3050 = vsub.s32 0, %v3049
      %v3051 = vrot.slane %v3047, %v3050
      %v3052 = vadd.f32 %v3045, %v3051
      %v3053 = vadd.f32 %v3046, %v3051
      %vm3054 = vcmp.gt.f32.partialorder %v3052, 0.0
      %vm3055 = vcmp.gt.f32.partialorder %v3053, 0.0
      %v3056 = vmul.f32 %v3052, 1.442695
      %v3057 = vpow.pop %v3056
      %v3058 = vmul.f32 %v3053, 1.442695
      %v3059 = vpow.pop %v3058
      %v3060 = vsub.f32 %v3057, 1.0
      %v3061 = vsub.f32 %v3059, 1.0
      %v3062 = vsel %vm3054, %v3052, %v3060
      %v3063 = vsel %vm3055, %v3053, %v3061
      %v3064 = vld [vmem:[%s2 + $0x198] sm:$0xff]
      %v3065 = vld [vmem:[%s3 + $0xa] sm:$0x1]
      %v3066 = vlaneseq
      %v3067 = vshrl.u32 %v3066, 7
      %v3068 = vsub.s32 0, %v3067
      %v3069 = vrot.slane %v3065, %v3068
      %v3071 = vsel %vm1146, %v3062, 0
      %v3074 = vsel %vm1146, %v3063, 0
      %3076 = vmatprep.subr.mxu0 0.0
      %3077 = vmatpush1.msra.mxu0 %v3064
      %3078 = vmatprep.subr.mxu0 0.0
      %3079 = vmatpush1.msra.mxu0 0.0
      %3080 = vmatprep.subr.mxu0 0.0
      %3081 = vmatpush1.msra.mxu0 0.0
      %3082 = vmatprep.subr.mxu0 0.0
      %3083 = vmatpush1.msra.mxu0 0.0
      %3084 = vmatprep.subr.mxu0 0.0
      %3085 = vmatpush1.msra.mxu0 0.0
      %3086 = vmatprep.subr.mxu0 0.0
      %3087 = vmatpush1.msra.mxu0 0.0
      %3088 = vmatprep.subr.mxu0 0.0
      %3089 = vmatpush1.msra.mxu0 0.0
      %3090 = vmatprep.subr.mxu0 0.0
      %3091 = vmatpush1.msra.mxu0 0.0
      %3092 = vmatprep.subr.mxu0 0.0
      %3093 = vmatpush1.msra.mxu0 0.0
      %3094 = vmatprep.subr.mxu0 0.0
      %3095 = vmatpush1.msra.mxu0 0.0
      %3096 = vmatprep.subr.mxu0 0.0
      %3097 = vmatpush1.msra.mxu0 0.0
      %3098 = vmatprep.subr.mxu0 0.0
      %3099 = vmatpush1.msra.mxu0 0.0
      %3100 = vmatprep.subr.mxu0 0.0
      %3101 = vmatpush1.msra.mxu0 0.0
      %3102 = vmatprep.subr.mxu0 0.0
      %3103 = vmatpush1.msra.mxu0 0.0
      %3104 = vmatprep.subr.mxu0 0.0
      %3105 = vmatpush1.msra.mxu0 0.0
      %3106 = vmatprep.subr.mxu0 0.0
      %3107 = vmatpush1.msra.mxu0 0.0
      %3108 = vmatprep.subr.mxu0 0.0
      %3109 = vmatpush1.msra.mxu0 0.0
      %3110 = vmatprep.subr.mxu0 0.0
      %3111 = vmatpush1.msra.mxu0 0.0
      %3112 = vmatprep.subr.mxu0 0.0
      %3113 = vmatpush1.msra.mxu0 0.0
      %3114 = vmatprep.subr.mxu0 0.0
      %3115 = vmatpush1.msra.mxu0 0.0
      %3116 = vmatprep.subr.mxu0 0.0
      %3117 = vmatpush1.msra.mxu0 0.0
      %3118 = vmatprep.subr.mxu0 0.0
      %3119 = vmatpush1.msra.mxu0 0.0
      %3120 = vmatprep.subr.mxu0 0.0
      %3121 = vmatpush1.msra.mxu0 0.0
      %3122 = vmatprep.subr.mxu0 0.0
      %3123 = vmatpush1.msra.mxu0 0.0
      %3124 = vmatprep.subr.mxu0 0.0
      %3125 = vmatpush1.msra.mxu0 0.0
      %3126 = vmatprep.subr.mxu0 0.0
      %3127 = vmatpush1.msra.mxu0 0.0
      %3128 = vmatprep.subr.mxu0 0.0
      %3129 = vmatpush1.msra.mxu0 0.0
      %3130 = vmatprep.subr.mxu0 0.0
      %3131 = vmatpush1.msra.mxu0 0.0
      %3132 = vmatprep.subr.mxu0 0.0
      %3133 = vmatpush1.msra.mxu0 0.0
      %3134 = vmatprep.subr.mxu0 0.0
      %3135 = vmatpush1.msra.mxu0 0.0
      %3136 = vmatprep.subr.mxu0 0.0
      %3137 = vmatpush1.msra.mxu0 0.0
      %3138 = vmatprep.subr.mxu0 0.0
      %3139 = vmatpush1.msra.mxu0 0.0
      %3140 = vmatprep.mubr.f32.mxu0 0.0
      %3141 = vmatmul.mubr.f32.gmra.mrb[0].mxu0 %v3071
      %v3142 = vpop.f32.mrb[0].mxu0
      %v3143 = vadd.f32 %v3069, %v3142
      %v3144 = vpop.f32.mrb[0].mxu0
      %3145 = vmatprep.mubr.f32.mxu0 0.0
      %3146 = vmatmul.mubr.f32.gmra.mrb[0].mxu0 %v3074
      %v3147 = vpop.f32.mrb[0].mxu0
      %v3148 = vadd.f32 %v3069, %v3147
      %v3149 = vpop.f32.mrb[0].mxu0
      %3150 = vdwg.mxu0
      %v3151 = vadd.f32 %v3143, %v2697
      %v3152 = vadd.f32 %v3148, %v2698
      %vm3153 = vcmp.gt.f32.partialorder %v3151, 0.0
      %vm3154 = vcmp.gt.f32.partialorder %v3152, 0.0
      %v3155 = vmul.f32 %v3151, 1.442695
      %v3156 = vpow.pop %v3155
      %v3157 = vmul.f32 %v3152, 1.442695
      %v3158 = vpow.pop %v3157
      %v3159 = vsub.f32 %v3156, 1.0
      %v3160 = vsub.f32 %v3158, 1.0
      %v3161 = vsel %vm3153, %v3151, %v3159
      %v3162 = vsel %vm3154, %v3152, %v3160
      %3163 = vmatprep.subr.mxu0 0.0
      %3164 = vmatpush1.msra.mxu0 %v3161
      %3165 = vmatprep.subr.mxu0 0.0
      %3166 = vmatpush1.msra.mxu0 %v3162
      %3167 = vmatprep.subr.mxu0 0.0
      %3168 = vmatpush1.msra.mxu0 0.0
      %3169 = vmatprep.subr.mxu0 0.0
      %3170 = vmatpush1.msra.mxu0 0.0
      %3171 = vmatprep.subr.mxu0 0.0
      %3172 = vmatpush1.msra.mxu0 0.0
      %3173 = vmatprep.subr.mxu0 0.0
      %3174 = vmatpush1.msra.mxu0 0.0
      %3175 = vmatprep.subr.mxu0 0.0
      %3176 = vmatpush1.msra.mxu0 0.0
      %3177 = vmatprep.subr.mxu0 0.0
      %3178 = vmatpush1.msra.mxu0 0.0
      %3179 = vmatprep.subr.mxu0 0.0
      %3180 = vmatpush1.msra.mxu0 0.0
      %3181 = vmatprep.subr.mxu0 0.0
      %3182 = vmatpush1.msra.mxu0 0.0
      %3183 = vmatprep.subr.mxu0 0.0
      %3184 = vmatpush1.msra.mxu0 0.0
      %3185 = vmatprep.subr.mxu0 0.0
      %3186 = vmatpush1.msra.mxu0 0.0
      %3187 = vmatprep.subr.mxu0 0.0
      %3188 = vmatpush1.msra.mxu0 0.0
      %3189 = vmatprep.subr.mxu0 0.0
      %3190 = vmatpush1.msra.mxu0 0.0
      %3191 = vmatprep.subr.mxu0 0.0
      %3192 = vmatpush1.msra.mxu0 0.0
      %3193 = vmatprep.subr.mxu0 0.0
      %3194 = vmatpush1.msra.mxu0 0.0
      %3195 = vmatprep.subr.mxu0 0.0
      %3196 = vmatpush1.msra.mxu0 0.0
      %3197 = vmatprep.subr.mxu0 0.0
      %3198 = vmatpush1.msra.mxu0 0.0
      %3199 = vmatprep.subr.mxu0 0.0
      %3200 = vmatpush1.msra.mxu0 0.0
      %3201 = vmatprep.subr.mxu0 0.0
      %3202 = vmatpush1.msra.mxu0 0.0
      %3203 = vmatprep.subr.mxu0 0.0
      %3204 = vmatpush1.msra.mxu0 0.0
      %3205 = vmatprep.subr.mxu0 0.0
      %3206 = vmatpush1.msra.mxu0 0.0
      %3207 = vmatprep.subr.mxu0 0.0
      %3208 = vmatpush1.msra.mxu0 0.0
      %3209 = vmatprep.subr.mxu0 0.0
      %3210 = vmatpush1.msra.mxu0 0.0
      %3211 = vmatprep.subr.mxu0 0.0
      %3212 = vmatpush1.msra.mxu0 0.0
      %3213 = vmatprep.subr.mxu0 0.0
      %3214 = vmatpush1.msra.mxu0 0.0
      %3215 = vmatprep.subr.mxu0 0.0
      %3216 = vmatpush1.msra.mxu0 0.0
      %3217 = vmatprep.subr.mxu0 0.0
      %3218 = vmatpush1.msra.mxu0 0.0
      %3219 = vmatprep.subr.mxu0 0.0
      %3220 = vmatpush1.msra.mxu0 0.0
      %3221 = vmatprep.subr.mxu0 0.0
      %3222 = vmatpush1.msra.mxu0 0.0
      %3223 = vmatprep.subr.mxu0 0.0
      %3224 = vmatpush1.msra.mxu0 0.0
      %3225 = vmatprep.subr.mxu0 0.0
      %3226 = vmatpush1.msra.mxu0 0.0
      %3227 = vmatprep.mubr.f32.mxu0 0.0
      %3228 = vmatmul.mubr.f32.gmra.mrb[0].mxu0 %v1982
      %v3229 = vpop.f32.mrb[0].mxu0
      %v3230 = vadd.f32 0.0, %v3229
      %v3231 = vpop.f32.mrb[0].mxu0
      %3232 = vmatprep.mubr.f32.mxu0 0.0
      %3233 = vmatmul.mubr.f32.gmra.mrb[0].mxu0 %v1985
      %v3234 = vpop.f32.mrb[0].mxu0
      %v3235 = vadd.f32 0.0, %v3234
      %v3236 = vpop.f32.mrb[0].mxu0
      %3237 = vmatprep.mubr.f32.mxu0 0.0
      %3238 = vmatmul.mubr.f32.gmra.mrb[0].mxu0 %v1988
      %v3239 = vpop.f32.mrb[0].mxu0
      %v3240 = vadd.f32 0.0, %v3239
      %v3241 = vpop.f32.mrb[0].mxu0
      %3242 = vdwg.mxu0
      %v3243 = vld [vmem:[%s2 + $0x1a0] sm:$0xff]
      %v3244 = vld [vmem:[%s2 + $0x1a8] sm:$0xff]
      %v3245 = vld [vmem:[%s2 + $0x1b0] sm:$0xff]
      %v3246 = vld [vmem:[%s2 + $0x1b8] sm:$0xff]
      %v3250 = vrot.slane %v3230, 1
      %v3251 = vrot.slane %v3235, 1
      %v3252 = vsel %vm419, %v3250, %v3251
      %v3253 = vrot.slane %v3240, 1
      %v3254 = vsel %vm419, %v3251, %v3253
      %v3255 = vsel %vm322, %v3252, 0
      %v3257 = vsel %vm322, %v3254, 0
      %3259 = vmatprep.subr.mxu0 0.0
      %3260 = vmatpush1.msra.mxu0 %v3245
      %3261 = vmatprep.subr.mxu0 0.0
      %3262 = vmatpush1.msra.mxu0 %v3246
      %3263 = vmatprep.subr.mxu0 0.0
      %3264 = vmatpush1.msra.mxu0 0.0
      %3265 = vmatprep.subr.mxu0 0.0
      %3266 = vmatpush1.msra.mxu0 0.0
      %3267 = vmatprep.subr.mxu0 0.0
      %3268 = vmatpush1.msra.mxu0 0.0
      %3269 = vmatprep.subr.mxu0 0.0
      %3270 = vmatpush1.msra.mxu0 0.0
      %3271 = vmatprep.subr.mxu0 0.0
      %3272 = vmatpush1.msra.mxu0 0.0
      %3273 = vmatprep.subr.mxu0 0.0
      %3274 = vmatpush1.msra.mxu0 0.0
      %3275 = vmatprep.subr.mxu0 0.0
      %3276 = vmatpush1.msra.mxu0 0.0
      %3277 = vmatprep.subr.mxu0 0.0
      %3278 = vmatpush1.msra.mxu0 0.0
      %3279 = vmatprep.subr.mxu0 0.0
      %3280 = vmatpush1.msra.mxu0 0.0
      %3281 = vmatprep.subr.mxu0 0.0
      %3282 = vmatpush1.msra.mxu0 0.0
      %3283 = vmatprep.subr.mxu0 0.0
      %3284 = vmatpush1.msra.mxu0 0.0
      %3285 = vmatprep.subr.mxu0 0.0
      %3286 = vmatpush1.msra.mxu0 0.0
      %3287 = vmatprep.subr.mxu0 0.0
      %3288 = vmatpush1.msra.mxu0 0.0
      %3289 = vmatprep.subr.mxu0 0.0
      %3290 = vmatpush1.msra.mxu0 0.0
      %3291 = vmatprep.subr.mxu0 0.0
      %3292 = vmatpush1.msra.mxu0 0.0
      %3293 = vmatprep.subr.mxu0 0.0
      %3294 = vmatpush1.msra.mxu0 0.0
      %3295 = vmatprep.subr.mxu0 0.0
      %3296 = vmatpush1.msra.mxu0 0.0
      %3297 = vmatprep.subr.mxu0 0.0
      %3298 = vmatpush1.msra.mxu0 0.0
      %3299 = vmatprep.subr.mxu0 0.0
      %3300 = vmatpush1.msra.mxu0 0.0
      %3301 = vmatprep.subr.mxu0 0.0
      %3302 = vmatpush1.msra.mxu0 0.0
      %3303 = vmatprep.subr.mxu0 0.0
      %3304 = vmatpush1.msra.mxu0 0.0
      %3305 = vmatprep.subr.mxu0 0.0
      %3306 = vmatpush1.msra.mxu0 0.0
      %3307 = vmatprep.subr.mxu0 0.0
      %3308 = vmatpush1.msra.mxu0 0.0
      %3309 = vmatprep.subr.mxu0 0.0
      %3310 = vmatpush1.msra.mxu0 0.0
      %3311 = vmatprep.subr.mxu0 0.0
      %3312 = vmatpush1.msra.mxu0 0.0
      %3313 = vmatprep.subr.mxu0 0.0
      %3314 = vmatpush1.msra.mxu0 0.0
      %3315 = vmatprep.subr.mxu0 0.0
      %3316 = vmatpush1.msra.mxu0 0.0
      %3317 = vmatprep.subr.mxu0 0.0
      %3318 = vmatpush1.msra.mxu0 0.0
      %3319 = vmatprep.subr.mxu0 0.0
      %3320 = vmatpush1.msra.mxu0 0.0
      %3321 = vmatprep.subr.mxu0 0.0
      %3322 = vmatpush1.msra.mxu0 0.0
      %3323 = vmatprep.mubr.f32.mxu0 0.0
      %3324 = vmatmul.mubr.f32.gmra.mrb[0].mxu0 %v3255
      %v3325 = vpop.f32.mrb[0].mxu0
      %v3326 = vadd.f32 0.0, %v3325
      %v3327 = vpop.f32.mrb[0].mxu0
      %3328 = vmatprep.mubr.f32.mxu0 0.0
      %3329 = vmatmul.mubr.f32.gmra.mrb[0].mxu0 %v3257
      %v3330 = vpop.f32.mrb[0].mxu0
      %v3331 = vadd.f32 0.0, %v3330
      %v3332 = vpop.f32.mrb[0].mxu0
      %3333 = vdwg.mxu0
      %v3334 = vsel %vm322, %v3230, 0
      %v3336 = vsel %vm322, %v3235, 0
      %3338 = vmatprep.subr.mxu0 0.0
      %3339 = vmatpush1.msra.mxu0 %v3243
      %3340 = vmatprep.subr.mxu0 0.0
      %3341 = vmatpush1.msra.mxu0 %v3244
      %3342 = vmatprep.subr.mxu0 0.0
      %3343 = vmatpush1.msra.mxu0 0.0
      %3344 = vmatprep.subr.mxu0 0.0
      %3345 = vmatpush1.msra.mxu0 0.0
      %3346 = vmatprep.subr.mxu0 0.0
      %3347 = vmatpush1.msra.mxu0 0.0
      %3348 = vmatprep.subr.mxu0 0.0
      %3349 = vmatpush1.msra.mxu0 0.0
      %3350 = vmatprep.subr.mxu0 0.0
      %3351 = vmatpush1.msra.mxu0 0.0
      %3352 = vmatprep.subr.mxu0 0.0
      %3353 = vmatpush1.msra.mxu0 0.0
      %3354 = vmatprep.subr.mxu0 0.0
      %3355 = vmatpush1.msra.mxu0 0.0
      %3356 = vmatprep.subr.mxu0 0.0
      %3357 = vmatpush1.msra.mxu0 0.0
      %3358 = vmatprep.subr.mxu0 0.0
      %3359 = vmatpush1.msra.mxu0 0.0
      %3360 = vmatprep.subr.mxu0 0.0
      %3361 = vmatpush1.msra.mxu0 0.0
      %3362 = vmatprep.subr.mxu0 0.0
      %3363 = vmatpush1.msra.mxu0 0.0
      %3364 = vmatprep.subr.mxu0 0.0
      %3365 = vmatpush1.msra.mxu0 0.0
      %3366 = vmatprep.subr.mxu0 0.0
      %3367 = vmatpush1.msra.mxu0 0.0
      %3368 = vmatprep.subr.mxu0 0.0
      %3369 = vmatpush1.msra.mxu0 0.0
      %3370 = vmatprep.subr.mxu0 0.0
      %3371 = vmatpush1.msra.mxu0 0.0
      %3372 = vmatprep.subr.mxu0 0.0
      %3373 = vmatpush1.msra.mxu0 0.0
      %3374 = vmatprep.subr.mxu0 0.0
      %3375 = vmatpush1.msra.mxu0 0.0
      %3376 = vmatprep.subr.mxu0 0.0
      %3377 = vmatpush1.msra.mxu0 0.0
      %3378 = vmatprep.subr.mxu0 0.0
      %3379 = vmatpush1.msra.mxu0 0.0
      %3380 = vmatprep.subr.mxu0 0.0
      %3381 = vmatpush1.msra.mxu0 0.0
      %3382 = vmatprep.subr.mxu0 0.0
      %3383 = vmatpush1.msra.mxu0 0.0
      %3384 = vmatprep.subr.mxu0 0.0
      %3385 = vmatpush1.msra.mxu0 0.0
      %3386 = vmatprep.subr.mxu0 0.0
      %3387 = vmatpush1.msra.mxu0 0.0
      %3388 = vmatprep.subr.mxu0 0.0
      %3389 = vmatpush1.msra.mxu0 0.0
      %3390 = vmatprep.subr.mxu0 0.0
      %3391 = vmatpush1.msra.mxu0 0.0
      %3392 = vmatprep.subr.mxu0 0.0
      %3393 = vmatpush1.msra.mxu0 0.0
      %3394 = vmatprep.subr.mxu0 0.0
      %3395 = vmatpush1.msra.mxu0 0.0
      %3396 = vmatprep.subr.mxu0 0.0
      %3397 = vmatpush1.msra.mxu0 0.0
      %3398 = vmatprep.subr.mxu0 0.0
      %3399 = vmatpush1.msra.mxu0 0.0
      %3400 = vmatprep.subr.mxu0 0.0
      %3401 = vmatpush1.msra.mxu0 0.0
      %3402 = vmatprep.mubr.f32.mxu0 0.0
      %3403 = vmatmul.mubr.f32.gmra.mrb[0].mxu0 %v3334
      %v3404 = vpop.f32.mrb[0].mxu0
      %v3405 = vadd.f32 %v3326, %v3404
      %v3406 = vpop.f32.mrb[0].mxu0
      %3407 = vmatprep.mubr.f32.mxu0 0.0
      %3408 = vmatmul.mubr.f32.gmra.mrb[0].mxu0 %v3336
      %v3409 = vpop.f32.mrb[0].mxu0
      %v3410 = vadd.f32 %v3331, %v3409
      %v3411 = vpop.f32.mrb[0].mxu0
      %3412 = vdwg.mxu0
      %v3413 = vld [vmem:[%s3 + $0xb] sm:$0x1]
      %v3414 = vlaneseq
      %v3415 = vshrl.u32 %v3414, 7
      %v3416 = vsub.s32 0, %v3415
      %v3417 = vrot.slane %v3413, %v3416
      %v3418 = vadd.f32 %v3405, %v3417
      %v3419 = vadd.f32 %v3410, %v3417
      %vm3420 = vcmp.gt.f32.partialorder %v3418, 0.0
      %vm3421 = vcmp.gt.f32.partialorder %v3419, 0.0
      %v3422 = vmul.f32 %v3418, 1.442695
      %v3423 = vpow.pop %v3422
      %v3424 = vmul.f32 %v3419, 1.442695
      %v3425 = vpow.pop %v3424
      %v3426 = vsub.f32 %v3423, 1.0
      %v3427 = vsub.f32 %v3425, 1.0
      %v3428 = vsel %vm3420, %v3418, %v3426
      %v3429 = vsel %vm3421, %v3419, %v3427
      %3430 = vmatprep.subr.mxu0 0.0
      %3431 = vmatpush1.msra.mxu0 %v3428
      %3432 = vmatprep.subr.mxu0 0.0
      %3433 = vmatpush1.msra.mxu0 %v3429
      %3434 = vmatprep.subr.mxu0 0.0
      %3435 = vmatpush1.msra.mxu0 0.0
      %3436 = vmatprep.subr.mxu0 0.0
      %3437 = vmatpush1.msra.mxu0 0.0
      %3438 = vmatprep.subr.mxu0 0.0
      %3439 = vmatpush1.msra.mxu0 0.0
      %3440 = vmatprep.subr.mxu0 0.0
      %3441 = vmatpush1.msra.mxu0 0.0
      %3442 = vmatprep.subr.mxu0 0.0
      %3443 = vmatpush1.msra.mxu0 0.0
      %3444 = vmatprep.subr.mxu0 0.0
      %3445 = vmatpush1.msra.mxu0 0.0
      %3446 = vmatprep.subr.mxu0 0.0
      %3447 = vmatpush1.msra.mxu0 0.0
      %3448 = vmatprep.subr.mxu0 0.0
      %3449 = vmatpush1.msra.mxu0 0.0
      %3450 = vmatprep.subr.mxu0 0.0
      %3451 = vmatpush1.msra.mxu0 0.0
      %3452 = vmatprep.subr.mxu0 0.0
      %3453 = vmatpush1.msra.mxu0 0.0
      %3454 = vmatprep.subr.mxu0 0.0
      %3455 = vmatpush1.msra.mxu0 0.0
      %3456 = vmatprep.subr.mxu0 0.0
      %3457 = vmatpush1.msra.mxu0 0.0
      %3458 = vmatprep.subr.mxu0 0.0
      %3459 = vmatpush1.msra.mxu0 0.0
      %3460 = vmatprep.subr.mxu0 0.0
      %3461 = vmatpush1.msra.mxu0 0.0
      %3462 = vmatprep.subr.mxu0 0.0
      %3463 = vmatpush1.msra.mxu0 0.0
      %3464 = vmatprep.subr.mxu0 0.0
      %3465 = vmatpush1.msra.mxu0 0.0
      %3466 = vmatprep.subr.mxu0 0.0
      %3467 = vmatpush1.msra.mxu0 0.0
      %3468 = vmatprep.subr.mxu0 0.0
      %3469 = vmatpush1.msra.mxu0 0.0
      %3470 = vmatprep.subr.mxu0 0.0
      %3471 = vmatpush1.msra.mxu0 0.0
      %3472 = vmatprep.subr.mxu0 0.0
      %3473 = vmatpush1.msra.mxu0 0.0
      %3474 = vmatprep.subr.mxu0 0.0
      %3475 = vmatpush1.msra.mxu0 0.0
      %3476 = vmatprep.subr.mxu0 0.0
      %3477 = vmatpush1.msra.mxu0 0.0
      %3478 = vmatprep.subr.mxu0 0.0
      %3479 = vmatpush1.msra.mxu0 0.0
      %3480 = vmatprep.subr.mxu0 0.0
      %3481 = vmatpush1.msra.mxu0 0.0
      %3482 = vmatprep.subr.mxu0 0.0
      %3483 = vmatpush1.msra.mxu0 0.0
      %3484 = vmatprep.subr.mxu0 0.0
      %3485 = vmatpush1.msra.mxu0 0.0
      %3486 = vmatprep.subr.mxu0 0.0
      %3487 = vmatpush1.msra.mxu0 0.0
      %3488 = vmatprep.subr.mxu0 0.0
      %3489 = vmatpush1.msra.mxu0 0.0
      %3490 = vmatprep.subr.mxu0 0.0
      %3491 = vmatpush1.msra.mxu0 0.0
      %3492 = vmatprep.subr.mxu0 0.0
      %3493 = vmatpush1.msra.mxu0 0.0
      %3494 = vmatprep.mubr.f32.mxu0 0.0
      %3495 = vmatmul.mubr.f32.gmra.mrb[0].mxu0 %v324
      %v3496 = vpop.f32.mrb[0].mxu0
      %v3497 = vadd.f32 0.0, %v3496
      %v3498 = vpop.f32.mrb[0].mxu0
      %3499 = vmatprep.mubr.f32.mxu0 0.0
      %3500 = vmatmul.mubr.f32.gmra.mrb[0].mxu0 %v327
      %v3501 = vpop.f32.mrb[0].mxu0
      %v3502 = vadd.f32 0.0, %v3501
      %v3503 = vpop.f32.mrb[0].mxu0
      %3504 = vmatprep.mubr.f32.mxu0 0.0
      %3505 = vmatmul.mubr.f32.gmra.mrb[0].mxu0 %v330
      %v3506 = vpop.f32.mrb[0].mxu0
      %v3507 = vadd.f32 0.0, %v3506
      %v3508 = vpop.f32.mrb[0].mxu0
      %3509 = vdwg.mxu0
      %v3510 = vld [vmem:[%s2 + $0x1c0] sm:$0xff]
      %v3511 = vld [vmem:[%s2 + $0x1c8] sm:$0xff]
      %v3512 = vld [vmem:[%s2 + $0x1d0] sm:$0xff]
      %v3513 = vld [vmem:[%s2 + $0x1d8] sm:$0xff]
      %v3514 = vld [vmem:[%s2 + $0x1e0] sm:$0xff]
      %v3515 = vld [vmem:[%s2 + $0x1e8] sm:$0xff]
      %v3516 = vld [vmem:[%s2 + $0x1f0] sm:$0xff]
      %v3517 = vld [vmem:[%s2 + $0x1f8] sm:$0xff]
      %v3521 = vrot.slane %v3497, 1
      %v3522 = vrot.slane %v3502, 1
      %v3523 = vsel %vm419, %v3521, %v3522
      %v3524 = vrot.slane %v3507, 1
      %v3525 = vsel %vm419, %v3522, %v3524
      %vm3526 = vcmask 261120
      %v3527 = vsel %vm3526, %v3523, 0
      %v3529 = vsel %vm3526, %v3525, 0
      %3531 = vmatprep.subr.mxu0 0.0
      %3532 = vmatpush1.msra.mxu0 %v3514
      %3533 = vmatprep.subr.mxu0 0.0
      %3534 = vmatpush1.msra.mxu0 %v3515
      %3535 = vmatprep.subr.mxu0 0.0
      %3536 = vmatpush1.msra.mxu0 %v3516
      %3537 = vmatprep.subr.mxu0 0.0
      %3538 = vmatpush1.msra.mxu0 %v3517
      %3539 = vmatprep.subr.mxu0 0.0
      %3540 = vmatpush1.msra.mxu0 0.0
      %3541 = vmatprep.subr.mxu0 0.0
      %3542 = vmatpush1.msra.mxu0 0.0
      %3543 = vmatprep.subr.mxu0 0.0
      %3544 = vmatpush1.msra.mxu0 0.0
      %3545 = vmatprep.subr.mxu0 0.0
      %3546 = vmatpush1.msra.mxu0 0.0
      %3547 = vmatprep.subr.mxu0 0.0
      %3548 = vmatpush1.msra.mxu0 0.0
      %3549 = vmatprep.subr.mxu0 0.0
      %3550 = vmatpush1.msra.mxu0 0.0
      %3551 = vmatprep.subr.mxu0 0.0
      %3552 = vmatpush1.msra.mxu0 0.0
      %3553 = vmatprep.subr.mxu0 0.0
      %3554 = vmatpush1.msra.mxu0 0.0
      %3555 = vmatprep.subr.mxu0 0.0
      %3556 = vmatpush1.msra.mxu0 0.0
      %3557 = vmatprep.subr.mxu0 0.0
      %3558 = vmatpush1.msra.mxu0 0.0
      %3559 = vmatprep.subr.mxu0 0.0
      %3560 = vmatpush1.msra.mxu0 0.0
      %3561 = vmatprep.subr.mxu0 0.0
      %3562 = vmatpush1.msra.mxu0 0.0
      %3563 = vmatprep.subr.mxu0 0.0
      %3564 = vmatpush1.msra.mxu0 0.0
      %3565 = vmatprep.subr.mxu0 0.0
      %3566 = vmatpush1.msra.mxu0 0.0
      %3567 = vmatprep.subr.mxu0 0.0
      %3568 = vmatpush1.msra.mxu0 0.0
      %3569 = vmatprep.subr.mxu0 0.0
      %3570 = vmatpush1.msra.mxu0 0.0
      %3571 = vmatprep.subr.mxu0 0.0
      %3572 = vmatpush1.msra.mxu0 0.0
      %3573 = vmatprep.subr.mxu0 0.0
      %3574 = vmatpush1.msra.mxu0 0.0
      %3575 = vmatprep.subr.mxu0 0.0
      %3576 = vmatpush1.msra.mxu0 0.0
      %3577 = vmatprep.subr.mxu0 0.0
      %3578 = vmatpush1.msra.mxu0 0.0
      %3579 = vmatprep.subr.mxu0 0.0
      %3580 = vmatpush1.msra.mxu0 0.0
      %3581 = vmatprep.subr.mxu0 0.0
      %3582 = vmatpush1.msra.mxu0 0.0
      %3583 = vmatprep.subr.mxu0 0.0
      %3584 = vmatpush1.msra.mxu0 0.0
      %3585 = vmatprep.subr.mxu0 0.0
      %3586 = vmatpush1.msra.mxu0 0.0
      %3587 = vmatprep.subr.mxu0 0.0
      %3588 = vmatpush1.msra.mxu0 0.0
      %3589 = vmatprep.subr.mxu0 0.0
      %3590 = vmatpush1.msra.mxu0 0.0
      %3591 = vmatprep.subr.mxu0 0.0
      %3592 = vmatpush1.msra.mxu0 0.0
      %3593 = vmatprep.subr.mxu0 0.0
      %3594 = vmatpush1.msra.mxu0 0.0
      %3595 = vmatprep.mubr.f32.mxu0 0.0
      %3596 = vmatmul.mubr.f32.gmra.mrb[0].mxu0 %v3527
      %v3597 = vpop.f32.mrb[0].mxu0
      %v3598 = vadd.f32 0.0, %v3597
      %v3599 = vpop.f32.mrb[0].mxu0
      %3600 = vmatprep.mubr.f32.mxu0 0.0
      %3601 = vmatmul.mubr.f32.gmra.mrb[0].mxu0 %v3529
      %v3602 = vpop.f32.mrb[0].mxu0
      %v3603 = vadd.f32 0.0, %v3602
      %v3604 = vpop.f32.mrb[0].mxu0
      %3605 = vdwg.mxu0
      %v3606 = vsel %vm3526, %v3497, 0
      %v3608 = vsel %vm3526, %v3502, 0
      %3610 = vmatprep.subr.mxu0 0.0
      %3611 = vmatpush1.msra.mxu0 %v3510
      %3612 = vmatprep.subr.mxu0 0.0
      %3613 = vmatpush1.msra.mxu0 %v3511
      %3614 = vmatprep.subr.mxu0 0.0
      %3615 = vmatpush1.msra.mxu0 %v3512
      %3616 = vmatprep.subr.mxu0 0.0
      %3617 = vmatpush1.msra.mxu0 %v3513
      %3618 = vmatprep.subr.mxu0 0.0
      %3619 = vmatpush1.msra.mxu0 0.0
      %3620 = vmatprep.subr.mxu0 0.0
      %3621 = vmatpush1.msra.mxu0 0.0
      %3622 = vmatprep.subr.mxu0 0.0
      %3623 = vmatpush1.msra.mxu0 0.0
      %3624 = vmatprep.subr.mxu0 0.0
      %3625 = vmatpush1.msra.mxu0 0.0
      %3626 = vmatprep.subr.mxu0 0.0
      %3627 = vmatpush1.msra.mxu0 0.0
      %3628 = vmatprep.subr.mxu0 0.0
      %3629 = vmatpush1.msra.mxu0 0.0
      %3630 = vmatprep.subr.mxu0 0.0
      %3631 = vmatpush1.msra.mxu0 0.0
      %3632 = vmatprep.subr.mxu0 0.0
      %3633 = vmatpush1.msra.mxu0 0.0
      %3634 = vmatprep.subr.mxu0 0.0
      %3635 = vmatpush1.msra.mxu0 0.0
      %3636 = vmatprep.subr.mxu0 0.0
      %3637 = vmatpush1.msra.mxu0 0.0
      %3638 = vmatprep.subr.mxu0 0.0
      %3639 = vmatpush1.msra.mxu0 0.0
      %3640 = vmatprep.subr.mxu0 0.0
      %3641 = vmatpush1.msra.mxu0 0.0
      %3642 = vmatprep.subr.mxu0 0.0
      %3643 = vmatpush1.msra.mxu0 0.0
      %3644 = vmatprep.subr.mxu0 0.0
      %3645 = vmatpush1.msra.mxu0 0.0
      %3646 = vmatprep.subr.mxu0 0.0
      %3647 = vmatpush1.msra.mxu0 0.0
      %3648 = vmatprep.subr.mxu0 0.0
      %3649 = vmatpush1.msra.mxu0 0.0
      %3650 = vmatprep.subr.mxu0 0.0
      %3651 = vmatpush1.msra.mxu0 0.0
      %3652 = vmatprep.subr.mxu0 0.0
      %3653 = vmatpush1.msra.mxu0 0.0
      %3654 = vmatprep.subr.mxu0 0.0
      %3655 = vmatpush1.msra.mxu0 0.0
      %3656 = vmatprep.subr.mxu0 0.0
      %3657 = vmatpush1.msra.mxu0 0.0
      %3658 = vmatprep.subr.mxu0 0.0
      %3659 = vmatpush1.msra.mxu0 0.0
      %3660 = vmatprep.subr.mxu0 0.0
      %3661 = vmatpush1.msra.mxu0 0.0
      %3662 = vmatprep.subr.mxu0 0.0
      %3663 = vmatpush1.msra.mxu0 0.0
      %3664 = vmatprep.subr.mxu0 0.0
      %3665 = vmatpush1.msra.mxu0 0.0
      %3666 = vmatprep.subr.mxu0 0.0
      %3667 = vmatpush1.msra.mxu0 0.0
      %3668 = vmatprep.subr.mxu0 0.0
      %3669 = vmatpush1.msra.mxu0 0.0
      %3670 = vmatprep.subr.mxu0 0.0
      %3671 = vmatpush1.msra.mxu0 0.0
      %3672 = vmatprep.subr.mxu0 0.0
      %3673 = vmatpush1.msra.mxu0 0.0
      %3674 = vmatprep.mubr.f32.mxu0 0.0
      %3675 = vmatmul.mubr.f32.gmra.mrb[0].mxu0 %v3606
      %v3676 = vpop.f32.mrb[0].mxu0
      %v3677 = vadd.f32 %v3598, %v3676
      %v3678 = vpop.f32.mrb[0].mxu0
      %3679 = vmatprep.mubr.f32.mxu0 0.0
      %3680 = vmatmul.mubr.f32.gmra.mrb[0].mxu0 %v3608
      %v3681 = vpop.f32.mrb[0].mxu0
      %v3682 = vadd.f32 %v3603, %v3681
      %v3683 = vpop.f32.mrb[0].mxu0
      %3684 = vdwg.mxu0
      %v3685 = vld [vmem:[%s2 + $0x200] sm:$0xff]
      %v3686 = vld [vmem:[%s2 + $0x208] sm:$0xff]
      %v3687 = vld [vmem:[%s2 + $0x210] sm:$0xff]
      %v3688 = vld [vmem:[%s2 + $0x218] sm:$0xff]
      %v3689 = vrot.slane %v3497, 2
      %v3690 = vrot.slane %v3502, 2
      %v3691 = vsel %vm585, %v3689, %v3690
      %v3692 = vrot.slane %v3507, 2
      %v3693 = vsel %vm585, %v3690, %v3692
      %v3694 = vsel %vm3526, %v3691, 0
      %v3696 = vsel %vm3526, %v3693, 0
      %3698 = vmatprep.subr.mxu0 0.0
      %3699 = vmatpush1.msra.mxu0 %v3685
      %3700 = vmatprep.subr.mxu0 0.0
      %3701 = vmatpush1.msra.mxu0 %v3686
      %3702 = vmatprep.subr.mxu0 0.0
      %3703 = vmatpush1.msra.mxu0 %v3687
      %3704 = vmatprep.subr.mxu0 0.0
      %3705 = vmatpush1.msra.mxu0 %v3688
      %3706 = vmatprep.subr.mxu0 0.0
      %3707 = vmatpush1.msra.mxu0 0.0
      %3708 = vmatprep.subr.mxu0 0.0
      %3709 = vmatpush1.msra.mxu0 0.0
      %3710 = vmatprep.subr.mxu0 0.0
      %3711 = vmatpush1.msra.mxu0 0.0
      %3712 = vmatprep.subr.mxu0 0.0
      %3713 = vmatpush1.msra.mxu0 0.0
      %3714 = vmatprep.subr.mxu0 0.0
      %3715 = vmatpush1.msra.mxu0 0.0
      %3716 = vmatprep.subr.mxu0 0.0
      %3717 = vmatpush1.msra.mxu0 0.0
      %3718 = vmatprep.subr.mxu0 0.0
      %3719 = vmatpush1.msra.mxu0 0.0
      %3720 = vmatprep.subr.mxu0 0.0
      %3721 = vmatpush1.msra.mxu0 0.0
      %3722 = vmatprep.subr.mxu0 0.0
      %3723 = vmatpush1.msra.mxu0 0.0
      %3724 = vmatprep.subr.mxu0 0.0
      %3725 = vmatpush1.msra.mxu0 0.0
      %3726 = vmatprep.subr.mxu0 0.0
      %3727 = vmatpush1.msra.mxu0 0.0
      %3728 = vmatprep.subr.mxu0 0.0
      %3729 = vmatpush1.msra.mxu0 0.0
      %3730 = vmatprep.subr.mxu0 0.0
      %3731 = vmatpush1.msra.mxu0 0.0
      %3732 = vmatprep.subr.mxu0 0.0
      %3733 = vmatpush1.msra.mxu0 0.0
      %3734 = vmatprep.subr.mxu0 0.0
      %3735 = vmatpush1.msra.mxu0 0.0
      %3736 = vmatprep.subr.mxu0 0.0
      %3737 = vmatpush1.msra.mxu0 0.0
      %3738 = vmatprep.subr.mxu0 0.0
      %3739 = vmatpush1.msra.mxu0 0.0
      %3740 = vmatprep.subr.mxu0 0.0
      %3741 = vmatpush1.msra.mxu0 0.0
      %3742 = vmatprep.subr.mxu0 0.0
      %3743 = vmatpush1.msra.mxu0 0.0
      %3744 = vmatprep.subr.mxu0 0.0
      %3745 = vmatpush1.msra.mxu0 0.0
      %3746 = vmatprep.subr.mxu0 0.0
      %3747 = vmatpush1.msra.mxu0 0.0
      %3748 = vmatprep.subr.mxu0 0.0
      %3749 = vmatpush1.msra.mxu0 0.0
      %3750 = vmatprep.subr.mxu0 0.0
      %3751 = vmatpush1.msra.mxu0 0.0
      %3752 = vmatprep.subr.mxu0 0.0
      %3753 = vmatpush1.msra.mxu0 0.0
      %3754 = vmatprep.subr.mxu0 0.0
      %3755 = vmatpush1.msra.mxu0 0.0
      %3756 = vmatprep.subr.mxu0 0.0
      %3757 = vmatpush1.msra.mxu0 0.0
      %3758 = vmatprep.subr.mxu0 0.0
      %3759 = vmatpush1.msra.mxu0 0.0
      %3760 = vmatprep.subr.mxu0 0.0
      %3761 = vmatpush1.msra.mxu0 0.0
      %3762 = vmatprep.mubr.f32.mxu0 0.0
      %3763 = vmatmul.mubr.f32.gmra.mrb[0].mxu0 %v3694
      %v3764 = vpop.f32.mrb[0].mxu0
      %v3765 = vadd.f32 0.0, %v3764
      %v3766 = vpop.f32.mrb[0].mxu0
      %3767 = vmatprep.mubr.f32.mxu0 0.0
      %3768 = vmatmul.mubr.f32.gmra.mrb[0].mxu0 %v3696
      %v3769 = vpop.f32.mrb[0].mxu0
      %v3770 = vadd.f32 0.0, %v3769
      %v3771 = vpop.f32.mrb[0].mxu0
      %3772 = vdwg.mxu0
      %v3773 = vadd.f32 %v3677, %v3765
      %v3774 = vadd.f32 %v3682, %v3770
      %v3775 = vld [vmem:[%s2 + $0x220] sm:$0xff]
      %v3776 = vld [vmem:[%s2 + $0x228] sm:$0xff]
      %v3777 = vld [vmem:[%s2 + $0x230] sm:$0xff]
      %v3778 = vld [vmem:[%s2 + $0x238] sm:$0xff]
      %v3779 = vrot.slane %v3497, 3
      %v3780 = vrot.slane %v3502, 3
      %v3781 = vsel %vm674, %v3779, %v3780
      %v3782 = vrot.slane %v3507, 3
      %v3783 = vsel %vm674, %v3780, %v3782
      %v3784 = vsel %vm3526, %v3781, 0
      %v3786 = vsel %vm3526, %v3783, 0
      %3788 = vmatprep.subr.mxu0 0.0
      %3789 = vmatpush1.msra.mxu0 %v3775
      %3790 = vmatprep.subr.mxu0 0.0
      %3791 = vmatpush1.msra.mxu0 %v3776
      %3792 = vmatprep.subr.mxu0 0.0
      %3793 = vmatpush1.msra.mxu0 %v3777
      %3794 = vmatprep.subr.mxu0 0.0
      %3795 = vmatpush1.msra.mxu0 %v3778
      %3796 = vmatprep.subr.mxu0 0.0
      %3797 = vmatpush1.msra.mxu0 0.0
      %3798 = vmatprep.subr.mxu0 0.0
      %3799 = vmatpush1.msra.mxu0 0.0
      %3800 = vmatprep.subr.mxu0 0.0
      %3801 = vmatpush1.msra.mxu0 0.0
      %3802 = vmatprep.subr.mxu0 0.0
      %3803 = vmatpush1.msra.mxu0 0.0
      %3804 = vmatprep.subr.mxu0 0.0
      %3805 = vmatpush1.msra.mxu0 0.0
      %3806 = vmatprep.subr.mxu0 0.0
      %3807 = vmatpush1.msra.mxu0 0.0
      %3808 = vmatprep.subr.mxu0 0.0
      %3809 = vmatpush1.msra.mxu0 0.0
      %3810 = vmatprep.subr.mxu0 0.0
      %3811 = vmatpush1.msra.mxu0 0.0
      %3812 = vmatprep.subr.mxu0 0.0
      %3813 = vmatpush1.msra.mxu0 0.0
      %3814 = vmatprep.subr.mxu0 0.0
      %3815 = vmatpush1.msra.mxu0 0.0
      %3816 = vmatprep.subr.mxu0 0.0
      %3817 = vmatpush1.msra.mxu0 0.0
      %3818 = vmatprep.subr.mxu0 0.0
      %3819 = vmatpush1.msra.mxu0 0.0
      %3820 = vmatprep.subr.mxu0 0.0
      %3821 = vmatpush1.msra.mxu0 0.0
      %3822 = vmatprep.subr.mxu0 0.0
      %3823 = vmatpush1.msra.mxu0 0.0
      %3824 = vmatprep.subr.mxu0 0.0
      %3825 = vmatpush1.msra.mxu0 0.0
      %3826 = vmatprep.subr.mxu0 0.0
      %3827 = vmatpush1.msra.mxu0 0.0
      %3828 = vmatprep.subr.mxu0 0.0
      %3829 = vmatpush1.msra.mxu0 0.0
      %3830 = vmatprep.subr.mxu0 0.0
      %3831 = vmatpush1.msra.mxu0 0.0
      %3832 = vmatprep.subr.mxu0 0.0
      %3833 = vmatpush1.msra.mxu0 0.0
      %3834 = vmatprep.subr.mxu0 0.0
      %3835 = vmatpush1.msra.mxu0 0.0
      %3836 = vmatprep.subr.mxu0 0.0
      %3837 = vmatpush1.msra.mxu0 0.0
      %3838 = vmatprep.subr.mxu0 0.0
      %3839 = vmatpush1.msra.mxu0 0.0
      %3840 = vmatprep.subr.mxu0 0.0
      %3841 = vmatpush1.msra.mxu0 0.0
      %3842 = vmatprep.subr.mxu0 0.0
      %3843 = vmatpush1.msra.mxu0 0.0
      %3844 = vmatprep.subr.mxu0 0.0
      %3845 = vmatpush1.msra.mxu0 0.0
      %3846 = vmatprep.subr.mxu0 0.0
      %3847 = vmatpush1.msra.mxu0 0.0
      %3848 = vmatprep.subr.mxu0 0.0
      %3849 = vmatpush1.msra.mxu0 0.0
      %3850 = vmatprep.subr.mxu0 0.0
      %3851 = vmatpush1.msra.mxu0 0.0
      %3852 = vmatprep.mubr.f32.mxu0 0.0
      %3853 = vmatmul.mubr.f32.gmra.mrb[0].mxu0 %v3784
      %v3854 = vpop.f32.mrb[0].mxu0
      %v3855 = vadd.f32 0.0, %v3854
      %v3856 = vpop.f32.mrb[0].mxu0
      %3857 = vmatprep.mubr.f32.mxu0 0.0
      %3858 = vmatmul.mubr.f32.gmra.mrb[0].mxu0 %v3786
      %v3859 = vpop.f32.mrb[0].mxu0
      %v3860 = vadd.f32 0.0, %v3859
      %v3861 = vpop.f32.mrb[0].mxu0
      %3862 = vdwg.mxu0
      %v3863 = vadd.f32 %v3773, %v3855
      %v3864 = vadd.f32 %v3774, %v3860
      %v3865 = vld [vmem:[%s2 + $0x240] sm:$0xff]
      %v3866 = vld [vmem:[%s2 + $0x248] sm:$0xff]
      %v3867 = vld [vmem:[%s2 + $0x250] sm:$0xff]
      %v3868 = vld [vmem:[%s2 + $0x258] sm:$0xff]
      %v3869 = vrot.slane %v3497, 4
      %v3870 = vrot.slane %v3502, 4
      %v3871 = vsel %vm229, %v3869, %v3870
      %v3872 = vrot.slane %v3507, 4
      %v3873 = vsel %vm229, %v3870, %v3872
      %v3874 = vsel %vm3526, %v3871, 0
      %v3876 = vsel %vm3526, %v3873, 0
      %3878 = vmatprep.subr.mxu0 0.0
      %3879 = vmatpush1.msra.mxu0 %v3865
      %3880 = vmatprep.subr.mxu0 0.0
      %3881 = vmatpush1.msra.mxu0 %v3866
      %3882 = vmatprep.subr.mxu0 0.0
      %3883 = vmatpush1.msra.mxu0 %v3867
      %3884 = vmatprep.subr.mxu0 0.0
      %3885 = vmatpush1.msra.mxu0 %v3868
      %3886 = vmatprep.subr.mxu0 0.0
      %3887 = vmatpush1.msra.mxu0 0.0
      %3888 = vmatprep.subr.mxu0 0.0
      %3889 = vmatpush1.msra.mxu0 0.0
      %3890 = vmatprep.subr.mxu0 0.0
      %3891 = vmatpush1.msra.mxu0 0.0
      %3892 = vmatprep.subr.mxu0 0.0
      %3893 = vmatpush1.msra.mxu0 0.0
      %3894 = vmatprep.subr.mxu0 0.0
      %3895 = vmatpush1.msra.mxu0 0.0
      %3896 = vmatprep.subr.mxu0 0.0
      %3897 = vmatpush1.msra.mxu0 0.0
      %3898 = vmatprep.subr.mxu0 0.0
      %3899 = vmatpush1.msra.mxu0 0.0
      %3900 = vmatprep.subr.mxu0 0.0
      %3901 = vmatpush1.msra.mxu0 0.0
      %3902 = vmatprep.subr.mxu0 0.0
      %3903 = vmatpush1.msra.mxu0 0.0
      %3904 = vmatprep.subr.mxu0 0.0
      %3905 = vmatpush1.msra.mxu0 0.0
      %3906 = vmatprep.subr.mxu0 0.0
      %3907 = vmatpush1.msra.mxu0 0.0
      %3908 = vmatprep.subr.mxu0 0.0
      %3909 = vmatpush1.msra.mxu0 0.0
      %3910 = vmatprep.subr.mxu0 0.0
      %3911 = vmatpush1.msra.mxu0 0.0
      %3912 = vmatprep.subr.mxu0 0.0
      %3913 = vmatpush1.msra.mxu0 0.0
      %3914 = vmatprep.subr.mxu0 0.0
      %3915 = vmatpush1.msra.mxu0 0.0
      %3916 = vmatprep.subr.mxu0 0.0
      %3917 = vmatpush1.msra.mxu0 0.0
      %3918 = vmatprep.subr.mxu0 0.0
      %3919 = vmatpush1.msra.mxu0 0.0
      %3920 = vmatprep.subr.mxu0 0.0
      %3921 = vmatpush1.msra.mxu0 0.0
      %3922 = vmatprep.subr.mxu0 0.0
      %3923 = vmatpush1.msra.mxu0 0.0
      %3924 = vmatprep.subr.mxu0 0.0
      %3925 = vmatpush1.msra.mxu0 0.0
      %3926 = vmatprep.subr.mxu0 0.0
      %3927 = vmatpush1.msra.mxu0 0.0
      %3928 = vmatprep.subr.mxu0 0.0
      %3929 = vmatpush1.msra.mxu0 0.0
      %3930 = vmatprep.subr.mxu0 0.0
      %3931 = vmatpush1.msra.mxu0 0.0
      %3932 = vmatprep.subr.mxu0 0.0
      %3933 = vmatpush1.msra.mxu0 0.0
      %3934 = vmatprep.subr.mxu0 0.0
      %3935 = vmatpush1.msra.mxu0 0.0
      %3936 = vmatprep.subr.mxu0 0.0
      %3937 = vmatpush1.msra.mxu0 0.0
      %3938 = vmatprep.subr.mxu0 0.0
      %3939 = vmatpush1.msra.mxu0 0.0
      %3940 = vmatprep.subr.mxu0 0.0
      %3941 = vmatpush1.msra.mxu0 0.0
      %3942 = vmatprep.mubr.f32.mxu0 0.0
      %3943 = vmatmul.mubr.f32.gmra.mrb[0].mxu0 %v3874
      %v3944 = vpop.f32.mrb[0].mxu0
      %v3945 = vadd.f32 0.0, %v3944
      %v3946 = vpop.f32.mrb[0].mxu0
      %3947 = vmatprep.mubr.f32.mxu0 0.0
      %3948 = vmatmul.mubr.f32.gmra.mrb[0].mxu0 %v3876
      %v3949 = vpop.f32.mrb[0].mxu0
      %v3950 = vadd.f32 0.0, %v3949
      %v3951 = vpop.f32.mrb[0].mxu0
      %3952 = vdwg.mxu0
      %v3953 = vadd.f32 %v3863, %v3945
      %v3954 = vadd.f32 %v3864, %v3950
      %v3955 = vld [vmem:[%s2 + $0x260] sm:$0xff]
      %v3956 = vld [vmem:[%s2 + $0x268] sm:$0xff]
      %v3957 = vld [vmem:[%s2 + $0x270] sm:$0xff]
      %v3958 = vld [vmem:[%s2 + $0x278] sm:$0xff]
      %v3959 = vrot.slane %v3497, 5
      %v3960 = vrot.slane %v3502, 5
      %v3961 = vsel %vm851, %v3959, %v3960
      %v3962 = vrot.slane %v3507, 5
      %v3963 = vsel %vm851, %v3960, %v3962
      %v3964 = vsel %vm3526, %v3961, 0
      %v3966 = vsel %vm3526, %v3963, 0
      %3968 = vmatprep.subr.mxu0 0.0
      %3969 = vmatpush1.msra.mxu0 %v3955
      %3970 = vmatprep.subr.mxu0 0.0
      %3971 = vmatpush1.msra.mxu0 %v3956
      %3972 = vmatprep.subr.mxu0 0.0
      %3973 = vmatpush1.msra.mxu0 %v3957
      %3974 = vmatprep.subr.mxu0 0.0
      %3975 = vmatpush1.msra.mxu0 %v3958
      %3976 = vmatprep.subr.mxu0 0.0
      %3977 = vmatpush1.msra.mxu0 0.0
      %3978 = vmatprep.subr.mxu0 0.0
      %3979 = vmatpush1.msra.mxu0 0.0
      %3980 = vmatprep.subr.mxu0 0.0
      %3981 = vmatpush1.msra.mxu0 0.0
      %3982 = vmatprep.subr.mxu0 0.0
      %3983 = vmatpush1.msra.mxu0 0.0
      %3984 = vmatprep.subr.mxu0 0.0
      %3985 = vmatpush1.msra.mxu0 0.0
      %3986 = vmatprep.subr.mxu0 0.0
      %3987 = vmatpush1.msra.mxu0 0.0
      %3988 = vmatprep.subr.mxu0 0.0
      %3989 = vmatpush1.msra.mxu0 0.0
      %3990 = vmatprep.subr.mxu0 0.0
      %3991 = vmatpush1.msra.mxu0 0.0
      %3992 = vmatprep.subr.mxu0 0.0
      %3993 = vmatpush1.msra.mxu0 0.0
      %3994 = vmatprep.subr.mxu0 0.0
      %3995 = vmatpush1.msra.mxu0 0.0
      %3996 = vmatprep.subr.mxu0 0.0
      %3997 = vmatpush1.msra.mxu0 0.0
      %3998 = vmatprep.subr.mxu0 0.0
      %3999 = vmatpush1.msra.mxu0 0.0
      %4000 = vmatprep.subr.mxu0 0.0
      %4001 = vmatpush1.msra.mxu0 0.0
      %4002 = vmatprep.subr.mxu0 0.0
      %4003 = vmatpush1.msra.mxu0 0.0
      %4004 = vmatprep.subr.mxu0 0.0
      %4005 = vmatpush1.msra.mxu0 0.0
      %4006 = vmatprep.subr.mxu0 0.0
      %4007 = vmatpush1.msra.mxu0 0.0
      %4008 = vmatprep.subr.mxu0 0.0
      %4009 = vmatpush1.msra.mxu0 0.0
      %4010 = vmatprep.subr.mxu0 0.0
      %4011 = vmatpush1.msra.mxu0 0.0
      %4012 = vmatprep.subr.mxu0 0.0
      %4013 = vmatpush1.msra.mxu0 0.0
      %4014 = vmatprep.subr.mxu0 0.0
      %4015 = vmatpush1.msra.mxu0 0.0
      %4016 = vmatprep.subr.mxu0 0.0
      %4017 = vmatpush1.msra.mxu0 0.0
      %4018 = vmatprep.subr.mxu0 0.0
      %4019 = vmatpush1.msra.mxu0 0.0
      %4020 = vmatprep.subr.mxu0 0.0
      %4021 = vmatpush1.msra.mxu0 0.0
      %4022 = vmatprep.subr.mxu0 0.0
      %4023 = vmatpush1.msra.mxu0 0.0
      %4024 = vmatprep.subr.mxu0 0.0
      %4025 = vmatpush1.msra.mxu0 0.0
      %4026 = vmatprep.subr.mxu0 0.0
      %4027 = vmatpush1.msra.mxu0 0.0
      %4028 = vmatprep.subr.mxu0 0.0
      %4029 = vmatpush1.msra.mxu0 0.0
      %4030 = vmatprep.subr.mxu0 0.0
      %4031 = vmatpush1.msra.mxu0 0.0
      %4032 = vmatprep.mubr.f32.mxu0 0.0
      %4033 = vmatmul.mubr.f32.gmra.mrb[0].mxu0 %v3964
      %v4034 = vpop.f32.mrb[0].mxu0
      %v4035 = vadd.f32 0.0, %v4034
      %v4036 = vpop.f32.mrb[0].mxu0
      %4037 = vmatprep.mubr.f32.mxu0 0.0
      %4038 = vmatmul.mubr.f32.gmra.mrb[0].mxu0 %v3966
      %v4039 = vpop.f32.mrb[0].mxu0
      %v4040 = vadd.f32 0.0, %v4039
      %v4041 = vpop.f32.mrb[0].mxu0
      %4042 = vdwg.mxu0
      %v4043 = vadd.f32 %v3953, %v4035
      %v4044 = vadd.f32 %v3954, %v4040
      %v4045 = vld [vmem:[%s2 + $0x280] sm:$0xff]
      %v4046 = vld [vmem:[%s2 + $0x288] sm:$0xff]
      %v4047 = vld [vmem:[%s2 + $0x290] sm:$0xff]
      %v4048 = vld [vmem:[%s2 + $0x298] sm:$0xff]
      %v4049 = vrot.slane %v3497, 6
      %v4050 = vrot.slane %v3502, 6
      %v4051 = vsel %vm940, %v4049, %v4050
      %v4052 = vrot.slane %v3507, 6
      %v4053 = vsel %vm940, %v4050, %v4052
      %v4054 = vsel %vm3526, %v4051, 0
      %v4056 = vsel %vm3526, %v4053, 0
      %4058 = vmatprep.subr.mxu0 0.0
      %4059 = vmatpush1.msra.mxu0 %v4045
      %4060 = vmatprep.subr.mxu0 0.0
      %4061 = vmatpush1.msra.mxu0 %v4046
      %4062 = vmatprep.subr.mxu0 0.0
      %4063 = vmatpush1.msra.mxu0 %v4047
      %4064 = vmatprep.subr.mxu0 0.0
      %4065 = vmatpush1.msra.mxu0 %v4048
      %4066 = vmatprep.subr.mxu0 0.0
      %4067 = vmatpush1.msra.mxu0 0.0
      %4068 = vmatprep.subr.mxu0 0.0
      %4069 = vmatpush1.msra.mxu0 0.0
      %4070 = vmatprep.subr.mxu0 0.0
      %4071 = vmatpush1.msra.mxu0 0.0
      %4072 = vmatprep.subr.mxu0 0.0
      %4073 = vmatpush1.msra.mxu0 0.0
      %4074 = vmatprep.subr.mxu0 0.0
      %4075 = vmatpush1.msra.mxu0 0.0
      %4076 = vmatprep.subr.mxu0 0.0
      %4077 = vmatpush1.msra.mxu0 0.0
      %4078 = vmatprep.subr.mxu0 0.0
      %4079 = vmatpush1.msra.mxu0 0.0
      %4080 = vmatprep.subr.mxu0 0.0
      %4081 = vmatpush1.msra.mxu0 0.0
      %4082 = vmatprep.subr.mxu0 0.0
      %4083 = vmatpush1.msra.mxu0 0.0
      %4084 = vmatprep.subr.mxu0 0.0
      %4085 = vmatpush1.msra.mxu0 0.0
      %4086 = vmatprep.subr.mxu0 0.0
      %4087 = vmatpush1.msra.mxu0 0.0
      %4088 = vmatprep.subr.mxu0 0.0
      %4089 = vmatpush1.msra.mxu0 0.0
      %4090 = vmatprep.subr.mxu0 0.0
      %4091 = vmatpush1.msra.mxu0 0.0
      %4092 = vmatprep.subr.mxu0 0.0
      %4093 = vmatpush1.msra.mxu0 0.0
      %4094 = vmatprep.subr.mxu0 0.0
      %4095 = vmatpush1.msra.mxu0 0.0
      %4096 = vmatprep.subr.mxu0 0.0
      %4097 = vmatpush1.msra.mxu0 0.0
      %4098 = vmatprep.subr.mxu0 0.0
      %4099 = vmatpush1.msra.mxu0 0.0
      %4100 = vmatprep.subr.mxu0 0.0
      %4101 = vmatpush1.msra.mxu0 0.0
      %4102 = vmatprep.subr.mxu0 0.0
      %4103 = vmatpush1.msra.mxu0 0.0
      %4104 = vmatprep.subr.mxu0 0.0
      %4105 = vmatpush1.msra.mxu0 0.0
      %4106 = vmatprep.subr.mxu0 0.0
      %4107 = vmatpush1.msra.mxu0 0.0
      %4108 = vmatprep.subr.mxu0 0.0
      %4109 = vmatpush1.msra.mxu0 0.0
      %4110 = vmatprep.subr.mxu0 0.0
      %4111 = vmatpush1.msra.mxu0 0.0
      %4112 = vmatprep.subr.mxu0 0.0
      %4113 = vmatpush1.msra.mxu0 0.0
      %4114 = vmatprep.subr.mxu0 0.0
      %4115 = vmatpush1.msra.mxu0 0.0
      %4116 = vmatprep.subr.mxu0 0.0
      %4117 = vmatpush1.msra.mxu0 0.0
      %4118 = vmatprep.subr.mxu0 0.0
      %4119 = vmatpush1.msra.mxu0 0.0
      %4120 = vmatprep.subr.mxu0 0.0
      %4121 = vmatpush1.msra.mxu0 0.0
      %4122 = vmatprep.mubr.f32.mxu0 0.0
      %4123 = vmatmul.mubr.f32.gmra.mrb[0].mxu0 %v4054
      %v4124 = vpop.f32.mrb[0].mxu0
      %v4125 = vadd.f32 0.0, %v4124
      %v4126 = vpop.f32.mrb[0].mxu0
      %4127 = vmatprep.mubr.f32.mxu0 0.0
      %4128 = vmatmul.mubr.f32.gmra.mrb[0].mxu0 %v4056
      %v4129 = vpop.f32.mrb[0].mxu0
      %v4130 = vadd.f32 0.0, %v4129
      %v4131 = vpop.f32.mrb[0].mxu0
      %4132 = vdwg.mxu0
      %v4133 = vadd.f32 %v4043, %v4125
      %v4134 = vadd.f32 %v4044, %v4130
      %v4135 = vld [vmem:[%s3 + $0xc] sm:$0x1]
      %v4136 = vlaneseq
      %v4137 = vshrl.u32 %v4136, 7
      %v4138 = vsub.s32 0, %v4137
      %v4139 = vrot.slane %v4135, %v4138
      %v4140 = vadd.f32 %v4133, %v4139
      %v4141 = vadd.f32 %v4134, %v4139
      %4142 = vst.msk [vmem:[%s217] sm:$0xff] %vm322, %v4140
      %4143 = vst.msk [vmem:[%s217 + $0x8] sm:$0xff] %vm322, %v4141
      %p4144 = scmp.lt.s32.totalorder %s15, 1
      %s4145 = scalar_select %p4144, %s15, 1
      %s4146 = smul.addr %s4145, 2
      %s4147 = smul.addr %s4146, 8
      %s4148 = scalar_lea.vmem %s4, %s4147
      // Predicated region
      $region37: #{encoder_forward.1} parent=35 // pred_check
        %p4149 = pneg %p127
      $region38: #{encoder_forward.1} parent=35 // pred_check_branch
        %4151 = sbr.rel (%p4149) target = $region40
      $region39: #{encoder_forward.1} parent=35 // pred_region
        _
      $region40: #{encoder_forward.1} parent=35 // pred_fallthru
        _
    $region36: #{encoder_forward.1} parent=5 // pred_fallthru
      _
    %p4152 = scmp.le.s32.totalorder 2, %s10
    // Predicated region
    $region41: #{encoder_forward.1} parent=5 // pred_check
      %p4153 = pneg %p4152
    $region42: #{encoder_forward.1} parent=5 // pred_check_branch
      %4155 = sbr.rel (%p4153) target = $region44
    $region43: #{encoder_forward.1} parent=5 // pred_region
      %s4156 = ssub.s32 %s10, 2
      // Predicated region
      $region45: #{encoder_forward.1} parent=43 // pred_check
        %p4157 = pneg %p133
      $region46: #{encoder_forward.1} parent=43 // pred_check_branch
        %4159 = sbr.rel (%p4157) target = $region48
      $region47: #{encoder_forward.1} parent=43 // pred_region
        %p4160 = scmp.lt.s32.totalorder %s16, 1
        %s4161 = scalar_select %p4160, %s16, 1
        %s4162 = smul.addr %s4161, 2
        %s4163 = smul.addr %s4162, 8
        %s4164 = scalar_lea.vmem %s4, %s4163
      $region48: #{encoder_forward.1} parent=43 // pred_fallthru
        _
    $region44: #{encoder_forward.1} parent=5 // pred_fallthru
      _
  $region6: #{encoder_forward.1} parent=0 // loop_footer
    %s14 = sadd.s32 1, %s10
  $region7: #{encoder_forward.1} parent=0 // loop_footer_branch
    %9 = sbr.rel target = $region3
  $region8: #{encoder_forward.1} parent=0 // loop_exit
    _

</llo_original>
